<compile_context>
chip_gen: v7x
topology: tpu7x:2x2x1
jax: 0.10.0
libtpu: 0.0.40
codegen_flags: <defaults>
</compile_context>

<pallas_src>
import functools

import jax
import jax.numpy as jnp
from jax.experimental import pallas as pl
from jax.experimental.pallas import tpu as pltpu


# ---------------------------------------------------------------------------
# Pallas kernels
# ---------------------------------------------------------------------------

def _apply_act(y, act):
    if act == "leaky":
        return jnp.where(y > 0, y, 0.2 * y)
    if act == "sigmoid":
        return jax.nn.sigmoid(y)
    return y


def _mm_single_kernel(a_ref, b_ref, bias_ref, o_ref, *, act):
    """Single-K-step matmul: dot straight to output (no accumulator scratch)."""
    y = jnp.dot(a_ref[...], b_ref[...], preferred_element_type=jnp.float32)
    y = y + bias_ref[...]
    o_ref[...] = _apply_act(y, act).astype(o_ref.dtype)


def _mm_acc_kernel(*refs, act, prologue):
    """Multi-K-step matmul with f32 accumulator.

    If `prologue`, the A block gets a fused BatchNorm-apply + LeakyReLU
    (per-K-column scale/shift) before the MXU dot; A arrives in f32 and is
    cast to bf16 after the prologue.
    """
    if prologue:
        a_ref, scale_ref, shift_ref, b_ref, bias_ref, o_ref, acc_ref = refs
    else:
        a_ref, b_ref, bias_ref, o_ref, acc_ref = refs

    k = pl.program_id(2)

    @pl.when(k == 0)
    def _():
        acc_ref[...] = jnp.zeros_like(acc_ref)

    a = a_ref[...]
    if prologue:
        a = a * scale_ref[...] + shift_ref[...]
        a = jnp.where(a > 0, a, 0.2 * a)
        a = a.astype(jnp.bfloat16)

    acc_ref[...] += jnp.dot(a, b_ref[...], preferred_element_type=jnp.float32)

    @pl.when(k == pl.num_programs(2) - 1)
    def _():
        y = acc_ref[...] + bias_ref[...]
        o_ref[...] = _apply_act(y, act).astype(o_ref.dtype)


def _head_kernel(x_ref, scale_ref, shift_ref, w_ref, b_ref, o_ref):
    """BatchNorm1d apply + LeakyReLU(0.2) + Linear(N -> 1) + Sigmoid.

    The 1024->1 linear is a VPU elementwise-multiply + lane reduction; pushing
    it through a 128-padded MXU matmul would be almost all overhead.
    """
    h = x_ref[...] * scale_ref[...] + shift_ref[...]
    h = jnp.where(h > 0, h, 0.2 * h)
    logits = jnp.sum(h * w_ref[...], axis=-1, keepdims=True) + b_ref[...]
    o_ref[...] = jax.nn.sigmoid(logits)


# ---------------------------------------------------------------------------
# Wrappers
# ---------------------------------------------------------------------------

def _round_up(x, m):
    return (x + m - 1) // m * m


def fused_matmul(a, w, bias, act="none", *, a_scale=None, a_shift=None,
                 tn=None, tk=None):
    """y = act( prologue(a) @ w + bias ).

    prologue(a) = leaky_relu(a * a_scale + a_shift) if a_scale is given
    (per-K-column scale/shift, i.e. a fused BatchNorm apply), else identity.

    Shape-aware tiling: M padded only to a multiple of 8 (capped at 512-row
    tiles), N padded to a multiple of 128, K tiled by `tk` (default: full K,
    single K step, no accumulator scratch).  A/B blocks are bf16, accumulation
    and epilogue in f32.
    """
    M, K = a.shape
    Kw, N = w.shape
    assert K == Kw

    Mp = _round_up(M, 8)
    tm = Mp if Mp <= 512 else 512
    Mp = _round_up(M, tm)

    Np = _round_up(N, 128)
    tn = Np if tn is None else tn
    assert Np % tn == 0

    tk = K if tk is None else tk
    Kp = _round_up(K, tk)
    n_k = Kp // tk

    w_p = jnp.pad(w.astype(jnp.bfloat16), ((0, Kp - K), (0, Np - N)))
    bias_p = jnp.pad(bias.astype(jnp.float32).reshape(1, N),
                     ((0, 0), (0, Np - N)))

    prologue = a_scale is not None
    if prologue:
        a_p = jnp.pad(a.astype(jnp.float32), ((0, Mp - M), (0, Kp - K)))
        scale_p = jnp.pad(a_scale.astype(jnp.float32).reshape(1, K),
                          ((0, 0), (0, Kp - K)))
        shift_p = jnp.pad(a_shift.astype(jnp.float32).reshape(1, K),
                          ((0, 0), (0, Kp - K)))
    else:
        a_p = jnp.pad(a.astype(jnp.bfloat16), ((0, Mp - M), (0, Kp - K)))

    if n_k == 1 and not prologue:
        out = pl.pallas_call(
            functools.partial(_mm_single_kernel, act=act),
            out_shape=jax.ShapeDtypeStruct((Mp, Np), jnp.float32),
            grid_spec=pltpu.PrefetchScalarGridSpec(
                num_scalar_prefetch=0,
                grid=(Mp // tm, Np // tn),
                in_specs=[
                    pl.BlockSpec((tm, Kp), lambda i, j: (i, 0)),
                    pl.BlockSpec((Kp, tn), lambda i, j: (0, j)),
                    pl.BlockSpec((1, tn), lambda i, j: (0, j)),
                ],
                out_specs=pl.BlockSpec((tm, tn), lambda i, j: (i, j)),
            ),
            compiler_params=pltpu.CompilerParams(
                dimension_semantics=("parallel", "parallel")),
        )(a_p, w_p, bias_p)
    else:
        if prologue:
            in_specs = [
                pl.BlockSpec((tm, tk), lambda i, j, k: (i, k)),
                pl.BlockSpec((1, tk), lambda i, j, k: (0, k)),
                pl.BlockSpec((1, tk), lambda i, j, k: (0, k)),
                pl.BlockSpec((tk, tn), lambda i, j, k: (k, j)),
                pl.BlockSpec((1, tn), lambda i, j, k: (0, j)),
            ]
            operands = (a_p, scale_p, shift_p, w_p, bias_p)
        else:
            in_specs = [
                pl.BlockSpec((tm, tk), lambda i, j, k: (i, k)),
                pl.BlockSpec((tk, tn), lambda i, j, k: (k, j)),
                pl.BlockSpec((1, tn), lambda i, j, k: (0, j)),
            ]
            operands = (a_p, w_p, bias_p)

        out = pl.pallas_call(
            functools.partial(_mm_acc_kernel, act=act, prologue=prologue),
            out_shape=jax.ShapeDtypeStruct((Mp, Np), jnp.float32),
            grid_spec=pltpu.PrefetchScalarGridSpec(
                num_scalar_prefetch=0,
                grid=(Mp // tm, Np // tn, n_k),
                in_specs=in_specs,
                out_specs=pl.BlockSpec((tm, tn), lambda i, j, k: (i, j)),
                scratch_shapes=[pltpu.VMEM((tm, tn), jnp.float32)],
            ),
            compiler_params=pltpu.CompilerParams(
                dimension_semantics=("parallel", "parallel", "arbitrary")),
        )(*operands)

    if Mp != M or Np != N:
        out = out[:M, :N]
    return out


def bn_leaky_linear_sigmoid(x, scale, shift, w_row, b):
    """sigmoid( leaky_relu(x*scale+shift, 0.2) @ w_row.T + b ), out (B, 1)."""
    B, N = x.shape
    return pl.pallas_call(
        _head_kernel,
        out_shape=jax.ShapeDtypeStruct((B, 1), jnp.float32),
        grid=(1,),
        in_specs=[
            pl.BlockSpec((B, N), lambda i: (0, 0)),
            pl.BlockSpec((1, N), lambda i: (0, 0)),
            pl.BlockSpec((1, N), lambda i: (0, 0)),
            pl.BlockSpec((1, N), lambda i: (0, 0)),
            pl.BlockSpec((1, 1), lambda i: (0, 0)),
        ],
        out_specs=pl.BlockSpec((B, 1), lambda i: (0, 0)),
    )(x.astype(jnp.float32),
      scale.reshape(1, N).astype(jnp.float32),
      shift.reshape(1, N).astype(jnp.float32),
      w_row.reshape(1, N).astype(jnp.float32),
      b.reshape(1, 1).astype(jnp.float32))


# ---------------------------------------------------------------------------
# Glue: im2col, parameter init, forward
# ---------------------------------------------------------------------------

def im2col(x_nhwc, k, stride, pad):
    """Return (B*Ho*Wo, k*k*C) patch matrix with (kh, kw, c) column ordering."""
    x = jnp.pad(x_nhwc, ((0, 0), (pad, pad), (pad, pad), (0, 0)))
    B, H, W, C = x.shape
    Ho = (H - k) // stride + 1
    Wo = (W - k) // stride + 1
    patches = []
    for kh in range(k):
        for kw in range(k):
            patches.append(
                x[:, kh:kh + stride * Ho:stride, kw:kw + stride * Wo:stride, :])
    p = jnp.stack(patches, axis=3)             # (B, Ho, Wo, k*k, C)
    return p.reshape(B * Ho * Wo, k * k * C), (B, Ho, Wo)


def init_params(key):
    """Matches utils.initialize_weights: conv/linear ~ N(0, 0.02), biases 0,
    BatchNorm gamma=1, beta=0 (defaults)."""
    ks = jax.random.split(key, 4)
    std = 0.02
    return dict(
        conv1_w=jax.random.normal(ks[0], (64, 1, 4, 4), jnp.float32) * std,
        conv1_b=jnp.zeros((64,), jnp.float32),
        conv2_w=jax.random.normal(ks[1], (128, 64, 4, 4), jnp.float32) * std,
        conv2_b=jnp.zeros((128,), jnp.float32),
        bn2_g=jnp.ones((128,), jnp.float32),
        bn2_b=jnp.zeros((128,), jnp.float32),
        fc1_w=jax.random.normal(ks[2], (1024, 128 * 7 * 7), jnp.float32) * std,
        fc1_b=jnp.zeros((1024,), jnp.float32),
        bn1_g=jnp.ones((1024,), jnp.float32),
        bn1_b=jnp.zeros((1024,), jnp.float32),
        fc2_w=jax.random.normal(ks[3], (1, 1024), jnp.float32) * std,
        fc2_b=jnp.zeros((1,), jnp.float32),
    )


def discriminator_forward(params, x_nchw):
    eps = 1e-5
    B = x_nchw.shape[0]
    x = jnp.transpose(x_nchw, (0, 2, 3, 1))            # NCHW -> NHWC

    # --- Conv2d(1, 64, 4, 2, 1) + LeakyReLU(0.2), fused Pallas matmul --------
    p1, (_, H1, W1) = im2col(x, 4, 2, 1)                # (B*14*14, 16)
    w1 = params["conv1_w"].transpose(2, 3, 1, 0).reshape(16, 64)
    y1 = fused_matmul(p1, w1, params["conv1_b"], act="leaky")   # K=16 single step
    y1 = y1.reshape(B, H1, W1, 64)

    # --- Conv2d(64, 128, 4, 2, 1): K=1024 in a single grid step --------------
    p2, (_, H2, W2) = im2col(y1, 4, 2, 1)               # (B*7*7, 1024)
    w2 = params["conv2_w"].transpose(2, 3, 1, 0).reshape(4 * 4 * 64, 128)
    y2 = fused_matmul(p2, w2, params["conv2_b"], act="none")    # (B*7*7, 128)

    # --- BatchNorm2d(128) batch stats (training-mode, biased var) ------------
    mean2 = jnp.mean(y2, axis=0)                        # per-channel over (B,H,W)
    var2 = jnp.var(y2, axis=0)
    scale2 = params["bn2_g"] / jnp.sqrt(var2 + eps)
    shift2 = params["bn2_b"] - mean2 * scale2

    # flatten in PyTorch NCHW order: (B, 128*7*7); BN apply + LeakyReLU are
    # fused into the fc1 matmul's A-side prologue below.
    y2f = (y2.reshape(B, H2, W2, 128)
             .transpose(0, 3, 1, 2)
             .reshape(B, 128 * H2 * W2))
    hw = H2 * W2
    scale2f = jnp.repeat(scale2, hw)                    # per flattened column
    shift2f = jnp.repeat(shift2, hw)

    # --- [BN2d+LeakyReLU prologue] + Linear(6272, 1024) ----------------------
    # tk=896 -> 7 K-steps; tn=512 -> N grid extent 2 (both v7x TCs busy).
    y3 = fused_matmul(y2f, params["fc1_w"].T, params["fc1_b"], act="none",
                      a_scale=scale2f, a_shift=shift2f, tn=512, tk=896)

    # --- BatchNorm1d(1024) batch stats ----------------------------------------
    mean1 = jnp.mean(y3, axis=0)
    var1 = jnp.var(y3, axis=0)
    scale1 = params["bn1_g"] / jnp.sqrt(var1 + eps)
    shift1 = params["bn1_b"] - mean1 * scale1

    # --- BN1d apply + LeakyReLU + Linear(1024,1) + Sigmoid, one tiny kernel --
    y4 = bn_leaky_linear_sigmoid(y3, scale1, shift1,
                                 params["fc2_w"], params["fc2_b"])
    return y4                                           # (B, 1)


if __name__ == "__main__":
    key = jax.random.PRNGKey(0)
    k_x, k_p = jax.random.split(key)

    B = 2
    x = jax.random.normal(k_x, (B, 1, 28, 28), jnp.float32)   # NCHW, MNIST size
    params = init_params(k_p)

    fwd = jax.jit(discriminator_forward)
    out = fwd(params, x)
    out = jax.block_until_ready(out)

    assert out.shape == (B, 1), out.shape
    assert bool(jnp.all(jnp.isfinite(out)))
    assert bool(jnp.all((out >= 0.0) & (out <= 1.0)))   # sigmoid output range
    print("KERNEL_OK")
</pallas_src>

<mosaic_0001>
module attributes {stable_mosaic.version = 11 : i64} {
  func.func @_mm_single_kernel(%arg0: i32, %arg1: i32, %arg2: memref<392x16xbf16, #tpu.memory_space<vmem>>, %arg3: memref<16x128xbf16, #tpu.memory_space<vmem>>, %arg4: memref<1x128xf32, #tpu.memory_space<vmem>>, %arg5: memref<392x128xf32, #tpu.memory_space<vmem>>) attributes {dimension_semantics = [#tpu.dimension_semantics<parallel>, #tpu.dimension_semantics<parallel>], iteration_bounds = array<i64: 1, 1>, scalar_prefetch = 0 : i64, scratch_operands = 0 : i64, tpu.core_type = #tpu.core_type<tc>, window_params = [{transform_indices = @transform_0, window_bounds = array<i64: 392, 16>}, {transform_indices = @transform_1, window_bounds = array<i64: 16, 128>}, {transform_indices = @transform_2, window_bounds = array<i64: 1, 128>}, {transform_indices = @transform_3, window_bounds = array<i64: 392, 128>}]} {
    %c0 = arith.constant 0 : index
    %c0_0 = arith.constant 0 : index
    %0 = vector.load %arg2[%c0, %c0_0] : memref<392x16xbf16, #tpu.memory_space<vmem>>, vector<392x16xbf16>
    %c0_1 = arith.constant 0 : index
    %c0_2 = arith.constant 0 : index
    %1 = vector.load %arg3[%c0_1, %c0_2] : memref<16x128xbf16, #tpu.memory_space<vmem>>, vector<16x128xbf16>
    %cst = arith.constant dense<0.000000e+00> : vector<392x128xf32>
    %2 = tpu.matmul %0, %1, %cst {dimension_numbers = #tpu.dot_dimension_numbers<[1], [0], [0], [1], [0, 0, 1, 1], [], []>} : vector<392x16xbf16>, vector<16x128xbf16>, vector<392x128xf32> -> vector<392x128xf32>
    %c0_3 = arith.constant 0 : index
    %c0_4 = arith.constant 0 : index
    %3 = vector.load %arg4[%c0_3, %c0_4] : memref<1x128xf32, #tpu.memory_space<vmem>>, vector<1x128xf32>
    %4 = vector.broadcast %3 : vector<1x128xf32> to vector<392x128xf32>
    %5 = arith.addf %2, %4 : vector<392x128xf32>
    %cst_5 = arith.constant 0.000000e+00 : f32
    %6 = vector.broadcast %cst_5 : f32 to vector<392x128xf32>
    %7 = arith.cmpf ogt, %5, %6 : vector<392x128xf32>
    %cst_6 = arith.constant 2.000000e-01 : f32
    %8 = vector.broadcast %cst_6 : f32 to vector<392x128xf32>
    %9 = arith.mulf %8, %5 : vector<392x128xf32>
    %10 = arith.select %7, %5, %9 : vector<392x128xi1>, vector<392x128xf32>
    %c0_7 = arith.constant 0 : index
    %c0_8 = arith.constant 0 : index
    %11 = vector.load %arg5[%c0_7, %c0_8] : memref<392x128xf32, #tpu.memory_space<vmem>>, vector<392x128xf32>
    tpu.vector_store %arg5[%c0_7, %c0_8], %10 {strides = array<i32>} : memref<392x128xf32, #tpu.memory_space<vmem>>, vector<392x128xf32>,
    return
  }
  func.func @transform_0(%arg0: i32, %arg1: i32) -> (i32, i32) {
    %c0_i32 = arith.constant 0 : i32
    %c0_i32_0 = arith.constant 0 : i32
    return %arg0, %c0_i32 : i32, i32
  }
  func.func @transform_1(%arg0: i32, %arg1: i32) -> (i32, i32) {
    %c0_i32 = arith.constant 0 : i32
    %c0_i32_0 = arith.constant 0 : i32
    return %c0_i32, %arg1 : i32, i32
  }
  func.func @transform_2(%arg0: i32, %arg1: i32) -> (i32, i32) {
    %c0_i32 = arith.constant 0 : i32
    %c0_i32_0 = arith.constant 0 : i32
    return %c0_i32, %arg1 : i32, i32
  }
  func.func @transform_3(%arg0: i32, %arg1: i32) -> (i32, i32) {
    %c0_i32 = arith.constant 0 : i32
    return %arg0, %arg1 : i32, i32
  }
}

module attributes {stable_mosaic.version = 11 : i64} {
  func.func @_mm_single_kernel(%arg0: i32, %arg1: i32, %arg2: memref<104x1024xbf16, #tpu.memory_space<vmem>>, %arg3: memref<1024x128xbf16, #tpu.memory_space<vmem>>, %arg4: memref<1x128xf32, #tpu.memory_space<vmem>>, %arg5: memref<104x128xf32, #tpu.memory_space<vmem>>) attributes {dimension_semantics = [#tpu.dimension_semantics<parallel>, #tpu.dimension_semantics<parallel>], iteration_bounds = array<i64: 1, 1>, scalar_prefetch = 0 : i64, scratch_operands = 0 : i64, tpu.core_type = #tpu.core_type<tc>, window_params = [{transform_indices = @transform_0, window_bounds = array<i64: 104, 1024>}, {transform_indices = @transform_1, window_bounds = array<i64: 1024, 128>}, {transform_indices = @transform_2, window_bounds = array<i64: 1, 128>}, {transform_indices = @transform_3, window_bounds = array<i64: 104, 128>}]} {
    %c0 = arith.constant 0 : index
    %c0_0 = arith.constant 0 : index
    %0 = vector.load %arg2[%c0, %c0_0] : memref<104x1024xbf16, #tpu.memory_space<vmem>>, vector<104x1024xbf16>
    %c0_1 = arith.constant 0 : index
    %c0_2 = arith.constant 0 : index
    %1 = vector.load %arg3[%c0_1, %c0_2] : memref<1024x128xbf16, #tpu.memory_space<vmem>>, vector<1024x128xbf16>
    %cst = arith.constant dense<0.000000e+00> : vector<104x128xf32>
    %2 = tpu.matmul %0, %1, %cst {dimension_numbers = #tpu.dot_dimension_numbers<[1], [0], [0], [1], [0, 0, 1, 1], [], []>} : vector<104x1024xbf16>, vector<1024x128xbf16>, vector<104x128xf32> -> vector<104x128xf32>
    %c0_3 = arith.constant 0 : index
    %c0_4 = arith.constant 0 : index
    %3 = vector.load %arg4[%c0_3, %c0_4] : memref<1x128xf32, #tpu.memory_space<vmem>>, vector<1x128xf32>
    %4 = vector.broadcast %3 : vector<1x128xf32> to vector<104x128xf32>
    %5 = arith.addf %2, %4 : vector<104x128xf32>
    %c0_5 = arith.constant 0 : index
    %c0_6 = arith.constant 0 : index
    %6 = vector.load %arg5[%c0_5, %c0_6] : memref<104x128xf32, #tpu.memory_space<vmem>>, vector<104x128xf32>
    tpu.vector_store %arg5[%c0_5, %c0_6], %5 {strides = array<i32>} : memref<104x128xf32, #tpu.memory_space<vmem>>, vector<104x128xf32>,
    return
  }
  func.func @transform_0(%arg0: i32, %arg1: i32) -> (i32, i32) {
    %c0_i32 = arith.constant 0 : i32
    %c0_i32_0 = arith.constant 0 : i32
    return %arg0, %c0_i32 : i32, i32
  }
  func.func @transform_1(%arg0: i32, %arg1: i32) -> (i32, i32) {
    %c0_i32 = arith.constant 0 : i32
    %c0_i32_0 = arith.constant 0 : i32
    return %c0_i32, %arg1 : i32, i32
  }
  func.func @transform_2(%arg0: i32, %arg1: i32) -> (i32, i32) {
    %c0_i32 = arith.constant 0 : i32
    %c0_i32_0 = arith.constant 0 : i32
    return %c0_i32, %arg1 : i32, i32
  }
  func.func @transform_3(%arg0: i32, %arg1: i32) -> (i32, i32) {
    %c0_i32 = arith.constant 0 : i32
    return %arg0, %arg1 : i32, i32
  }
}

module attributes {stable_mosaic.version = 11 : i64} {
  func.func @_mm_acc_kernel(%arg0: i32, %arg1: i32, %arg2: i32, %arg3: memref<8x896xf32, #tpu.memory_space<vmem>>, %arg4: memref<1x896xf32, #tpu.memory_space<vmem>>, %arg5: memref<1x896xf32, #tpu.memory_space<vmem>>, %arg6: memref<896x512xbf16, #tpu.memory_space<vmem>>, %arg7: memref<1x512xf32, #tpu.memory_space<vmem>>, %arg8: memref<8x512xf32, #tpu.memory_space<vmem>>, %arg9: memref<8x512xf32, #tpu.memory_space<vmem>>) attributes {dimension_semantics = [#tpu.dimension_semantics<parallel>, #tpu.dimension_semantics<parallel>, #tpu.dimension_semantics<arbitrary>], iteration_bounds = array<i64: 1, 2, 7>, scalar_prefetch = 0 : i64, scratch_operands = 1 : i64, tpu.core_type = #tpu.core_type<tc>, window_params = [{transform_indices = @transform_0, window_bounds = array<i64: 8, 896>}, {transform_indices = @transform_1, window_bounds = array<i64: 1, 896>}, {transform_indices = @transform_2, window_bounds = array<i64: 1, 896>}, {transform_indices = @transform_3, window_bounds = array<i64: 896, 512>}, {transform_indices = @transform_4, window_bounds = array<i64: 1, 512>}, {transform_indices = @transform_5, window_bounds = array<i64: 8, 512>}]} {
    %c0_i32 = arith.constant 0 : i32
    %0 = arith.cmpi eq, %arg2, %c0_i32 : i32
    %1 = arith.extui %0 : i1 to i32
    %c0_i32_0 = arith.constant 0 : i32
    %2 = arith.cmpi ne, %1, %c0_i32_0 : i32
    scf.if %2 {
      %cst_15 = arith.constant 0.000000e+00 : f32
      %24 = vector.broadcast %cst_15 : f32 to vector<8x512xf32>
      %c0_16 = arith.constant 0 : index
      %c0_17 = arith.constant 0 : index
      %25 = vector.load %arg9[%c0_16, %c0_17] : memref<8x512xf32, #tpu.memory_space<vmem>>, vector<8x512xf32>
      tpu.vector_store %arg9[%c0_16, %c0_17], %24 {strides = array<i32>} : memref<8x512xf32, #tpu.memory_space<vmem>>, vector<8x512xf32>,
    } else {
    }
    %c0 = arith.constant 0 : index
    %c0_1 = arith.constant 0 : index
    %3 = vector.load %arg3[%c0, %c0_1] : memref<8x896xf32, #tpu.memory_space<vmem>>, vector<8x896xf32>
    %c0_2 = arith.constant 0 : index
    %c0_3 = arith.constant 0 : index
    %4 = vector.load %arg4[%c0_2, %c0_3] : memref<1x896xf32, #tpu.memory_space<vmem>>, vector<1x896xf32>
    %5 = vector.broadcast %4 : vector<1x896xf32> to vector<8x896xf32>
    %6 = arith.mulf %3, %5 : vector<8x896xf32>
    %c0_4 = arith.constant 0 : index
    %c0_5 = arith.constant 0 : index
    %7 = vector.load %arg5[%c0_4, %c0_5] : memref<1x896xf32, #tpu.memory_space<vmem>>, vector<1x896xf32>
    %8 = vector.broadcast %7 : vector<1x896xf32> to vector<8x896xf32>
    %9 = arith.addf %6, %8 : vector<8x896xf32>
    %cst = arith.constant 0.000000e+00 : f32
    %10 = vector.broadcast %cst : f32 to vector<8x896xf32>
    %11 = arith.cmpf ogt, %9, %10 : vector<8x896xf32>
    %cst_6 = arith.constant 2.000000e-01 : f32
    %12 = vector.broadcast %cst_6 : f32 to vector<8x896xf32>
    %13 = arith.mulf %12, %9 : vector<8x896xf32>
    %14 = arith.select %11, %9, %13 : vector<8x896xi1>, vector<8x896xf32>
    %15 = arith.truncf %14 : vector<8x896xf32> to vector<8x896xbf16>
    %c0_7 = arith.constant 0 : index
    %c0_8 = arith.constant 0 : index
    %16 = vector.load %arg9[%c0_7, %c0_8] : memref<8x512xf32, #tpu.memory_space<vmem>>, vector<8x512xf32>
    %c0_9 = arith.constant 0 : index
    %c0_10 = arith.constant 0 : index
    %17 = vector.load %arg6[%c0_9, %c0_10] : memref<896x512xbf16, #tpu.memory_space<vmem>>, vector<896x512xbf16>
    %cst_11 = arith.constant dense<0.000000e+00> : vector<8x512xf32>
    %18 = tpu.matmul %15, %17, %cst_11 {dimension_numbers = #tpu.dot_dimension_numbers<[1], [0], [0], [1], [0, 0, 1, 1], [], []>} : vector<8x896xbf16>, vector<896x512xbf16>, vector<8x512xf32> -> vector<8x512xf32>
    %19 = arith.addf %16, %18 : vector<8x512xf32>
    %c0_12 = arith.constant 0 : index
    %c0_13 = arith.constant 0 : index
    %20 = vector.load %arg9[%c0_12, %c0_13] : memref<8x512xf32, #tpu.memory_space<vmem>>, vector<8x512xf32>
    tpu.vector_store %arg9[%c0_12, %c0_13], %19 {strides = array<i32>} : memref<8x512xf32, #tpu.memory_space<vmem>>, vector<8x512xf32>,
    %c6_i32 = arith.constant 6 : i32
    %21 = arith.cmpi eq, %arg2, %c6_i32 : i32
    %22 = arith.extui %21 : i1 to i32
    %c0_i32_14 = arith.constant 0 : i32
    %23 = arith.cmpi ne, %22, %c0_i32_14 : i32
    scf.if %23 {
      %c0_15 = arith.constant 0 : index
      %c0_16 = arith.constant 0 : index
      %24 = vector.load %arg9[%c0_15, %c0_16] : memref<8x512xf32, #tpu.memory_space<vmem>>, vector<8x512xf32>
      %c0_17 = arith.constant 0 : index
      %c0_18 = arith.constant 0 : index
      %25 = vector.load %arg7[%c0_17, %c0_18] : memref<1x512xf32, #tpu.memory_space<vmem>>, vector<1x512xf32>
      %26 = vector.broadcast %25 : vector<1x512xf32> to vector<8x512xf32>
      %27 = arith.addf %24, %26 : vector<8x512xf32>
      %c0_19 = arith.constant 0 : index
      %c0_20 = arith.constant 0 : index
      %28 = vector.load %arg8[%c0_19, %c0_20] : memref<8x512xf32, #tpu.memory_space<vmem>>, vector<8x512xf32>
      tpu.vector_store %arg8[%c0_19, %c0_20], %27 {strides = array<i32>} : memref<8x512xf32, #tpu.memory_space<vmem>>, vector<8x512xf32>,
    } else {
    }
    return
  }
  func.func @transform_0(%arg0: i32, %arg1: i32, %arg2: i32) -> (i32, i32) {
    %c0_i32 = arith.constant 0 : i32
    return %arg0, %arg2 : i32, i32
  }
  func.func @transform_1(%arg0: i32, %arg1: i32, %arg2: i32) -> (i32, i32) {
    %c0_i32 = arith.constant 0 : i32
    %c0_i32_0 = arith.constant 0 : i32
    return %c0_i32, %arg2 : i32, i32
  }
  func.func @transform_2(%arg0: i32, %arg1: i32, %arg2: i32) -> (i32, i32) {
    %c0_i32 = arith.constant 0 : i32
    %c0_i32_0 = arith.constant 0 : i32
    return %c0_i32, %arg2 : i32, i32
  }
  func.func @transform_3(%arg0: i32, %arg1: i32, %arg2: i32) -> (i32, i32) {
    %c0_i32 = arith.constant 0 : i32
    return %arg2, %arg1 : i32, i32
  }
  func.func @transform_4(%arg0: i32, %arg1: i32, %arg2: i32) -> (i32, i32) {
    %c0_i32 = arith.constant 0 : i32
    %c0_i32_0 = arith.constant 0 : i32
    return %c0_i32, %arg1 : i32, i32
  }
  func.func @transform_5(%arg0: i32, %arg1: i32, %arg2: i32) -> (i32, i32) {
    %c0_i32 = arith.constant 0 : i32
    return %arg0, %arg1 : i32, i32
  }
}

module attributes {stable_mosaic.version = 11 : i64} {
  func.func @_head_kernel(%arg0: i32, %arg1: memref<2x1024xf32, #tpu.memory_space<vmem>>, %arg2: memref<1x1024xf32, #tpu.memory_space<vmem>>, %arg3: memref<1x1024xf32, #tpu.memory_space<vmem>>, %arg4: memref<1x1024xf32, #tpu.memory_space<vmem>>, %arg5: memref<1x1xf32, #tpu.memory_space<vmem>>, %arg6: memref<2x1xf32, #tpu.memory_space<vmem>>) attributes {dimension_semantics = [#tpu.dimension_semantics<arbitrary>], iteration_bounds = array<i64: 1>, scalar_prefetch = 0 : i64, scratch_operands = 0 : i64, tpu.core_type = #tpu.core_type<tc>, window_params = [{pipeline_mode = #tpu.pipeline_mode<synchronous>, transform_indices = @transform_0, window_bounds = array<i64: 2, 1024>}, {pipeline_mode = #tpu.pipeline_mode<synchronous>, transform_indices = @transform_1, window_bounds = array<i64: 1, 1024>}, {pipeline_mode = #tpu.pipeline_mode<synchronous>, transform_indices = @transform_2, window_bounds = array<i64: 1, 1024>}, {pipeline_mode = #tpu.pipeline_mode<synchronous>, transform_indices = @transform_3, window_bounds = array<i64: 1, 1024>}, {pipeline_mode = #tpu.pipeline_mode<synchronous>, transform_indices = @transform_4, window_bounds = array<i64: 1, 1>}, {pipeline_mode = #tpu.pipeline_mode<synchronous>, transform_indices = @transform_5, window_bounds = array<i64: 2, 1>}]} {
    %c0 = arith.constant 0 : index
    %c0_0 = arith.constant 0 : index
    %0 = vector.load %arg1[%c0, %c0_0] : memref<2x1024xf32, #tpu.memory_space<vmem>>, vector<2x1024xf32>
    %c0_1 = arith.constant 0 : index
    %c0_2 = arith.constant 0 : index
    %1 = vector.load %arg2[%c0_1, %c0_2] : memref<1x1024xf32, #tpu.memory_space<vmem>>, vector<1x1024xf32>
    %2 = vector.broadcast %1 : vector<1x1024xf32> to vector<2x1024xf32>
    %3 = arith.mulf %0, %2 : vector<2x1024xf32>
    %c0_3 = arith.constant 0 : index
    %c0_4 = arith.constant 0 : index
    %4 = vector.load %arg3[%c0_3, %c0_4] : memref<1x1024xf32, #tpu.memory_space<vmem>>, vector<1x1024xf32>
    %5 = vector.broadcast %4 : vector<1x1024xf32> to vector<2x1024xf32>
    %6 = arith.addf %3, %5 : vector<2x1024xf32>
    %cst = arith.constant 0.000000e+00 : f32
    %7 = vector.broadcast %cst : f32 to vector<2x1024xf32>
    %8 = arith.cmpf ogt, %6, %7 : vector<2x1024xf32>
    %cst_5 = arith.constant 2.000000e-01 : f32
    %9 = vector.broadcast %cst_5 : f32 to vector<2x1024xf32>
    %10 = arith.mulf %9, %6 : vector<2x1024xf32>
    %11 = arith.select %8, %6, %10 : vector<2x1024xi1>, vector<2x1024xf32>
    %c0_6 = arith.constant 0 : index
    %c0_7 = arith.constant 0 : index
    %12 = vector.load %arg4[%c0_6, %c0_7] : memref<1x1024xf32, #tpu.memory_space<vmem>>, vector<1x1024xf32>
    %13 = vector.broadcast %12 : vector<1x1024xf32> to vector<2x1024xf32>
    %14 = arith.mulf %11, %13 : vector<2x1024xf32>
    %cst_8 = arith.constant dense<0.000000e+00> : vector<2xf32>
    %15 = vector.multi_reduction <add>, %14, %cst_8 [1] : vector<2x1024xf32> to vector<2xf32>
    %16 = vector.shape_cast %15 : vector<2xf32> to vector<2x1xf32>
    %c0_9 = arith.constant 0 : index
    %c0_10 = arith.constant 0 : index
    %17 = vector.load %arg5[%c0_9, %c0_10] : memref<1x1xf32, #tpu.memory_space<vmem>>, vector<1x1xf32>
    %18 = vector.broadcast %17 : vector<1x1xf32> to vector<2x1xf32>
    %19 = arith.addf %16, %18 : vector<2x1xf32>
    %20 = arith.negf %19 : vector<2x1xf32>
    %21 = math.exp %20 : vector<2x1xf32>
    %cst_11 = arith.constant 1.000000e+00 : f32
    %22 = vector.broadcast %cst_11 : f32 to vector<2x1xf32>
    %23 = arith.addf %22, %21 : vector<2x1xf32>
    %24 = arith.divf %22, %23 : vector<2x1xf32>
    %c0_12 = arith.constant 0 : index
    %c0_13 = arith.constant 0 : index
    %25 = vector.load %arg6[%c0_12, %c0_13] : memref<2x1xf32, #tpu.memory_space<vmem>>, vector<2x1xf32>
    tpu.vector_store %arg6[%c0_12, %c0_13], %24 {strides = array<i32>} : memref<2x1xf32, #tpu.memory_space<vmem>>, vector<2x1xf32>,
    return
  }
  func.func @transform_0(%arg0: i32) -> (i32, i32) {
    %c0_i32 = arith.constant 0 : i32
    %c0_i32_0 = arith.constant 0 : i32
    %c0_i32_1 = arith.constant 0 : i32
    return %c0_i32, %c0_i32_0 : i32, i32
  }
  func.func @transform_1(%arg0: i32) -> (i32, i32) {
    %c0_i32 = arith.constant 0 : i32
    %c0_i32_0 = arith.constant 0 : i32
    %c0_i32_1 = arith.constant 0 : i32
    return %c0_i32, %c0_i32_0 : i32, i32
  }
  func.func @transform_2(%arg0: i32) -> (i32, i32) {
    %c0_i32 = arith.constant 0 : i32
    %c0_i32_0 = arith.constant 0 : i32
    %c0_i32_1 = arith.constant 0 : i32
    return %c0_i32, %c0_i32_0 : i32, i32
  }
  func.func @transform_3(%arg0: i32) -> (i32, i32) {
    %c0_i32 = arith.constant 0 : i32
    %c0_i32_0 = arith.constant 0 : i32
    %c0_i32_1 = arith.constant 0 : i32
    return %c0_i32, %c0_i32_0 : i32, i32
  }
  func.func @transform_4(%arg0: i32) -> (i32, i32) {
    %c0_i32 = arith.constant 0 : i32
    %c0_i32_0 = arith.constant 0 : i32
    %c0_i32_1 = arith.constant 0 : i32
    return %c0_i32, %c0_i32_0 : i32, i32
  }
  func.func @transform_5(%arg0: i32) -> (i32, i32) {
    %c0_i32 = arith.constant 0 : i32
    %c0_i32_0 = arith.constant 0 : i32
    %c0_i32_1 = arith.constant 0 : i32
    return %c0_i32, %c0_i32_0 : i32, i32
  }
}

</mosaic_0001>

<llo_original>
// kernel: discriminator_forward.4
$region0: #{discriminator_forward.4}
  #allocation0 [shape = 'u32[]', space=smem, size = 0x4, offset = 0x4, fixed_abs, tag = 'smem constant byte address 0x4 - core index']
  #allocation1 [shape = 'u32[144,128]{1,0:T(1,128)}', space=vmem, size = 0x12000, scoped, tag = 'internal scratch']
  %s0 = inlined_call_operand.vmem [shape: bf16[392,16], index: 0, kind: input, shape index: {}]
  %s1 = inlined_call_operand.vmem [shape: bf16[16,128], index: 1, kind: input, shape index: {}]
  %s2 = inlined_call_operand.vmem [shape: f32[1,128], index: 2, kind: input, shape index: {}]
  %s3 = inlined_call_operand.vmem [shape: f32[392,128], index: 3, kind: output, shape index: {}]
  %s4 = sld [smem:[#allocation0]]
  $region22: #{discriminator_forward.4} parent=0
    _
  %s6 = ssub.s32 1, %s4
  %s7 = scalar_select 0, %s6, %s4
  // Predicated region
  $region2: #{discriminator_forward.4} parent=0 // pred_check
    _
  $region3: #{discriminator_forward.4} parent=0 // pred_check_branch
    %9 = sbr.rel (0) target = $region5
  $region4: #{discriminator_forward.4} parent=0 // pred_region
    _
  $region5: #{discriminator_forward.4} parent=0 // pred_fallthru
    _
  // Predicated region
  $region6: #{discriminator_forward.4} parent=0 // pred_check
    _
  $region7: #{discriminator_forward.4} parent=0 // pred_check_branch
    %11 = sbr.rel (0) target = $region9
  $region8: #{discriminator_forward.4} parent=0 // pred_region
    _
  $region9: #{discriminator_forward.4} parent=0 // pred_fallthru
    _
  // Predicated region
  $region10: #{discriminator_forward.4} parent=0 // pred_check
    _
  $region11: #{discriminator_forward.4} parent=0 // pred_check_branch
    %13 = sbr.rel (0) target = $region13
  $region12: #{discriminator_forward.4} parent=0 // pred_region
    _
  $region13: #{discriminator_forward.4} parent=0 // pred_fallthru
    _
  %v15 = vld [vmem:[%s0] sm:$0xf]
  %v16 = vld [vmem:[%s0 + $0x4] sm:$0xf]
  %v17 = vld [vmem:[%s0 + $0x8] sm:$0xf]
  %v18 = vld [vmem:[%s0 + $0xc] sm:$0xf]
  %v19 = vld [vmem:[%s0 + $0x10] sm:$0xf]
  %v20 = vld [vmem:[%s0 + $0x14] sm:$0xf]
  %v21 = vld [vmem:[%s0 + $0x18] sm:$0xf]
  %v22 = vld [vmem:[%s0 + $0x1c] sm:$0xf]
  %v23 = vld [vmem:[%s0 + $0x20] sm:$0xf]
  %v24 = vld [vmem:[%s0 + $0x24] sm:$0xf]
  %v25 = vld [vmem:[%s0 + $0x28] sm:$0xf]
  %v26 = vld [vmem:[%s0 + $0x2c] sm:$0xf]
  %v27 = vld [vmem:[%s0 + $0x30] sm:$0xf]
  %v28 = vld [vmem:[%s0 + $0x34] sm:$0xf]
  %v29 = vld [vmem:[%s0 + $0x38] sm:$0xf]
  %v30 = vld [vmem:[%s0 + $0x3c] sm:$0xf]
  %v31 = vld [vmem:[%s0 + $0x40] sm:$0xf]
  %v32 = vld [vmem:[%s0 + $0x44] sm:$0xf]
  %v33 = vld [vmem:[%s0 + $0x48] sm:$0xf]
  %v34 = vld [vmem:[%s0 + $0x4c] sm:$0xf]
  %v35 = vld [vmem:[%s0 + $0x50] sm:$0xf]
  %v36 = vld [vmem:[%s0 + $0x54] sm:$0xf]
  %v37 = vld [vmem:[%s0 + $0x58] sm:$0xf]
  %v38 = vld [vmem:[%s0 + $0x5c] sm:$0xf]
  %v39 = vld [vmem:[%s0 + $0x60] sm:$0xf]
  %v40 = vld [vmem:[%s0 + $0x64] sm:$0xf]
  %v41 = vld [vmem:[%s0 + $0x68] sm:$0xf]
  %v42 = vld [vmem:[%s0 + $0x6c] sm:$0xf]
  %v43 = vld [vmem:[%s0 + $0x70] sm:$0xf]
  %v44 = vld [vmem:[%s0 + $0x74] sm:$0xf]
  %v45 = vld [vmem:[%s0 + $0x78] sm:$0xf]
  %v46 = vld [vmem:[%s0 + $0x7c] sm:$0xf]
  %v47 = vld [vmem:[%s0 + $0x80] sm:$0xf]
  %v48 = vld [vmem:[%s0 + $0x84] sm:$0xf]
  %v49 = vld [vmem:[%s0 + $0x88] sm:$0xf]
  %v50 = vld [vmem:[%s0 + $0x8c] sm:$0xf]
  %v51 = vld [vmem:[%s0 + $0x90] sm:$0xf]
  %v52 = vld [vmem:[%s0 + $0x94] sm:$0xf]
  %v53 = vld [vmem:[%s0 + $0x98] sm:$0xf]
  %v54 = vld [vmem:[%s0 + $0x9c] sm:$0xf]
  %v55 = vld [vmem:[%s0 + $0xa0] sm:$0xf]
  %v56 = vld [vmem:[%s0 + $0xa4] sm:$0xf]
  %v57 = vld [vmem:[%s0 + $0xa8] sm:$0xf]
  %v58 = vld [vmem:[%s0 + $0xac] sm:$0xf]
  %v59 = vld [vmem:[%s0 + $0xb0] sm:$0xf]
  %v60 = vld [vmem:[%s0 + $0xb4] sm:$0xf]
  %v61 = vld [vmem:[%s0 + $0xb8] sm:$0xf]
  %v62 = vld [vmem:[%s0 + $0xbc] sm:$0xf]
  %v63 = vld [vmem:[%s0 + $0xc0] sm:$0xf]
  %v64 = vld [vmem:[%s1] sm:$0xf]
  %v65 = vld [vmem:[%s1 + $0x4] sm:$0xf]
  %v66 = vld [vmem:[%s2] sm:$0x1]
  %v68 = vlaneseq
  %v69 = vshrl.u32 %v68, 7
  %v70 = vsub.s32 0, %v69
  %v71 = vrot.slane %v66, %v70
  %v122 = vunpack.c.l.b16 %v15
  %v123 = vunpack.c.l.b16 %v16
  %v124 = vunpack.c.l.b16 %v17
  %v125 = vunpack.c.l.b16 %v18
  %v126 = vunpack.c.l.b16 %v19
  %v127 = vunpack.c.l.b16 %v20
  %v128 = vunpack.c.l.b16 %v21
  %v129 = vunpack.c.l.b16 %v22
  %v130 = vunpack.c.l.b16 %v23
  %v131 = vunpack.c.l.b16 %v24
  %v132 = vunpack.c.l.b16 %v25
  %v133 = vunpack.c.l.b16 %v26
  %v134 = vunpack.c.l.b16 %v27
  %v135 = vunpack.c.l.b16 %v28
  %v136 = vunpack.c.l.b16 %v29
  %v137 = vunpack.c.l.b16 %v30
  %v138 = vunpack.c.l.b16 %v31
  %v139 = vunpack.c.l.b16 %v32
  %v140 = vunpack.c.l.b16 %v33
  %v141 = vunpack.c.l.b16 %v34
  %v142 = vunpack.c.l.b16 %v35
  %v143 = vunpack.c.l.b16 %v36
  %v144 = vunpack.c.l.b16 %v37
  %v145 = vunpack.c.l.b16 %v38
  %v146 = vunpack.c.l.b16 %v39
  %v147 = vunpack.c.l.b16 %v40
  %v148 = vunpack.c.l.b16 %v41
  %v149 = vunpack.c.l.b16 %v42
  %v150 = vunpack.c.l.b16 %v43
  %v151 = vunpack.c.l.b16 %v44
  %v152 = vunpack.c.l.b16 %v45
  %v153 = vunpack.c.l.b16 %v46
  %v154 = vunpack.c.l.b16 %v47
  %v155 = vunpack.c.l.b16 %v48
  %v156 = vunpack.c.l.b16 %v49
  %v157 = vunpack.c.l.b16 %v50
  %v158 = vunpack.c.l.b16 %v51
  %v159 = vunpack.c.l.b16 %v52
  %v160 = vunpack.c.l.b16 %v53
  %v161 = vunpack.c.l.b16 %v54
  %v162 = vunpack.c.l.b16 %v55
  %v163 = vunpack.c.l.b16 %v56
  %v164 = vunpack.c.l.b16 %v57
  %v165 = vunpack.c.l.b16 %v58
  %v166 = vunpack.c.l.b16 %v59
  %v167 = vunpack.c.l.b16 %v60
  %v168 = vunpack.c.l.b16 %v61
  %v169 = vunpack.c.l.b16 %v62
  %v170 = vunpack.c.l.b16 %v63
  %v171 = vpack.c.b16 %v123, %v122
  %v172 = vpack.c.b16 %v125, %v124
  %v173 = vpack.c.b16 %v127, %v126
  %v174 = vpack.c.b16 %v129, %v128
  %v175 = vpack.c.b16 %v131, %v130
  %v176 = vpack.c.b16 %v133, %v132
  %v177 = vpack.c.b16 %v135, %v134
  %v178 = vpack.c.b16 %v137, %v136
  %v179 = vpack.c.b16 %v139, %v138
  %v180 = vpack.c.b16 %v141, %v140
  %v181 = vpack.c.b16 %v143, %v142
  %v182 = vpack.c.b16 %v145, %v144
  %v183 = vpack.c.b16 %v147, %v146
  %v184 = vpack.c.b16 %v149, %v148
  %v185 = vpack.c.b16 %v151, %v150
  %v186 = vpack.c.b16 %v153, %v152
  %v187 = vpack.c.b16 %v155, %v154
  %v188 = vpack.c.b16 %v157, %v156
  %v189 = vpack.c.b16 %v159, %v158
  %v190 = vpack.c.b16 %v161, %v160
  %v191 = vpack.c.b16 %v163, %v162
  %v192 = vpack.c.b16 %v165, %v164
  %v193 = vpack.c.b16 %v167, %v166
  %v194 = vpack.c.b16 %v169, %v168
  %v195 = vpack.c.b16 %v170, %v170
  %v198 = vunpack.c.l.b16 %v64
  %v199 = vunpack.c.l.b16 %v65
  %v200 = vpack.c.b16 %v199, %v198
  %vm202 = vcmask 130048
  %v204 = vsel %vm202, %v171, 0
  %v207 = vsel %vm202, %v172, 0
  %v210 = vsel %vm202, %v173, 0
  %v213 = vsel %vm202, %v174, 0
  %v216 = vsel %vm202, %v175, 0
  %v219 = vsel %vm202, %v176, 0
  %v222 = vsel %vm202, %v177, 0
  %v225 = vsel %vm202, %v178, 0
  %v228 = vsel %vm202, %v179, 0
  %v231 = vsel %vm202, %v180, 0
  %v234 = vsel %vm202, %v181, 0
  %v237 = vsel %vm202, %v182, 0
  %v240 = vsel %vm202, %v183, 0
  %v243 = vsel %vm202, %v184, 0
  %v246 = vsel %vm202, %v185, 0
  %v249 = vsel %vm202, %v186, 0
  %v252 = vsel %vm202, %v187, 0
  %v255 = vsel %vm202, %v188, 0
  %v258 = vsel %vm202, %v189, 0
  %v261 = vsel %vm202, %v190, 0
  %v264 = vsel %vm202, %v191, 0
  %v267 = vsel %vm202, %v192, 0
  %v270 = vsel %vm202, %v193, 0
  %v273 = vsel %vm202, %v194, 0
  %v276 = vsel %vm202, %v195, 0
  %278 = vmatprep.subr.bf16.mxu0 0
  %279 = vmatpush1.bf16.msra.mxu0 %v200
  %280 = vmatprep.subr.bf16.mxu0 0
  %281 = vmatpush1.bf16.msra.mxu0 0
  %282 = vmatprep.subr.bf16.mxu0 0
  %283 = vmatpush1.bf16.msra.mxu0 0
  %284 = vmatprep.subr.bf16.mxu0 0
  %285 = vmatpush1.bf16.msra.mxu0 0
  %286 = vmatprep.subr.bf16.mxu0 0
  %287 = vmatpush1.bf16.msra.mxu0 0
  %288 = vmatprep.subr.bf16.mxu0 0
  %289 = vmatpush1.bf16.msra.mxu0 0
  %290 = vmatprep.subr.bf16.mxu0 0
  %291 = vmatpush1.bf16.msra.mxu0 0
  %292 = vmatprep.subr.bf16.mxu0 0
  %293 = vmatpush1.bf16.msra.mxu0 0
  %294 = vmatprep.subr.bf16.mxu0 0
  %295 = vmatpush1.bf16.msra.mxu0 0
  %296 = vmatprep.subr.bf16.mxu0 0
  %297 = vmatpush1.bf16.msra.mxu0 0
  %298 = vmatprep.subr.bf16.mxu0 0
  %299 = vmatpush1.bf16.msra.mxu0 0
  %300 = vmatprep.subr.bf16.mxu0 0
  %301 = vmatpush1.bf16.msra.mxu0 0
  %302 = vmatprep.subr.bf16.mxu0 0
  %303 = vmatpush1.bf16.msra.mxu0 0
  %304 = vmatprep.subr.bf16.mxu0 0
  %305 = vmatpush1.bf16.msra.mxu0 0
  %306 = vmatprep.subr.bf16.mxu0 0
  %307 = vmatpush1.bf16.msra.mxu0 0
  %308 = vmatprep.subr.bf16.mxu0 0
  %309 = vmatpush1.bf16.msra.mxu0 0
  %310 = vmatprep.mubr.bf16.mxu0 0
  %311 = vmatmul.mubr.bf16.gmra.mrb[0].mxu0 %v204
  %v312 = vpop.f32.mrb[0].mxu0
  %v313 = vadd.f32 %v71, %v312
  %v314 = vpop.f32.mrb[0].mxu0
  %v315 = vpop.f32.mrb[0].mxu0
  %v316 = vadd.f32 %v71, %v315
  %v317 = vpop.f32.mrb[0].mxu0
  %318 = vmatprep.mubr.bf16.mxu0 0
  %319 = vmatmul.mubr.bf16.gmra.mrb[0].mxu0 %v207
  %v320 = vpop.f32.mrb[0].mxu0
  %v321 = vadd.f32 %v71, %v320
  %v322 = vpop.f32.mrb[0].mxu0
  %v323 = vpop.f32.mrb[0].mxu0
  %v324 = vadd.f32 %v71, %v323
  %v325 = vpop.f32.mrb[0].mxu0
  %326 = vmatprep.mubr.bf16.mxu0 0
  %327 = vmatmul.mubr.bf16.gmra.mrb[0].mxu0 %v210
  %v328 = vpop.f32.mrb[0].mxu0
  %v329 = vadd.f32 %v71, %v328
  %v330 = vpop.f32.mrb[0].mxu0
  %v331 = vpop.f32.mrb[0].mxu0
  %v332 = vadd.f32 %v71, %v331
  %v333 = vpop.f32.mrb[0].mxu0
  %334 = vmatprep.mubr.bf16.mxu0 0
  %335 = vmatmul.mubr.bf16.gmra.mrb[0].mxu0 %v213
  %v336 = vpop.f32.mrb[0].mxu0
  %v337 = vadd.f32 %v71, %v336
  %v338 = vpop.f32.mrb[0].mxu0
  %v339 = vpop.f32.mrb[0].mxu0
  %v340 = vadd.f32 %v71, %v339
  %v341 = vpop.f32.mrb[0].mxu0
  %342 = vmatprep.mubr.bf16.mxu0 0
  %343 = vmatmul.mubr.bf16.gmra.mrb[0].mxu0 %v216
  %v344 = vpop.f32.mrb[0].mxu0
  %v345 = vadd.f32 %v71, %v344
  %v346 = vpop.f32.mrb[0].mxu0
  %v347 = vpop.f32.mrb[0].mxu0
  %v348 = vadd.f32 %v71, %v347
  %v349 = vpop.f32.mrb[0].mxu0
  %350 = vmatprep.mubr.bf16.mxu0 0
  %351 = vmatmul.mubr.bf16.gmra.mrb[0].mxu0 %v219
  %v352 = vpop.f32.mrb[0].mxu0
  %v353 = vadd.f32 %v71, %v352
  %v354 = vpop.f32.mrb[0].mxu0
  %v355 = vpop.f32.mrb[0].mxu0
  %v356 = vadd.f32 %v71, %v355
  %v357 = vpop.f32.mrb[0].mxu0
  %358 = vmatprep.mubr.bf16.mxu0 0
  %359 = vmatmul.mubr.bf16.gmra.mrb[0].mxu0 %v222
  %v360 = vpop.f32.mrb[0].mxu0
  %v361 = vadd.f32 %v71, %v360
  %v362 = vpop.f32.mrb[0].mxu0
  %v363 = vpop.f32.mrb[0].mxu0
  %v364 = vadd.f32 %v71, %v363
  %v365 = vpop.f32.mrb[0].mxu0
  %366 = vmatprep.mubr.bf16.mxu0 0
  %367 = vmatmul.mubr.bf16.gmra.mrb[0].mxu0 %v225
  %v368 = vpop.f32.mrb[0].mxu0
  %v369 = vadd.f32 %v71, %v368
  %v370 = vpop.f32.mrb[0].mxu0
  %v371 = vpop.f32.mrb[0].mxu0
  %v372 = vadd.f32 %v71, %v371
  %v373 = vpop.f32.mrb[0].mxu0
  %374 = vmatprep.mubr.bf16.mxu0 0
  %375 = vmatmul.mubr.bf16.gmra.mrb[0].mxu0 %v228
  %v376 = vpop.f32.mrb[0].mxu0
  %v377 = vadd.f32 %v71, %v376
  %v378 = vpop.f32.mrb[0].mxu0
  %v379 = vpop.f32.mrb[0].mxu0
  %v380 = vadd.f32 %v71, %v379
  %v381 = vpop.f32.mrb[0].mxu0
  %382 = vmatprep.mubr.bf16.mxu0 0
  %383 = vmatmul.mubr.bf16.gmra.mrb[0].mxu0 %v231
  %v384 = vpop.f32.mrb[0].mxu0
  %v385 = vadd.f32 %v71, %v384
  %v386 = vpop.f32.mrb[0].mxu0
  %v387 = vpop.f32.mrb[0].mxu0
  %v388 = vadd.f32 %v71, %v387
  %v389 = vpop.f32.mrb[0].mxu0
  %390 = vmatprep.mubr.bf16.mxu0 0
  %391 = vmatmul.mubr.bf16.gmra.mrb[0].mxu0 %v234
  %v392 = vpop.f32.mrb[0].mxu0
  %v393 = vadd.f32 %v71, %v392
  %v394 = vpop.f32.mrb[0].mxu0
  %v395 = vpop.f32.mrb[0].mxu0
  %v396 = vadd.f32 %v71, %v395
  %v397 = vpop.f32.mrb[0].mxu0
  %398 = vmatprep.mubr.bf16.mxu0 0
  %399 = vmatmul.mubr.bf16.gmra.mrb[0].mxu0 %v237
  %v400 = vpop.f32.mrb[0].mxu0
  %v401 = vadd.f32 %v71, %v400
  %v402 = vpop.f32.mrb[0].mxu0
  %v403 = vpop.f32.mrb[0].mxu0
  %v404 = vadd.f32 %v71, %v403
  %v405 = vpop.f32.mrb[0].mxu0
  %406 = vmatprep.mubr.bf16.mxu0 0
  %407 = vmatmul.mubr.bf16.gmra.mrb[0].mxu0 %v240
  %v408 = vpop.f32.mrb[0].mxu0
  %v409 = vadd.f32 %v71, %v408
  %v410 = vpop.f32.mrb[0].mxu0
  %v411 = vpop.f32.mrb[0].mxu0
  %v412 = vadd.f32 %v71, %v411
  %v413 = vpop.f32.mrb[0].mxu0
  %414 = vmatprep.mubr.bf16.mxu0 0
  %415 = vmatmul.mubr.bf16.gmra.mrb[0].mxu0 %v243
  %v416 = vpop.f32.mrb[0].mxu0
  %v417 = vadd.f32 %v71, %v416
  %v418 = vpop.f32.mrb[0].mxu0
  %v419 = vpop.f32.mrb[0].mxu0
  %v420 = vadd.f32 %v71, %v419
  %v421 = vpop.f32.mrb[0].mxu0
  %422 = vmatprep.mubr.bf16.mxu0 0
  %423 = vmatmul.mubr.bf16.gmra.mrb[0].mxu0 %v246
  %v424 = vpop.f32.mrb[0].mxu0
  %v425 = vadd.f32 %v71, %v424
  %v426 = vpop.f32.mrb[0].mxu0
  %v427 = vpop.f32.mrb[0].mxu0
  %v428 = vadd.f32 %v71, %v427
  %v429 = vpop.f32.mrb[0].mxu0
  %430 = vmatprep.mubr.bf16.mxu0 0
  %431 = vmatmul.mubr.bf16.gmra.mrb[0].mxu0 %v249
  %v432 = vpop.f32.mrb[0].mxu0
  %v433 = vadd.f32 %v71, %v432
  %v434 = vpop.f32.mrb[0].mxu0
  %v435 = vpop.f32.mrb[0].mxu0
  %v436 = vadd.f32 %v71, %v435
  %v437 = vpop.f32.mrb[0].mxu0
  %438 = vmatprep.mubr.bf16.mxu0 0
  %439 = vmatmul.mubr.bf16.gmra.mrb[0].mxu0 %v252
  %v440 = vpop.f32.mrb[0].mxu0
  %v441 = vadd.f32 %v71, %v440
  %v442 = vpop.f32.mrb[0].mxu0
  %v443 = vpop.f32.mrb[0].mxu0
  %v444 = vadd.f32 %v71, %v443
  %v445 = vpop.f32.mrb[0].mxu0
  %446 = vmatprep.mubr.bf16.mxu0 0
  %447 = vmatmul.mubr.bf16.gmra.mrb[0].mxu0 %v255
  %v448 = vpop.f32.mrb[0].mxu0
  %v449 = vadd.f32 %v71, %v448
  %v450 = vpop.f32.mrb[0].mxu0
  %v451 = vpop.f32.mrb[0].mxu0
  %v452 = vadd.f32 %v71, %v451
  %v453 = vpop.f32.mrb[0].mxu0
  %454 = vmatprep.mubr.bf16.mxu0 0
  %455 = vmatmul.mubr.bf16.gmra.mrb[0].mxu0 %v258
  %v456 = vpop.f32.mrb[0].mxu0
  %v457 = vadd.f32 %v71, %v456
  %v458 = vpop.f32.mrb[0].mxu0
  %v459 = vpop.f32.mrb[0].mxu0
  %v460 = vadd.f32 %v71, %v459
  %v461 = vpop.f32.mrb[0].mxu0
  %462 = vmatprep.mubr.bf16.mxu0 0
  %463 = vmatmul.mubr.bf16.gmra.mrb[0].mxu0 %v261
  %v464 = vpop.f32.mrb[0].mxu0
  %v465 = vadd.f32 %v71, %v464
  %v466 = vpop.f32.mrb[0].mxu0
  %v467 = vpop.f32.mrb[0].mxu0
  %v468 = vadd.f32 %v71, %v467
  %v469 = vpop.f32.mrb[0].mxu0
  %470 = vmatprep.mubr.bf16.mxu0 0
  %471 = vmatmul.mubr.bf16.gmra.mrb[0].mxu0 %v264
  %v472 = vpop.f32.mrb[0].mxu0
  %v473 = vadd.f32 %v71, %v472
  %v474 = vpop.f32.mrb[0].mxu0
  %v475 = vpop.f32.mrb[0].mxu0
  %v476 = vadd.f32 %v71, %v475
  %v477 = vpop.f32.mrb[0].mxu0
  %478 = vmatprep.mubr.bf16.mxu0 0
  %479 = vmatmul.mubr.bf16.gmra.mrb[0].mxu0 %v267
  %v480 = vpop.f32.mrb[0].mxu0
  %v481 = vadd.f32 %v71, %v480
  %v482 = vpop.f32.mrb[0].mxu0
  %v483 = vpop.f32.mrb[0].mxu0
  %v484 = vadd.f32 %v71, %v483
  %v485 = vpop.f32.mrb[0].mxu0
  %486 = vmatprep.mubr.bf16.mxu0 0
  %487 = vmatmul.mubr.bf16.gmra.mrb[0].mxu0 %v270
  %v488 = vpop.f32.mrb[0].mxu0
  %v489 = vadd.f32 %v71, %v488
  %v490 = vpop.f32.mrb[0].mxu0
  %v491 = vpop.f32.mrb[0].mxu0
  %v492 = vadd.f32 %v71, %v491
  %v493 = vpop.f32.mrb[0].mxu0
  %494 = vmatprep.mubr.bf16.mxu0 0
  %495 = vmatmul.mubr.bf16.gmra.mrb[0].mxu0 %v273
  %v496 = vpop.f32.mrb[0].mxu0
  %v497 = vadd.f32 %v71, %v496
  %v498 = vpop.f32.mrb[0].mxu0
  %v499 = vpop.f32.mrb[0].mxu0
  %v500 = vadd.f32 %v71, %v499
  %v501 = vpop.f32.mrb[0].mxu0
  %502 = vmatprep.mubr.bf16.mxu0 0
  %503 = vmatmul.mubr.bf16.gmra.mrb[0].mxu0 %v276
  %v504 = vpop.f32.mrb[0].mxu0
  %v505 = vadd.f32 %v71, %v504
  %v506 = vpop.f32.mrb[0].mxu0
  %v507 = vpop.f32.mrb[0].mxu0
  %v508 = vpop.f32.mrb[0].mxu0
  %509 = vdwg.mxu0
  %vm510 = vcmp.gt.f32.partialorder %v313, 0.0
  %vm511 = vcmp.gt.f32.partialorder %v316, 0.0
  %vm512 = vcmp.gt.f32.partialorder %v321, 0.0
  %vm513 = vcmp.gt.f32.partialorder %v324, 0.0
  %vm514 = vcmp.gt.f32.partialorder %v329, 0.0
  %vm515 = vcmp.gt.f32.partialorder %v332, 0.0
  %vm516 = vcmp.gt.f32.partialorder %v337, 0.0
  %vm517 = vcmp.gt.f32.partialorder %v340, 0.0
  %vm518 = vcmp.gt.f32.partialorder %v345, 0.0
  %vm519 = vcmp.gt.f32.partialorder %v348, 0.0
  %vm520 = vcmp.gt.f32.partialorder %v353, 0.0
  %vm521 = vcmp.gt.f32.partialorder %v356, 0.0
  %vm522 = vcmp.gt.f32.partialorder %v361, 0.0
  %vm523 = vcmp.gt.f32.partialorder %v364, 0.0
  %vm524 = vcmp.gt.f32.partialorder %v369, 0.0
  %vm525 = vcmp.gt.f32.partialorder %v372, 0.0
  %vm526 = vcmp.gt.f32.partialorder %v377, 0.0
  %vm527 = vcmp.gt.f32.partialorder %v380, 0.0
  %vm528 = vcmp.gt.f32.partialorder %v385, 0.0
  %vm529 = vcmp.gt.f32.partialorder %v388, 0.0
  %vm530 = vcmp.gt.f32.partialorder %v393, 0.0
  %vm531 = vcmp.gt.f32.partialorder %v396, 0.0
  %vm532 = vcmp.gt.f32.partialorder %v401, 0.0
  %vm533 = vcmp.gt.f32.partialorder %v404, 0.0
  %vm534 = vcmp.gt.f32.partialorder %v409, 0.0
  %vm535 = vcmp.gt.f32.partialorder %v412, 0.0
  %vm536 = vcmp.gt.f32.partialorder %v417, 0.0
  %vm537 = vcmp.gt.f32.partialorder %v420, 0.0
  %vm538 = vcmp.gt.f32.partialorder %v425, 0.0
  %vm539 = vcmp.gt.f32.partialorder %v428, 0.0
  %vm540 = vcmp.gt.f32.partialorder %v433, 0.0
  %vm541 = vcmp.gt.f32.partialorder %v436, 0.0
  %vm542 = vcmp.gt.f32.partialorder %v441, 0.0
  %vm543 = vcmp.gt.f32.partialorder %v444, 0.0
  %vm544 = vcmp.gt.f32.partialorder %v449, 0.0
  %vm545 = vcmp.gt.f32.partialorder %v452, 0.0
  %vm546 = vcmp.gt.f32.partialorder %v457, 0.0
  %vm547 = vcmp.gt.f32.partialorder %v460, 0.0
  %vm548 = vcmp.gt.f32.partialorder %v465, 0.0
  %vm549 = vcmp.gt.f32.partialorder %v468, 0.0
  %vm550 = vcmp.gt.f32.partialorder %v473, 0.0
  %vm551 = vcmp.gt.f32.partialorder %v476, 0.0
  %vm552 = vcmp.gt.f32.partialorder %v481, 0.0
  %vm553 = vcmp.gt.f32.partialorder %v484, 0.0
  %vm554 = vcmp.gt.f32.partialorder %v489, 0.0
  %vm555 = vcmp.gt.f32.partialorder %v492, 0.0
  %vm556 = vcmp.gt.f32.partialorder %v497, 0.0
  %vm557 = vcmp.gt.f32.partialorder %v500, 0.0
  %vm558 = vcmp.gt.f32.partialorder %v505, 0.0
  %v559 = vmul.f32 %v313, 0.2
  %v560 = vmul.f32 %v316, 0.2
  %v561 = vmul.f32 %v321, 0.2
  %v562 = vmul.f32 %v324, 0.2
  %v563 = vmul.f32 %v329, 0.2
  %v564 = vmul.f32 %v332, 0.2
  %v565 = vmul.f32 %v337, 0.2
  %v566 = vmul.f32 %v340, 0.2
  %v567 = vmul.f32 %v345, 0.2
  %v568 = vmul.f32 %v348, 0.2
  %v569 = vmul.f32 %v353, 0.2
  %v570 = vmul.f32 %v356, 0.2
  %v571 = vmul.f32 %v361, 0.2
  %v572 = vmul.f32 %v364, 0.2
  %v573 = vmul.f32 %v369, 0.2
  %v574 = vmul.f32 %v372, 0.2
  %v575 = vmul.f32 %v377, 0.2
  %v576 = vmul.f32 %v380, 0.2
  %v577 = vmul.f32 %v385, 0.2
  %v578 = vmul.f32 %v388, 0.2
  %v579 = vmul.f32 %v393, 0.2
  %v580 = vmul.f32 %v396, 0.2
  %v581 = vmul.f32 %v401, 0.2
  %v582 = vmul.f32 %v404, 0.2
  %v583 = vmul.f32 %v409, 0.2
  %v584 = vmul.f32 %v412, 0.2
  %v585 = vmul.f32 %v417, 0.2
  %v586 = vmul.f32 %v420, 0.2
  %v587 = vmul.f32 %v425, 0.2
  %v588 = vmul.f32 %v428, 0.2
  %v589 = vmul.f32 %v433, 0.2
  %v590 = vmul.f32 %v436, 0.2
  %v591 = vmul.f32 %v441, 0.2
  %v592 = vmul.f32 %v444, 0.2
  %v593 = vmul.f32 %v449, 0.2
  %v594 = vmul.f32 %v452, 0.2
  %v595 = vmul.f32 %v457, 0.2
  %v596 = vmul.f32 %v460, 0.2
  %v597 = vmul.f32 %v465, 0.2
  %v598 = vmul.f32 %v468, 0.2
  %v599 = vmul.f32 %v473, 0.2
  %v600 = vmul.f32 %v476, 0.2
  %v601 = vmul.f32 %v481, 0.2
  %v602 = vmul.f32 %v484, 0.2
  %v603 = vmul.f32 %v489, 0.2
  %v604 = vmul.f32 %v492, 0.2
  %v605 = vmul.f32 %v497, 0.2
  %v606 = vmul.f32 %v500, 0.2
  %v607 = vmul.f32 %v505, 0.2
  %v608 = vsel %vm510, %v313, %v559
  %v609 = vsel %vm511, %v316, %v560
  %v610 = vsel %vm512, %v321, %v561
  %v611 = vsel %vm513, %v324, %v562
  %v612 = vsel %vm514, %v329, %v563
  %v613 = vsel %vm515, %v332, %v564
  %v614 = vsel %vm516, %v337, %v565
  %v615 = vsel %vm517, %v340, %v566
  %v616 = vsel %vm518, %v345, %v567
  %v617 = vsel %vm519, %v348, %v568
  %v618 = vsel %vm520, %v353, %v569
  %v619 = vsel %vm521, %v356, %v570
  %v620 = vsel %vm522, %v361, %v571
  %v621 = vsel %vm523, %v364, %v572
  %v622 = vsel %vm524, %v369, %v573
  %v623 = vsel %vm525, %v372, %v574
  %v624 = vsel %vm526, %v377, %v575
  %v625 = vsel %vm527, %v380, %v576
  %v626 = vsel %vm528, %v385, %v577
  %v627 = vsel %vm529, %v388, %v578
  %v628 = vsel %vm530, %v393, %v579
  %v629 = vsel %vm531, %v396, %v580
  %v630 = vsel %vm532, %v401, %v581
  %v631 = vsel %vm533, %v404, %v582
  %v632 = vsel %vm534, %v409, %v583
  %v633 = vsel %vm535, %v412, %v584
  %v634 = vsel %vm536, %v417, %v585
  %v635 = vsel %vm537, %v420, %v586
  %v636 = vsel %vm538, %v425, %v587
  %v637 = vsel %vm539, %v428, %v588
  %v638 = vsel %vm540, %v433, %v589
  %v639 = vsel %vm541, %v436, %v590
  %v640 = vsel %vm542, %v441, %v591
  %v641 = vsel %vm543, %v444, %v592
  %v642 = vsel %vm544, %v449, %v593
  %v643 = vsel %vm545, %v452, %v594
  %v644 = vsel %vm546, %v457, %v595
  %v645 = vsel %vm547, %v460, %v596
  %v646 = vsel %vm548, %v465, %v597
  %v647 = vsel %vm549, %v468, %v598
  %v648 = vsel %vm550, %v473, %v599
  %v649 = vsel %vm551, %v476, %v600
  %v650 = vsel %vm552, %v481, %v601
  %v651 = vsel %vm553, %v484, %v602
  %v652 = vsel %vm554, %v489, %v603
  %v653 = vsel %vm555, %v492, %v604
  %v654 = vsel %vm556, %v497, %v605
  %v655 = vsel %vm557, %v500, %v606
  %v656 = vsel %vm558, %v505, %v607
  %657 = vst [vmem:[%s3] sm:$0xff] %v608
  %658 = vst [vmem:[%s3 + $0x8] sm:$0xff] %v609
  %659 = vst [vmem:[%s3 + $0x10] sm:$0xff] %v610
  %660 = vst [vmem:[%s3 + $0x18] sm:$0xff] %v611
  %661 = vst [vmem:[%s3 + $0x20] sm:$0xff] %v612
  %662 = vst [vmem:[%s3 + $0x28] sm:$0xff] %v613
  %663 = vst [vmem:[%s3 + $0x30] sm:$0xff] %v614
  %664 = vst [vmem:[%s3 + $0x38] sm:$0xff] %v615
  %665 = vst [vmem:[%s3 + $0x40] sm:$0xff] %v616
  %666 = vst [vmem:[%s3 + $0x48] sm:$0xff] %v617
  %667 = vst [vmem:[%s3 + $0x50] sm:$0xff] %v618
  %668 = vst [vmem:[%s3 + $0x58] sm:$0xff] %v619
  %669 = vst [vmem:[%s3 + $0x60] sm:$0xff] %v620
  %670 = vst [vmem:[%s3 + $0x68] sm:$0xff] %v621
  %671 = vst [vmem:[%s3 + $0x70] sm:$0xff] %v622
  %672 = vst [vmem:[%s3 + $0x78] sm:$0xff] %v623
  %673 = vst [vmem:[%s3 + $0x80] sm:$0xff] %v624
  %674 = vst [vmem:[%s3 + $0x88] sm:$0xff] %v625
  %675 = vst [vmem:[%s3 + $0x90] sm:$0xff] %v626
  %676 = vst [vmem:[%s3 + $0x98] sm:$0xff] %v627
  %677 = vst [vmem:[%s3 + $0xa0] sm:$0xff] %v628
  %678 = vst [vmem:[%s3 + $0xa8] sm:$0xff] %v629
  %679 = vst [vmem:[%s3 + $0xb0] sm:$0xff] %v630
  %680 = vst [vmem:[%s3 + $0xb8] sm:$0xff] %v631
  %681 = vst [vmem:[%s3 + $0xc0] sm:$0xff] %v632
  %682 = vst [vmem:[%s3 + $0xc8] sm:$0xff] %v633
  %683 = vst [vmem:[%s3 + $0xd0] sm:$0xff] %v634
  %684 = vst [vmem:[%s3 + $0xd8] sm:$0xff] %v635
  %685 = vst [vmem:[%s3 + $0xe0] sm:$0xff] %v636
  %686 = vst [vmem:[%s3 + $0xe8] sm:$0xff] %v637
  %687 = vst [vmem:[%s3 + $0xf0] sm:$0xff] %v638
  %688 = vst [vmem:[%s3 + $0xf8] sm:$0xff] %v639
  %689 = vst [vmem:[%s3 + $0x100] sm:$0xff] %v640
  %690 = vst [vmem:[%s3 + $0x108] sm:$0xff] %v641
  %691 = vst [vmem:[%s3 + $0x110] sm:$0xff] %v642
  %692 = vst [vmem:[%s3 + $0x118] sm:$0xff] %v643
  %693 = vst [vmem:[%s3 + $0x120] sm:$0xff] %v644
  %694 = vst [vmem:[%s3 + $0x128] sm:$0xff] %v645
  %695 = vst [vmem:[%s3 + $0x130] sm:$0xff] %v646
  %696 = vst [vmem:[%s3 + $0x138] sm:$0xff] %v647
  %697 = vst [vmem:[%s3 + $0x140] sm:$0xff] %v648
  %698 = vst [vmem:[%s3 + $0x148] sm:$0xff] %v649
  %699 = vst [vmem:[%s3 + $0x150] sm:$0xff] %v650
  %700 = vst [vmem:[%s3 + $0x158] sm:$0xff] %v651
  %701 = vst [vmem:[%s3 + $0x160] sm:$0xff] %v652
  %702 = vst [vmem:[%s3 + $0x168] sm:$0xff] %v653
  %703 = vst [vmem:[%s3 + $0x170] sm:$0xff] %v654
  %704 = vst [vmem:[%s3 + $0x178] sm:$0xff] %v655
  %705 = vst [vmem:[%s3 + $0x180] sm:$0xff] %v656
  // Predicated region
  $region14: #{discriminator_forward.4} parent=0 // pred_check
    _
  $region15: #{discriminator_forward.4} parent=0 // pred_check_branch
    %707 = sbr.rel (0) target = $region17
  $region16: #{discriminator_forward.4} parent=0 // pred_region
    _
  $region17: #{discriminator_forward.4} parent=0 // pred_fallthru
    _
  // Predicated region
  $region18: #{discriminator_forward.4} parent=0 // pred_check
    _
  $region19: #{discriminator_forward.4} parent=0 // pred_check_branch
    %709 = sbr.rel (0) target = $region21
  $region20: #{discriminator_forward.4} parent=0 // pred_region
    _
  $region21: #{discriminator_forward.4} parent=0 // pred_fallthru
    _

// kernel: discriminator_forward.5
$region0: #{discriminator_forward.5}
  #allocation0 [shape = 'u32[]', space=smem, size = 0x4, offset = 0x4, fixed_abs, tag = 'smem constant byte address 0x4 - core index']
  #allocation1 [shape = 'u32[144,128]{1,0:T(1,128)}', space=vmem, size = 0x12000, scoped, tag = 'internal scratch']
  %s0 = inlined_call_operand.vmem [shape: bf16[104,1024], index: 0, kind: input, shape index: {}]
  %s1 = inlined_call_operand.vmem [shape: bf16[1024,128], index: 1, kind: input, shape index: {}]
  %s2 = inlined_call_operand.hbm [shape: f32[1,128], index: 2, kind: input, shape index: {}]
  %s3 = inlined_call_operand.vmem [shape: f32[104,128], index: 3, kind: output, shape index: {}]
  %s4 = sld [smem:[#allocation0]]
  $region26: #{discriminator_forward.5} parent=0
    _
  %s6 = ssub.s32 1, %s4
  %s7 = scalar_select 0, %s6, %s4
  $region1: #{discriminator_forward.5} parent=0
    #allocation2 [shape = 'u8[512]{0}', space=vmem, size = 0x400, scoped, tag = 'input window, operand 2, single buffered']
    #allocation3 [shape = 's32[1]{0}', space=sflag, size = 0x4, scoped, tag = 'scoped memory for discriminator_forward.5']
    %8 = vsyncpa [#allocation3], 0
    // Predicated region
    $region2: #{discriminator_forward.5} parent=1 // pred_check
      _
    $region3: #{discriminator_forward.5} parent=1 // pred_check_branch
      %10 = sbr.rel (0) target = $region5
    $region4: #{discriminator_forward.5} parent=1 // pred_region
      _
    $region5: #{discriminator_forward.5} parent=1 // pred_fallthru
      _
    // Predicated region
    $region6: #{discriminator_forward.5} parent=1 // pred_check
      _
    $region7: #{discriminator_forward.5} parent=1 // pred_check_branch
      %12 = sbr.rel (0) target = $region9
    $region8: #{discriminator_forward.5} parent=1 // pred_region
      _
    $region9: #{discriminator_forward.5} parent=1 // pred_fallthru
      _
    // Predicated region
    $region10: #{discriminator_forward.5} parent=1 // pred_check
      _
    $region11: #{discriminator_forward.5} parent=1 // pred_check_branch
      %14 = sbr.rel (0) target = $region13
    $region12: #{discriminator_forward.5} parent=1 // pred_region
      %s16 = ssub.s32 16, 16
      %17 = vsyncadd [#allocation3], %s16
      %s19 = sshll.u32 [#allocation2], 4
      %s20 = int_to_ptr.vmem [resolvable:$true] %s19
      %22 = dma.hbm_to_vmem [thread:$0]  %s2, 16, %s20, [#allocation3]
    $region13: #{discriminator_forward.5} parent=1 // pred_fallthru
      _
    // Predicated region
    $region14: #{discriminator_forward.5} parent=1 // pred_check
      _
    $region15: #{discriminator_forward.5} parent=1 // pred_check_branch
      %24 = sbr.rel (0) target = $region17
    $region16: #{discriminator_forward.5} parent=1 // pred_region
      %25 = dma.done [#allocation3], 16
    $region17: #{discriminator_forward.5} parent=1 // pred_fallthru
      _
    %v27 = vld [vmem:[%s0] sm:$0xff]
    %v28 = vld [vmem:[%s0 + $0x8] sm:$0xff]
    %v29 = vld [vmem:[%s0 + $0x10] sm:$0xff]
    %v30 = vld [vmem:[%s0 + $0x18] sm:$0xff]
    %v31 = vld [vmem:[%s0 + $0x20] sm:$0xff]
    %v32 = vld [vmem:[%s0 + $0x28] sm:$0xff]
    %v33 = vld [vmem:[%s0 + $0x30] sm:$0xff]
    %v34 = vld [vmem:[%s0 + $0x38] sm:$0xff]
    %v35 = vld [vmem:[%s0 + $0x40] sm:$0xff]
    %v36 = vld [vmem:[%s0 + $0x48] sm:$0xff]
    %v37 = vld [vmem:[%s0 + $0x50] sm:$0xff]
    %v38 = vld [vmem:[%s0 + $0x58] sm:$0xff]
    %v39 = vld [vmem:[%s0 + $0x60] sm:$0xff]
    %v40 = vld [vmem:[%s0 + $0x68] sm:$0xff]
    %v41 = vld [vmem:[%s0 + $0x70] sm:$0xff]
    %v42 = vld [vmem:[%s0 + $0x78] sm:$0xff]
    %v43 = vld [vmem:[%s0 + $0x80] sm:$0xff]
    %v44 = vld [vmem:[%s0 + $0x88] sm:$0xff]
    %v45 = vld [vmem:[%s0 + $0x90] sm:$0xff]
    %v46 = vld [vmem:[%s0 + $0x98] sm:$0xff]
    %v47 = vld [vmem:[%s0 + $0xa0] sm:$0xff]
    %v48 = vld [vmem:[%s0 + $0xa8] sm:$0xff]
    %v49 = vld [vmem:[%s0 + $0xb0] sm:$0xff]
    %v50 = vld [vmem:[%s0 + $0xb8] sm:$0xff]
    %v51 = vld [vmem:[%s0 + $0xc0] sm:$0xff]
    %v52 = vld [vmem:[%s0 + $0xc8] sm:$0xff]
    %v53 = vld [vmem:[%s0 + $0xd0] sm:$0xff]
    %v54 = vld [vmem:[%s0 + $0xd8] sm:$0xff]
    %v55 = vld [vmem:[%s0 + $0xe0] sm:$0xff]
    %v56 = vld [vmem:[%s0 + $0xe8] sm:$0xff]
    %v57 = vld [vmem:[%s0 + $0xf0] sm:$0xff]
    %v58 = vld [vmem:[%s0 + $0xf8] sm:$0xff]
    %v59 = vld [vmem:[%s0 + $0x100] sm:$0xff]
    %v60 = vld [vmem:[%s0 + $0x108] sm:$0xff]
    %v61 = vld [vmem:[%s0 + $0x110] sm:$0xff]
    %v62 = vld [vmem:[%s0 + $0x118] sm:$0xff]
    %v63 = vld [vmem:[%s0 + $0x120] sm:$0xff]
    %v64 = vld [vmem:[%s0 + $0x128] sm:$0xff]
    %v65 = vld [vmem:[%s0 + $0x130] sm:$0xff]
    %v66 = vld [vmem:[%s0 + $0x138] sm:$0xff]
    %v67 = vld [vmem:[%s0 + $0x140] sm:$0xff]
    %v68 = vld [vmem:[%s0 + $0x148] sm:$0xff]
    %v69 = vld [vmem:[%s0 + $0x150] sm:$0xff]
    %v70 = vld [vmem:[%s0 + $0x158] sm:$0xff]
    %v71 = vld [vmem:[%s0 + $0x160] sm:$0xff]
    %v72 = vld [vmem:[%s0 + $0x168] sm:$0xff]
    %v73 = vld [vmem:[%s0 + $0x170] sm:$0xff]
    %v74 = vld [vmem:[%s0 + $0x178] sm:$0xff]
    %v75 = vld [vmem:[%s0 + $0x180] sm:$0xff]
    %v76 = vld [vmem:[%s0 + $0x188] sm:$0xff]
    %v77 = vld [vmem:[%s0 + $0x190] sm:$0xff]
    %v78 = vld [vmem:[%s0 + $0x198] sm:$0xff]
    %v79 = vld [vmem:[%s1] sm:$0xf]
    %v80 = vld [vmem:[%s1 + $0x4] sm:$0xf]
    %v81 = vld [vmem:[%s1 + $0x8] sm:$0xf]
    %v82 = vld [vmem:[%s1 + $0xc] sm:$0xf]
    %v83 = vld [vmem:[%s1 + $0x10] sm:$0xf]
    %v84 = vld [vmem:[%s1 + $0x14] sm:$0xf]
    %v85 = vld [vmem:[%s1 + $0x18] sm:$0xf]
    %v86 = vld [vmem:[%s1 + $0x1c] sm:$0xf]
    %v87 = vld [vmem:[%s1 + $0x20] sm:$0xf]
    %v88 = vld [vmem:[%s1 + $0x24] sm:$0xf]
    %v89 = vld [vmem:[%s1 + $0x28] sm:$0xf]
    %v90 = vld [vmem:[%s1 + $0x2c] sm:$0xf]
    %v91 = vld [vmem:[%s1 + $0x30] sm:$0xf]
    %v92 = vld [vmem:[%s1 + $0x34] sm:$0xf]
    %v93 = vld [vmem:[%s1 + $0x38] sm:$0xf]
    %v94 = vld [vmem:[%s1 + $0x3c] sm:$0xf]
    %v95 = vld [vmem:[%s1 + $0x40] sm:$0xf]
    %v96 = vld [vmem:[%s1 + $0x44] sm:$0xf]
    %v97 = vld [vmem:[%s1 + $0x48] sm:$0xf]
    %v98 = vld [vmem:[%s1 + $0x4c] sm:$0xf]
    %v99 = vld [vmem:[%s1 + $0x50] sm:$0xf]
    %v100 = vld [vmem:[%s1 + $0x54] sm:$0xf]
    %v101 = vld [vmem:[%s1 + $0x58] sm:$0xf]
    %v102 = vld [vmem:[%s1 + $0x5c] sm:$0xf]
    %v103 = vld [vmem:[%s1 + $0x60] sm:$0xf]
    %v104 = vld [vmem:[%s1 + $0x64] sm:$0xf]
    %v105 = vld [vmem:[%s1 + $0x68] sm:$0xf]
    %v106 = vld [vmem:[%s1 + $0x6c] sm:$0xf]
    %v107 = vld [vmem:[%s1 + $0x70] sm:$0xf]
    %v108 = vld [vmem:[%s1 + $0x74] sm:$0xf]
    %v109 = vld [vmem:[%s1 + $0x78] sm:$0xf]
    %v110 = vld [vmem:[%s1 + $0x7c] sm:$0xf]
    %v111 = vld [vmem:[%s1 + $0x80] sm:$0xf]
    %v112 = vld [vmem:[%s1 + $0x84] sm:$0xf]
    %v113 = vld [vmem:[%s1 + $0x88] sm:$0xf]
    %v114 = vld [vmem:[%s1 + $0x8c] sm:$0xf]
    %v115 = vld [vmem:[%s1 + $0x90] sm:$0xf]
    %v116 = vld [vmem:[%s1 + $0x94] sm:$0xf]
    %v117 = vld [vmem:[%s1 + $0x98] sm:$0xf]
    %v118 = vld [vmem:[%s1 + $0x9c] sm:$0xf]
    %v119 = vld [vmem:[%s1 + $0xa0] sm:$0xf]
    %v120 = vld [vmem:[%s1 + $0xa4] sm:$0xf]
    %v121 = vld [vmem:[%s1 + $0xa8] sm:$0xf]
    %v122 = vld [vmem:[%s1 + $0xac] sm:$0xf]
    %v123 = vld [vmem:[%s1 + $0xb0] sm:$0xf]
    %v124 = vld [vmem:[%s1 + $0xb4] sm:$0xf]
    %v125 = vld [vmem:[%s1 + $0xb8] sm:$0xf]
    %v126 = vld [vmem:[%s1 + $0xbc] sm:$0xf]
    %v127 = vld [vmem:[%s1 + $0xc0] sm:$0xf]
    %v128 = vld [vmem:[%s1 + $0xc4] sm:$0xf]
    %v129 = vld [vmem:[%s1 + $0xc8] sm:$0xf]
    %v130 = vld [vmem:[%s1 + $0xcc] sm:$0xf]
    %v131 = vld [vmem:[%s1 + $0xd0] sm:$0xf]
    %v132 = vld [vmem:[%s1 + $0xd4] sm:$0xf]
    %v133 = vld [vmem:[%s1 + $0xd8] sm:$0xf]
    %v134 = vld [vmem:[%s1 + $0xdc] sm:$0xf]
    %v135 = vld [vmem:[%s1 + $0xe0] sm:$0xf]
    %v136 = vld [vmem:[%s1 + $0xe4] sm:$0xf]
    %v137 = vld [vmem:[%s1 + $0xe8] sm:$0xf]
    %v138 = vld [vmem:[%s1 + $0xec] sm:$0xf]
    %v139 = vld [vmem:[%s1 + $0xf0] sm:$0xf]
    %v140 = vld [vmem:[%s1 + $0xf4] sm:$0xf]
    %v141 = vld [vmem:[%s1 + $0xf8] sm:$0xf]
    %v142 = vld [vmem:[%s1 + $0xfc] sm:$0xf]
    %v143 = vld [vmem:[%s1 + $0x100] sm:$0xf]
    %v144 = vld [vmem:[%s1 + $0x104] sm:$0xf]
    %v145 = vld [vmem:[%s1 + $0x108] sm:$0xf]
    %v146 = vld [vmem:[%s1 + $0x10c] sm:$0xf]
    %v147 = vld [vmem:[%s1 + $0x110] sm:$0xf]
    %v148 = vld [vmem:[%s1 + $0x114] sm:$0xf]
    %v149 = vld [vmem:[%s1 + $0x118] sm:$0xf]
    %v150 = vld [vmem:[%s1 + $0x11c] sm:$0xf]
    %v151 = vld [vmem:[%s1 + $0x120] sm:$0xf]
    %v152 = vld [vmem:[%s1 + $0x124] sm:$0xf]
    %v153 = vld [vmem:[%s1 + $0x128] sm:$0xf]
    %v154 = vld [vmem:[%s1 + $0x12c] sm:$0xf]
    %v155 = vld [vmem:[%s1 + $0x130] sm:$0xf]
    %v156 = vld [vmem:[%s1 + $0x134] sm:$0xf]
    %v157 = vld [vmem:[%s1 + $0x138] sm:$0xf]
    %v158 = vld [vmem:[%s1 + $0x13c] sm:$0xf]
    %v159 = vld [vmem:[%s1 + $0x140] sm:$0xf]
    %v160 = vld [vmem:[%s1 + $0x144] sm:$0xf]
    %v161 = vld [vmem:[%s1 + $0x148] sm:$0xf]
    %v162 = vld [vmem:[%s1 + $0x14c] sm:$0xf]
    %v163 = vld [vmem:[%s1 + $0x150] sm:$0xf]
    %v164 = vld [vmem:[%s1 + $0x154] sm:$0xf]
    %v165 = vld [vmem:[%s1 + $0x158] sm:$0xf]
    %v166 = vld [vmem:[%s1 + $0x15c] sm:$0xf]
    %v167 = vld [vmem:[%s1 + $0x160] sm:$0xf]
    %v168 = vld [vmem:[%s1 + $0x164] sm:$0xf]
    %v169 = vld [vmem:[%s1 + $0x168] sm:$0xf]
    %v170 = vld [vmem:[%s1 + $0x16c] sm:$0xf]
    %v171 = vld [vmem:[%s1 + $0x170] sm:$0xf]
    %v172 = vld [vmem:[%s1 + $0x174] sm:$0xf]
    %v173 = vld [vmem:[%s1 + $0x178] sm:$0xf]
    %v174 = vld [vmem:[%s1 + $0x17c] sm:$0xf]
    %v175 = vld [vmem:[%s1 + $0x180] sm:$0xf]
    %v176 = vld [vmem:[%s1 + $0x184] sm:$0xf]
    %v177 = vld [vmem:[%s1 + $0x188] sm:$0xf]
    %v178 = vld [vmem:[%s1 + $0x18c] sm:$0xf]
    %v179 = vld [vmem:[%s1 + $0x190] sm:$0xf]
    %v180 = vld [vmem:[%s1 + $0x194] sm:$0xf]
    %v181 = vld [vmem:[%s1 + $0x198] sm:$0xf]
    %v182 = vld [vmem:[%s1 + $0x19c] sm:$0xf]
    %v183 = vld [vmem:[%s1 + $0x1a0] sm:$0xf]
    %v184 = vld [vmem:[%s1 + $0x1a4] sm:$0xf]
    %v185 = vld [vmem:[%s1 + $0x1a8] sm:$0xf]
    %v186 = vld [vmem:[%s1 + $0x1ac] sm:$0xf]
    %v187 = vld [vmem:[%s1 + $0x1b0] sm:$0xf]
    %v188 = vld [vmem:[%s1 + $0x1b4] sm:$0xf]
    %v189 = vld [vmem:[%s1 + $0x1b8] sm:$0xf]
    %v190 = vld [vmem:[%s1 + $0x1bc] sm:$0xf]
    %v191 = vld [vmem:[%s1 + $0x1c0] sm:$0xf]
    %v192 = vld [vmem:[%s1 + $0x1c4] sm:$0xf]
    %v193 = vld [vmem:[%s1 + $0x1c8] sm:$0xf]
    %v194 = vld [vmem:[%s1 + $0x1cc] sm:$0xf]
    %v195 = vld [vmem:[%s1 + $0x1d0] sm:$0xf]
    %v196 = vld [vmem:[%s1 + $0x1d4] sm:$0xf]
    %v197 = vld [vmem:[%s1 + $0x1d8] sm:$0xf]
    %v198 = vld [vmem:[%s1 + $0x1dc] sm:$0xf]
    %v199 = vld [vmem:[%s1 + $0x1e0] sm:$0xf]
    %v200 = vld [vmem:[%s1 + $0x1e4] sm:$0xf]
    %v201 = vld [vmem:[%s1 + $0x1e8] sm:$0xf]
    %v202 = vld [vmem:[%s1 + $0x1ec] sm:$0xf]
    %v203 = vld [vmem:[%s1 + $0x1f0] sm:$0xf]
    %v204 = vld [vmem:[%s1 + $0x1f4] sm:$0xf]
    %v205 = vld [vmem:[%s1 + $0x1f8] sm:$0xf]
    %v206 = vld [vmem:[%s1 + $0x1fc] sm:$0xf]
    %v207 = vld [vmem:[#allocation2] sm:$0x1]
    %v209 = vlaneseq
    %v210 = vshrl.u32 %v209, 7
    %v211 = vsub.s32 0, %v210
    %v212 = vrot.slane %v207, %v211
    %v266 = vunpack.c.l.b16 %v27
    %v267 = vunpack.c.h.b16 %v27
    %v268 = vunpack.c.l.b16 %v28
    %v269 = vunpack.c.h.b16 %v28
    %v270 = vunpack.c.l.b16 %v29
    %v271 = vunpack.c.h.b16 %v29
    %v272 = vunpack.c.l.b16 %v30
    %v273 = vunpack.c.h.b16 %v30
    %v274 = vunpack.c.l.b16 %v31
    %v275 = vunpack.c.h.b16 %v31
    %v276 = vunpack.c.l.b16 %v32
    %v277 = vunpack.c.h.b16 %v32
    %v278 = vunpack.c.l.b16 %v33
    %v279 = vunpack.c.h.b16 %v33
    %v280 = vunpack.c.l.b16 %v34
    %v281 = vunpack.c.h.b16 %v34
    %v282 = vunpack.c.l.b16 %v35
    %v283 = vunpack.c.h.b16 %v35
    %v284 = vunpack.c.l.b16 %v36
    %v285 = vunpack.c.h.b16 %v36
    %v286 = vunpack.c.l.b16 %v37
    %v287 = vunpack.c.h.b16 %v37
    %v288 = vunpack.c.l.b16 %v38
    %v289 = vunpack.c.h.b16 %v38
    %v290 = vunpack.c.l.b16 %v39
    %v291 = vunpack.c.h.b16 %v39
    %v292 = vunpack.c.l.b16 %v40
    %v293 = vunpack.c.h.b16 %v40
    %v294 = vunpack.c.l.b16 %v41
    %v295 = vunpack.c.h.b16 %v41
    %v296 = vunpack.c.l.b16 %v42
    %v297 = vunpack.c.h.b16 %v42
    %v298 = vunpack.c.l.b16 %v43
    %v299 = vunpack.c.h.b16 %v43
    %v300 = vunpack.c.l.b16 %v44
    %v301 = vunpack.c.h.b16 %v44
    %v302 = vunpack.c.l.b16 %v45
    %v303 = vunpack.c.h.b16 %v45
    %v304 = vunpack.c.l.b16 %v46
    %v305 = vunpack.c.h.b16 %v46
    %v306 = vunpack.c.l.b16 %v47
    %v307 = vunpack.c.h.b16 %v47
    %v308 = vunpack.c.l.b16 %v48
    %v309 = vunpack.c.h.b16 %v48
    %v310 = vunpack.c.l.b16 %v49
    %v311 = vunpack.c.h.b16 %v49
    %v312 = vunpack.c.l.b16 %v50
    %v313 = vunpack.c.h.b16 %v50
    %v314 = vunpack.c.l.b16 %v51
    %v315 = vunpack.c.h.b16 %v51
    %v316 = vunpack.c.l.b16 %v52
    %v317 = vunpack.c.h.b16 %v52
    %v318 = vunpack.c.l.b16 %v53
    %v319 = vunpack.c.h.b16 %v53
    %v320 = vunpack.c.l.b16 %v54
    %v321 = vunpack.c.h.b16 %v54
    %v322 = vunpack.c.l.b16 %v55
    %v323 = vunpack.c.h.b16 %v55
    %v324 = vunpack.c.l.b16 %v56
    %v325 = vunpack.c.h.b16 %v56
    %v326 = vunpack.c.l.b16 %v57
    %v327 = vunpack.c.h.b16 %v57
    %v328 = vunpack.c.l.b16 %v58
    %v329 = vunpack.c.h.b16 %v58
    %v330 = vunpack.c.l.b16 %v59
    %v331 = vunpack.c.h.b16 %v59
    %v332 = vunpack.c.l.b16 %v60
    %v333 = vunpack.c.h.b16 %v60
    %v334 = vunpack.c.l.b16 %v61
    %v335 = vunpack.c.h.b16 %v61
    %v336 = vunpack.c.l.b16 %v62
    %v337 = vunpack.c.h.b16 %v62
    %v338 = vunpack.c.l.b16 %v63
    %v339 = vunpack.c.h.b16 %v63
    %v340 = vunpack.c.l.b16 %v64
    %v341 = vunpack.c.h.b16 %v64
    %v342 = vunpack.c.l.b16 %v65
    %v343 = vunpack.c.h.b16 %v65
    %v344 = vunpack.c.l.b16 %v66
    %v345 = vunpack.c.h.b16 %v66
    %v346 = vunpack.c.l.b16 %v67
    %v347 = vunpack.c.h.b16 %v67
    %v348 = vunpack.c.l.b16 %v68
    %v349 = vunpack.c.h.b16 %v68
    %v350 = vunpack.c.l.b16 %v69
    %v351 = vunpack.c.h.b16 %v69
    %v352 = vunpack.c.l.b16 %v70
    %v353 = vunpack.c.h.b16 %v70
    %v354 = vunpack.c.l.b16 %v71
    %v355 = vunpack.c.h.b16 %v71
    %v356 = vunpack.c.l.b16 %v72
    %v357 = vunpack.c.h.b16 %v72
    %v358 = vunpack.c.l.b16 %v73
    %v359 = vunpack.c.h.b16 %v73
    %v360 = vunpack.c.l.b16 %v74
    %v361 = vunpack.c.h.b16 %v74
    %v362 = vunpack.c.l.b16 %v75
    %v363 = vunpack.c.h.b16 %v75
    %v364 = vunpack.c.l.b16 %v76
    %v365 = vunpack.c.h.b16 %v76
    %v366 = vunpack.c.l.b16 %v77
    %v367 = vunpack.c.h.b16 %v77
    %v368 = vunpack.c.l.b16 %v78
    %v369 = vunpack.c.h.b16 %v78
    %v370 = vpack.c.b16 %v274, %v266
    %v371 = vpack.c.b16 %v275, %v267
    %v372 = vpack.c.b16 %v276, %v268
    %v373 = vpack.c.b16 %v277, %v269
    %v374 = vpack.c.b16 %v278, %v270
    %v375 = vpack.c.b16 %v279, %v271
    %v376 = vpack.c.b16 %v280, %v272
    %v377 = vpack.c.b16 %v281, %v273
    %v378 = vpack.c.b16 %v290, %v282
    %v379 = vpack.c.b16 %v291, %v283
    %v380 = vpack.c.b16 %v292, %v284
    %v381 = vpack.c.b16 %v293, %v285
    %v382 = vpack.c.b16 %v294, %v286
    %v383 = vpack.c.b16 %v295, %v287
    %v384 = vpack.c.b16 %v296, %v288
    %v385 = vpack.c.b16 %v297, %v289
    %v386 = vpack.c.b16 %v306, %v298
    %v387 = vpack.c.b16 %v307, %v299
    %v388 = vpack.c.b16 %v308, %v300
    %v389 = vpack.c.b16 %v309, %v301
    %v390 = vpack.c.b16 %v310, %v302
    %v391 = vpack.c.b16 %v311, %v303
    %v392 = vpack.c.b16 %v312, %v304
    %v393 = vpack.c.b16 %v313, %v305
    %v394 = vpack.c.b16 %v322, %v314
    %v395 = vpack.c.b16 %v323, %v315
    %v396 = vpack.c.b16 %v324, %v316
    %v397 = vpack.c.b16 %v325, %v317
    %v398 = vpack.c.b16 %v326, %v318
    %v399 = vpack.c.b16 %v327, %v319
    %v400 = vpack.c.b16 %v328, %v320
    %v401 = vpack.c.b16 %v329, %v321
    %v402 = vpack.c.b16 %v338, %v330
    %v403 = vpack.c.b16 %v339, %v331
    %v404 = vpack.c.b16 %v340, %v332
    %v405 = vpack.c.b16 %v341, %v333
    %v406 = vpack.c.b16 %v342, %v334
    %v407 = vpack.c.b16 %v343, %v335
    %v408 = vpack.c.b16 %v344, %v336
    %v409 = vpack.c.b16 %v345, %v337
    %v410 = vpack.c.b16 %v354, %v346
    %v411 = vpack.c.b16 %v355, %v347
    %v412 = vpack.c.b16 %v356, %v348
    %v413 = vpack.c.b16 %v357, %v349
    %v414 = vpack.c.b16 %v358, %v350
    %v415 = vpack.c.b16 %v359, %v351
    %v416 = vpack.c.b16 %v360, %v352
    %v417 = vpack.c.b16 %v361, %v353
    %v418 = vpack.c.b16 %v362, %v362
    %v419 = vpack.c.b16 %v363, %v363
    %v420 = vpack.c.b16 %v364, %v364
    %v421 = vpack.c.b16 %v365, %v365
    %v422 = vpack.c.b16 %v366, %v366
    %v423 = vpack.c.b16 %v367, %v367
    %v424 = vpack.c.b16 %v368, %v368
    %v425 = vpack.c.b16 %v369, %v369
    %v610 = vunpack.c.l.b16 %v79
    %v611 = vunpack.c.l.b16 %v80
    %v612 = vunpack.c.l.b16 %v81
    %v613 = vunpack.c.l.b16 %v82
    %v614 = vunpack.c.l.b16 %v83
    %v615 = vunpack.c.l.b16 %v84
    %v616 = vunpack.c.l.b16 %v85
    %v617 = vunpack.c.l.b16 %v86
    %v618 = vunpack.c.l.b16 %v87
    %v619 = vunpack.c.l.b16 %v88
    %v620 = vunpack.c.l.b16 %v89
    %v621 = vunpack.c.l.b16 %v90
    %v622 = vunpack.c.l.b16 %v91
    %v623 = vunpack.c.l.b16 %v92
    %v624 = vunpack.c.l.b16 %v93
    %v625 = vunpack.c.l.b16 %v94
    %v626 = vunpack.c.l.b16 %v95
    %v627 = vunpack.c.l.b16 %v96
    %v628 = vunpack.c.l.b16 %v97
    %v629 = vunpack.c.l.b16 %v98
    %v630 = vunpack.c.l.b16 %v99
    %v631 = vunpack.c.l.b16 %v100
    %v632 = vunpack.c.l.b16 %v101
    %v633 = vunpack.c.l.b16 %v102
    %v634 = vunpack.c.l.b16 %v103
    %v635 = vunpack.c.l.b16 %v104
    %v636 = vunpack.c.l.b16 %v105
    %v637 = vunpack.c.l.b16 %v106
    %v638 = vunpack.c.l.b16 %v107
    %v639 = vunpack.c.l.b16 %v108
    %v640 = vunpack.c.l.b16 %v109
    %v641 = vunpack.c.l.b16 %v110
    %v642 = vunpack.c.l.b16 %v111
    %v643 = vunpack.c.l.b16 %v112
    %v644 = vunpack.c.l.b16 %v113
    %v645 = vunpack.c.l.b16 %v114
    %v646 = vunpack.c.l.b16 %v115
    %v647 = vunpack.c.l.b16 %v116
    %v648 = vunpack.c.l.b16 %v117
    %v649 = vunpack.c.l.b16 %v118
    %v650 = vunpack.c.l.b16 %v119
    %v651 = vunpack.c.l.b16 %v120
    %v652 = vunpack.c.l.b16 %v121
    %v653 = vunpack.c.l.b16 %v122
    %v654 = vunpack.c.l.b16 %v123
    %v655 = vunpack.c.l.b16 %v124
    %v656 = vunpack.c.l.b16 %v125
    %v657 = vunpack.c.l.b16 %v126
    %v658 = vunpack.c.l.b16 %v127
    %v659 = vunpack.c.l.b16 %v128
    %v660 = vunpack.c.l.b16 %v129
    %v661 = vunpack.c.l.b16 %v130
    %v662 = vunpack.c.l.b16 %v131
    %v663 = vunpack.c.l.b16 %v132
    %v664 = vunpack.c.l.b16 %v133
    %v665 = vunpack.c.l.b16 %v134
    %v666 = vunpack.c.l.b16 %v135
    %v667 = vunpack.c.l.b16 %v136
    %v668 = vunpack.c.l.b16 %v137
    %v669 = vunpack.c.l.b16 %v138
    %v670 = vunpack.c.l.b16 %v139
    %v671 = vunpack.c.l.b16 %v140
    %v672 = vunpack.c.l.b16 %v141
    %v673 = vunpack.c.l.b16 %v142
    %v674 = vunpack.c.l.b16 %v143
    %v675 = vunpack.c.l.b16 %v144
    %v676 = vunpack.c.l.b16 %v145
    %v677 = vunpack.c.l.b16 %v146
    %v678 = vunpack.c.l.b16 %v147
    %v679 = vunpack.c.l.b16 %v148
    %v680 = vunpack.c.l.b16 %v149
    %v681 = vunpack.c.l.b16 %v150
    %v682 = vunpack.c.l.b16 %v151
    %v683 = vunpack.c.l.b16 %v152
    %v684 = vunpack.c.l.b16 %v153
    %v685 = vunpack.c.l.b16 %v154
    %v686 = vunpack.c.l.b16 %v155
    %v687 = vunpack.c.l.b16 %v156
    %v688 = vunpack.c.l.b16 %v157
    %v689 = vunpack.c.l.b16 %v158
    %v690 = vunpack.c.l.b16 %v159
    %v691 = vunpack.c.l.b16 %v160
    %v692 = vunpack.c.l.b16 %v161
    %v693 = vunpack.c.l.b16 %v162
    %v694 = vunpack.c.l.b16 %v163
    %v695 = vunpack.c.l.b16 %v164
    %v696 = vunpack.c.l.b16 %v165
    %v697 = vunpack.c.l.b16 %v166
    %v698 = vunpack.c.l.b16 %v167
    %v699 = vunpack.c.l.b16 %v168
    %v700 = vunpack.c.l.b16 %v169
    %v701 = vunpack.c.l.b16 %v170
    %v702 = vunpack.c.l.b16 %v171
    %v703 = vunpack.c.l.b16 %v172
    %v704 = vunpack.c.l.b16 %v173
    %v705 = vunpack.c.l.b16 %v174
    %v706 = vunpack.c.l.b16 %v175
    %v707 = vunpack.c.l.b16 %v176
    %v708 = vunpack.c.l.b16 %v177
    %v709 = vunpack.c.l.b16 %v178
    %v710 = vunpack.c.l.b16 %v179
    %v711 = vunpack.c.l.b16 %v180
    %v712 = vunpack.c.l.b16 %v181
    %v713 = vunpack.c.l.b16 %v182
    %v714 = vunpack.c.l.b16 %v183
    %v715 = vunpack.c.l.b16 %v184
    %v716 = vunpack.c.l.b16 %v185
    %v717 = vunpack.c.l.b16 %v186
    %v718 = vunpack.c.l.b16 %v187
    %v719 = vunpack.c.l.b16 %v188
    %v720 = vunpack.c.l.b16 %v189
    %v721 = vunpack.c.l.b16 %v190
    %v722 = vunpack.c.l.b16 %v191
    %v723 = vunpack.c.l.b16 %v192
    %v724 = vunpack.c.l.b16 %v193
    %v725 = vunpack.c.l.b16 %v194
    %v726 = vunpack.c.l.b16 %v195
    %v727 = vunpack.c.l.b16 %v196
    %v728 = vunpack.c.l.b16 %v197
    %v729 = vunpack.c.l.b16 %v198
    %v730 = vunpack.c.l.b16 %v199
    %v731 = vunpack.c.l.b16 %v200
    %v732 = vunpack.c.l.b16 %v201
    %v733 = vunpack.c.l.b16 %v202
    %v734 = vunpack.c.l.b16 %v203
    %v735 = vunpack.c.l.b16 %v204
    %v736 = vunpack.c.l.b16 %v205
    %v737 = vunpack.c.l.b16 %v206
    %v738 = vpack.c.b16 %v611, %v610
    %v739 = vpack.c.b16 %v613, %v612
    %v740 = vpack.c.b16 %v615, %v614
    %v741 = vpack.c.b16 %v617, %v616
    %v742 = vpack.c.b16 %v619, %v618
    %v743 = vpack.c.b16 %v621, %v620
    %v744 = vpack.c.b16 %v623, %v622
    %v745 = vpack.c.b16 %v625, %v624
    %v746 = vpack.c.b16 %v627, %v626
    %v747 = vpack.c.b16 %v629, %v628
    %v748 = vpack.c.b16 %v631, %v630
    %v749 = vpack.c.b16 %v633, %v632
    %v750 = vpack.c.b16 %v635, %v634
    %v751 = vpack.c.b16 %v637, %v636
    %v752 = vpack.c.b16 %v639, %v638
    %v753 = vpack.c.b16 %v641, %v640
    %v754 = vpack.c.b16 %v643, %v642
    %v755 = vpack.c.b16 %v645, %v644
    %v756 = vpack.c.b16 %v647, %v646
    %v757 = vpack.c.b16 %v649, %v648
    %v758 = vpack.c.b16 %v651, %v650
    %v759 = vpack.c.b16 %v653, %v652
    %v760 = vpack.c.b16 %v655, %v654
    %v761 = vpack.c.b16 %v657, %v656
    %v762 = vpack.c.b16 %v659, %v658
    %v763 = vpack.c.b16 %v661, %v660
    %v764 = vpack.c.b16 %v663, %v662
    %v765 = vpack.c.b16 %v665, %v664
    %v766 = vpack.c.b16 %v667, %v666
    %v767 = vpack.c.b16 %v669, %v668
    %v768 = vpack.c.b16 %v671, %v670
    %v769 = vpack.c.b16 %v673, %v672
    %v770 = vpack.c.b16 %v675, %v674
    %v771 = vpack.c.b16 %v677, %v676
    %v772 = vpack.c.b16 %v679, %v678
    %v773 = vpack.c.b16 %v681, %v680
    %v774 = vpack.c.b16 %v683, %v682
    %v775 = vpack.c.b16 %v685, %v684
    %v776 = vpack.c.b16 %v687, %v686
    %v777 = vpack.c.b16 %v689, %v688
    %v778 = vpack.c.b16 %v691, %v690
    %v779 = vpack.c.b16 %v693, %v692
    %v780 = vpack.c.b16 %v695, %v694
    %v781 = vpack.c.b16 %v697, %v696
    %v782 = vpack.c.b16 %v699, %v698
    %v783 = vpack.c.b16 %v701, %v700
    %v784 = vpack.c.b16 %v703, %v702
    %v785 = vpack.c.b16 %v705, %v704
    %v786 = vpack.c.b16 %v707, %v706
    %v787 = vpack.c.b16 %v709, %v708
    %v788 = vpack.c.b16 %v711, %v710
    %v789 = vpack.c.b16 %v713, %v712
    %v790 = vpack.c.b16 %v715, %v714
    %v791 = vpack.c.b16 %v717, %v716
    %v792 = vpack.c.b16 %v719, %v718
    %v793 = vpack.c.b16 %v721, %v720
    %v794 = vpack.c.b16 %v723, %v722
    %v795 = vpack.c.b16 %v725, %v724
    %v796 = vpack.c.b16 %v727, %v726
    %v797 = vpack.c.b16 %v729, %v728
    %v798 = vpack.c.b16 %v731, %v730
    %v799 = vpack.c.b16 %v733, %v732
    %v800 = vpack.c.b16 %v735, %v734
    %v801 = vpack.c.b16 %v737, %v736
    %866 = vmatprep.subr.bf16.mxu0 0
    %867 = vmatpush1.bf16.msra.mxu0 %v738
    %868 = vmatprep.subr.bf16.mxu0 0
    %869 = vmatpush1.bf16.msra.mxu0 %v739
    %870 = vmatprep.subr.bf16.mxu0 0
    %871 = vmatpush1.bf16.msra.mxu0 %v740
    %872 = vmatprep.subr.bf16.mxu0 0
    %873 = vmatpush1.bf16.msra.mxu0 %v741
    %874 = vmatprep.subr.bf16.mxu0 0
    %875 = vmatpush1.bf16.msra.mxu0 %v742
    %876 = vmatprep.subr.bf16.mxu0 0
    %877 = vmatpush1.bf16.msra.mxu0 %v743
    %878 = vmatprep.subr.bf16.mxu0 0
    %879 = vmatpush1.bf16.msra.mxu0 %v744
    %880 = vmatprep.subr.bf16.mxu0 0
    %881 = vmatpush1.bf16.msra.mxu0 %v745
    %882 = vmatprep.subr.bf16.mxu0 0
    %883 = vmatpush1.bf16.msra.mxu0 %v746
    %884 = vmatprep.subr.bf16.mxu0 0
    %885 = vmatpush1.bf16.msra.mxu0 %v747
    %886 = vmatprep.subr.bf16.mxu0 0
    %887 = vmatpush1.bf16.msra.mxu0 %v748
    %888 = vmatprep.subr.bf16.mxu0 0
    %889 = vmatpush1.bf16.msra.mxu0 %v749
    %890 = vmatprep.subr.bf16.mxu0 0
    %891 = vmatpush1.bf16.msra.mxu0 %v750
    %892 = vmatprep.subr.bf16.mxu0 0
    %893 = vmatpush1.bf16.msra.mxu0 %v751
    %894 = vmatprep.subr.bf16.mxu0 0
    %895 = vmatpush1.bf16.msra.mxu0 %v752
    %896 = vmatprep.subr.bf16.mxu0 0
    %897 = vmatpush1.bf16.msra.mxu0 %v753
    %898 = vmatprep.mubr.bf16.mxu0 %v371
    %899 = vmatmul.mubr.bf16.gmra.mrb[0].mxu0 %v370
    %v900 = vpop.f32.mrb[0].mxu0
    %v901 = vadd.f32 %v212, %v900
    %v902 = vpop.f32.mrb[0].mxu0
    %v903 = vpop.f32.mrb[0].mxu0
    %v904 = vadd.f32 %v212, %v903
    %v905 = vpop.f32.mrb[0].mxu0
    %906 = vmatprep.mubr.bf16.mxu0 %v379
    %907 = vmatmul.mubr.bf16.gmra.mrb[0].mxu0 %v378
    %v908 = vpop.f32.mrb[0].mxu0
    %v909 = vadd.f32 %v212, %v908
    %v910 = vpop.f32.mrb[0].mxu0
    %v911 = vpop.f32.mrb[0].mxu0
    %v912 = vadd.f32 %v212, %v911
    %v913 = vpop.f32.mrb[0].mxu0
    %914 = vmatprep.mubr.bf16.mxu0 %v387
    %915 = vmatmul.mubr.bf16.gmra.mrb[0].mxu0 %v386
    %v916 = vpop.f32.mrb[0].mxu0
    %v917 = vadd.f32 %v212, %v916
    %v918 = vpop.f32.mrb[0].mxu0
    %v919 = vpop.f32.mrb[0].mxu0
    %v920 = vadd.f32 %v212, %v919
    %v921 = vpop.f32.mrb[0].mxu0
    %922 = vmatprep.mubr.bf16.mxu0 %v395
    %923 = vmatmul.mubr.bf16.gmra.mrb[0].mxu0 %v394
    %v924 = vpop.f32.mrb[0].mxu0
    %v925 = vadd.f32 %v212, %v924
    %v926 = vpop.f32.mrb[0].mxu0
    %v927 = vpop.f32.mrb[0].mxu0
    %v928 = vadd.f32 %v212, %v927
    %v929 = vpop.f32.mrb[0].mxu0
    %930 = vmatprep.mubr.bf16.mxu0 %v403
    %931 = vmatmul.mubr.bf16.gmra.mrb[0].mxu0 %v402
    %v932 = vpop.f32.mrb[0].mxu0
    %v933 = vadd.f32 %v212, %v932
    %v934 = vpop.f32.mrb[0].mxu0
    %v935 = vpop.f32.mrb[0].mxu0
    %v936 = vadd.f32 %v212, %v935
    %v937 = vpop.f32.mrb[0].mxu0
    %938 = vmatprep.mubr.bf16.mxu0 %v411
    %939 = vmatmul.mubr.bf16.gmra.mrb[0].mxu0 %v410
    %v940 = vpop.f32.mrb[0].mxu0
    %v941 = vadd.f32 %v212, %v940
    %v942 = vpop.f32.mrb[0].mxu0
    %v943 = vpop.f32.mrb[0].mxu0
    %v944 = vadd.f32 %v212, %v943
    %v945 = vpop.f32.mrb[0].mxu0
    %946 = vmatprep.mubr.bf16.mxu0 %v419
    %947 = vmatmul.mubr.bf16.gmra.mrb[0].mxu0 %v418
    %v948 = vpop.f32.mrb[0].mxu0
    %v949 = vadd.f32 %v212, %v948
    %v950 = vpop.f32.mrb[0].mxu0
    %v951 = vpop.f32.mrb[0].mxu0
    %v952 = vpop.f32.mrb[0].mxu0
    %953 = vdwg.mxu0
    %954 = vmatprep.subr.bf16.mxu0 0
    %955 = vmatpush1.bf16.msra.mxu0 %v754
    %956 = vmatprep.subr.bf16.mxu0 0
    %957 = vmatpush1.bf16.msra.mxu0 %v755
    %958 = vmatprep.subr.bf16.mxu0 0
    %959 = vmatpush1.bf16.msra.mxu0 %v756
    %960 = vmatprep.subr.bf16.mxu0 0
    %961 = vmatpush1.bf16.msra.mxu0 %v757
    %962 = vmatprep.subr.bf16.mxu0 0
    %963 = vmatpush1.bf16.msra.mxu0 %v758
    %964 = vmatprep.subr.bf16.mxu0 0
    %965 = vmatpush1.bf16.msra.mxu0 %v759
    %966 = vmatprep.subr.bf16.mxu0 0
    %967 = vmatpush1.bf16.msra.mxu0 %v760
    %968 = vmatprep.subr.bf16.mxu0 0
    %969 = vmatpush1.bf16.msra.mxu0 %v761
    %970 = vmatprep.subr.bf16.mxu0 0
    %971 = vmatpush1.bf16.msra.mxu0 %v762
    %972 = vmatprep.subr.bf16.mxu0 0
    %973 = vmatpush1.bf16.msra.mxu0 %v763
    %974 = vmatprep.subr.bf16.mxu0 0
    %975 = vmatpush1.bf16.msra.mxu0 %v764
    %976 = vmatprep.subr.bf16.mxu0 0
    %977 = vmatpush1.bf16.msra.mxu0 %v765
    %978 = vmatprep.subr.bf16.mxu0 0
    %979 = vmatpush1.bf16.msra.mxu0 %v766
    %980 = vmatprep.subr.bf16.mxu0 0
    %981 = vmatpush1.bf16.msra.mxu0 %v767
    %982 = vmatprep.subr.bf16.mxu0 0
    %983 = vmatpush1.bf16.msra.mxu0 %v768
    %984 = vmatprep.subr.bf16.mxu0 0
    %985 = vmatpush1.bf16.msra.mxu0 %v769
    %986 = vmatprep.mubr.bf16.mxu0 %v373
    %987 = vmatmul.mubr.bf16.gmra.mrb[0].mxu0 %v372
    %v988 = vpop.f32.mrb[0].mxu0
    %v989 = vadd.f32 %v901, %v988
    %v990 = vpop.f32.mrb[0].mxu0
    %v991 = vpop.f32.mrb[0].mxu0
    %v992 = vadd.f32 %v904, %v991
    %v993 = vpop.f32.mrb[0].mxu0
    %994 = vmatprep.mubr.bf16.mxu0 %v381
    %995 = vmatmul.mubr.bf16.gmra.mrb[0].mxu0 %v380
    %v996 = vpop.f32.mrb[0].mxu0
    %v997 = vadd.f32 %v909, %v996
    %v998 = vpop.f32.mrb[0].mxu0
    %v999 = vpop.f32.mrb[0].mxu0
    %v1000 = vadd.f32 %v912, %v999
    %v1001 = vpop.f32.mrb[0].mxu0
    %1002 = vmatprep.mubr.bf16.mxu0 %v389
    %1003 = vmatmul.mubr.bf16.gmra.mrb[0].mxu0 %v388
    %v1004 = vpop.f32.mrb[0].mxu0
    %v1005 = vadd.f32 %v917, %v1004
    %v1006 = vpop.f32.mrb[0].mxu0
    %v1007 = vpop.f32.mrb[0].mxu0
    %v1008 = vadd.f32 %v920, %v1007
    %v1009 = vpop.f32.mrb[0].mxu0
    %1010 = vmatprep.mubr.bf16.mxu0 %v397
    %1011 = vmatmul.mubr.bf16.gmra.mrb[0].mxu0 %v396
    %v1012 = vpop.f32.mrb[0].mxu0
    %v1013 = vadd.f32 %v925, %v1012
    %v1014 = vpop.f32.mrb[0].mxu0
    %v1015 = vpop.f32.mrb[0].mxu0
    %v1016 = vadd.f32 %v928, %v1015
    %v1017 = vpop.f32.mrb[0].mxu0
    %1018 = vmatprep.mubr.bf16.mxu0 %v405
    %1019 = vmatmul.mubr.bf16.gmra.mrb[0].mxu0 %v404
    %v1020 = vpop.f32.mrb[0].mxu0
    %v1021 = vadd.f32 %v933, %v1020
    %v1022 = vpop.f32.mrb[0].mxu0
    %v1023 = vpop.f32.mrb[0].mxu0
    %v1024 = vadd.f32 %v936, %v1023
    %v1025 = vpop.f32.mrb[0].mxu0
    %1026 = vmatprep.mubr.bf16.mxu0 %v413
    %1027 = vmatmul.mubr.bf16.gmra.mrb[0].mxu0 %v412
    %v1028 = vpop.f32.mrb[0].mxu0
    %v1029 = vadd.f32 %v941, %v1028
    %v1030 = vpop.f32.mrb[0].mxu0
    %v1031 = vpop.f32.mrb[0].mxu0
    %v1032 = vadd.f32 %v944, %v1031
    %v1033 = vpop.f32.mrb[0].mxu0
    %1034 = vmatprep.mubr.bf16.mxu0 %v421
    %1035 = vmatmul.mubr.bf16.gmra.mrb[0].mxu0 %v420
    %v1036 = vpop.f32.mrb[0].mxu0
    %v1037 = vadd.f32 %v949, %v1036
    %v1038 = vpop.f32.mrb[0].mxu0
    %v1039 = vpop.f32.mrb[0].mxu0
    %v1040 = vpop.f32.mrb[0].mxu0
    %1041 = vdwg.mxu0
    %1042 = vmatprep.subr.bf16.mxu0 0
    %1043 = vmatpush1.bf16.msra.mxu0 %v770
    %1044 = vmatprep.subr.bf16.mxu0 0
    %1045 = vmatpush1.bf16.msra.mxu0 %v771
    %1046 = vmatprep.subr.bf16.mxu0 0
    %1047 = vmatpush1.bf16.msra.mxu0 %v772
    %1048 = vmatprep.subr.bf16.mxu0 0
    %1049 = vmatpush1.bf16.msra.mxu0 %v773
    %1050 = vmatprep.subr.bf16.mxu0 0
    %1051 = vmatpush1.bf16.msra.mxu0 %v774
    %1052 = vmatprep.subr.bf16.mxu0 0
    %1053 = vmatpush1.bf16.msra.mxu0 %v775
    %1054 = vmatprep.subr.bf16.mxu0 0
    %1055 = vmatpush1.bf16.msra.mxu0 %v776
    %1056 = vmatprep.subr.bf16.mxu0 0
    %1057 = vmatpush1.bf16.msra.mxu0 %v777
    %1058 = vmatprep.subr.bf16.mxu0 0
    %1059 = vmatpush1.bf16.msra.mxu0 %v778
    %1060 = vmatprep.subr.bf16.mxu0 0
    %1061 = vmatpush1.bf16.msra.mxu0 %v779
    %1062 = vmatprep.subr.bf16.mxu0 0
    %1063 = vmatpush1.bf16.msra.mxu0 %v780
    %1064 = vmatprep.subr.bf16.mxu0 0
    %1065 = vmatpush1.bf16.msra.mxu0 %v781
    %1066 = vmatprep.subr.bf16.mxu0 0
    %1067 = vmatpush1.bf16.msra.mxu0 %v782
    %1068 = vmatprep.subr.bf16.mxu0 0
    %1069 = vmatpush1.bf16.msra.mxu0 %v783
    %1070 = vmatprep.subr.bf16.mxu0 0
    %1071 = vmatpush1.bf16.msra.mxu0 %v784
    %1072 = vmatprep.subr.bf16.mxu0 0
    %1073 = vmatpush1.bf16.msra.mxu0 %v785
    %1074 = vmatprep.mubr.bf16.mxu0 %v375
    %1075 = vmatmul.mubr.bf16.gmra.mrb[0].mxu0 %v374
    %v1076 = vpop.f32.mrb[0].mxu0
    %v1077 = vadd.f32 %v989, %v1076
    %v1078 = vpop.f32.mrb[0].mxu0
    %v1079 = vpop.f32.mrb[0].mxu0
    %v1080 = vadd.f32 %v992, %v1079
    %v1081 = vpop.f32.mrb[0].mxu0
    %1082 = vmatprep.mubr.bf16.mxu0 %v383
    %1083 = vmatmul.mubr.bf16.gmra.mrb[0].mxu0 %v382
    %v1084 = vpop.f32.mrb[0].mxu0
    %v1085 = vadd.f32 %v997, %v1084
    %v1086 = vpop.f32.mrb[0].mxu0
    %v1087 = vpop.f32.mrb[0].mxu0
    %v1088 = vadd.f32 %v1000, %v1087
    %v1089 = vpop.f32.mrb[0].mxu0
    %1090 = vmatprep.mubr.bf16.mxu0 %v391
    %1091 = vmatmul.mubr.bf16.gmra.mrb[0].mxu0 %v390
    %v1092 = vpop.f32.mrb[0].mxu0
    %v1093 = vadd.f32 %v1005, %v1092
    %v1094 = vpop.f32.mrb[0].mxu0
    %v1095 = vpop.f32.mrb[0].mxu0
    %v1096 = vadd.f32 %v1008, %v1095
    %v1097 = vpop.f32.mrb[0].mxu0
    %1098 = vmatprep.mubr.bf16.mxu0 %v399
    %1099 = vmatmul.mubr.bf16.gmra.mrb[0].mxu0 %v398
    %v1100 = vpop.f32.mrb[0].mxu0
    %v1101 = vadd.f32 %v1013, %v1100
    %v1102 = vpop.f32.mrb[0].mxu0
    %v1103 = vpop.f32.mrb[0].mxu0
    %v1104 = vadd.f32 %v1016, %v1103
    %v1105 = vpop.f32.mrb[0].mxu0
    %1106 = vmatprep.mubr.bf16.mxu0 %v407
    %1107 = vmatmul.mubr.bf16.gmra.mrb[0].mxu0 %v406
    %v1108 = vpop.f32.mrb[0].mxu0
    %v1109 = vadd.f32 %v1021, %v1108
    %v1110 = vpop.f32.mrb[0].mxu0
    %v1111 = vpop.f32.mrb[0].mxu0
    %v1112 = vadd.f32 %v1024, %v1111
    %v1113 = vpop.f32.mrb[0].mxu0
    %1114 = vmatprep.mubr.bf16.mxu0 %v415
    %1115 = vmatmul.mubr.bf16.gmra.mrb[0].mxu0 %v414
    %v1116 = vpop.f32.mrb[0].mxu0
    %v1117 = vadd.f32 %v1029, %v1116
    %v1118 = vpop.f32.mrb[0].mxu0
    %v1119 = vpop.f32.mrb[0].mxu0
    %v1120 = vadd.f32 %v1032, %v1119
    %v1121 = vpop.f32.mrb[0].mxu0
    %1122 = vmatprep.mubr.bf16.mxu0 %v423
    %1123 = vmatmul.mubr.bf16.gmra.mrb[0].mxu0 %v422
    %v1124 = vpop.f32.mrb[0].mxu0
    %v1125 = vadd.f32 %v1037, %v1124
    %v1126 = vpop.f32.mrb[0].mxu0
    %v1127 = vpop.f32.mrb[0].mxu0
    %v1128 = vpop.f32.mrb[0].mxu0
    %1129 = vdwg.mxu0
    %1130 = vmatprep.subr.bf16.mxu0 0
    %1131 = vmatpush1.bf16.msra.mxu0 %v786
    %1132 = vmatprep.subr.bf16.mxu0 0
    %1133 = vmatpush1.bf16.msra.mxu0 %v787
    %1134 = vmatprep.subr.bf16.mxu0 0
    %1135 = vmatpush1.bf16.msra.mxu0 %v788
    %1136 = vmatprep.subr.bf16.mxu0 0
    %1137 = vmatpush1.bf16.msra.mxu0 %v789
    %1138 = vmatprep.subr.bf16.mxu0 0
    %1139 = vmatpush1.bf16.msra.mxu0 %v790
    %1140 = vmatprep.subr.bf16.mxu0 0
    %1141 = vmatpush1.bf16.msra.mxu0 %v791
    %1142 = vmatprep.subr.bf16.mxu0 0
    %1143 = vmatpush1.bf16.msra.mxu0 %v792
    %1144 = vmatprep.subr.bf16.mxu0 0
    %1145 = vmatpush1.bf16.msra.mxu0 %v793
    %1146 = vmatprep.subr.bf16.mxu0 0
    %1147 = vmatpush1.bf16.msra.mxu0 %v794
    %1148 = vmatprep.subr.bf16.mxu0 0
    %1149 = vmatpush1.bf16.msra.mxu0 %v795
    %1150 = vmatprep.subr.bf16.mxu0 0
    %1151 = vmatpush1.bf16.msra.mxu0 %v796
    %1152 = vmatprep.subr.bf16.mxu0 0
    %1153 = vmatpush1.bf16.msra.mxu0 %v797
    %1154 = vmatprep.subr.bf16.mxu0 0
    %1155 = vmatpush1.bf16.msra.mxu0 %v798
    %1156 = vmatprep.subr.bf16.mxu0 0
    %1157 = vmatpush1.bf16.msra.mxu0 %v799
    %1158 = vmatprep.subr.bf16.mxu0 0
    %1159 = vmatpush1.bf16.msra.mxu0 %v800
    %1160 = vmatprep.subr.bf16.mxu0 0
    %1161 = vmatpush1.bf16.msra.mxu0 %v801
    %1162 = vmatprep.mubr.bf16.mxu0 %v377
    %1163 = vmatmul.mubr.bf16.gmra.mrb[0].mxu0 %v376
    %v1164 = vpop.f32.mrb[0].mxu0
    %v1165 = vadd.f32 %v1077, %v1164
    %v1166 = vpop.f32.mrb[0].mxu0
    %v1167 = vpop.f32.mrb[0].mxu0
    %v1168 = vadd.f32 %v1080, %v1167
    %v1169 = vpop.f32.mrb[0].mxu0
    %1170 = vmatprep.mubr.bf16.mxu0 %v385
    %1171 = vmatmul.mubr.bf16.gmra.mrb[0].mxu0 %v384
    %v1172 = vpop.f32.mrb[0].mxu0
    %v1173 = vadd.f32 %v1085, %v1172
    %v1174 = vpop.f32.mrb[0].mxu0
    %v1175 = vpop.f32.mrb[0].mxu0
    %v1176 = vadd.f32 %v1088, %v1175
    %v1177 = vpop.f32.mrb[0].mxu0
    %1178 = vmatprep.mubr.bf16.mxu0 %v393
    %1179 = vmatmul.mubr.bf16.gmra.mrb[0].mxu0 %v392
    %v1180 = vpop.f32.mrb[0].mxu0
    %v1181 = vadd.f32 %v1093, %v1180
    %v1182 = vpop.f32.mrb[0].mxu0
    %v1183 = vpop.f32.mrb[0].mxu0
    %v1184 = vadd.f32 %v1096, %v1183
    %v1185 = vpop.f32.mrb[0].mxu0
    %1186 = vmatprep.mubr.bf16.mxu0 %v401
    %1187 = vmatmul.mubr.bf16.gmra.mrb[0].mxu0 %v400
    %v1188 = vpop.f32.mrb[0].mxu0
    %v1189 = vadd.f32 %v1101, %v1188
    %v1190 = vpop.f32.mrb[0].mxu0
    %v1191 = vpop.f32.mrb[0].mxu0
    %v1192 = vadd.f32 %v1104, %v1191
    %v1193 = vpop.f32.mrb[0].mxu0
    %1194 = vmatprep.mubr.bf16.mxu0 %v409
    %1195 = vmatmul.mubr.bf16.gmra.mrb[0].mxu0 %v408
    %v1196 = vpop.f32.mrb[0].mxu0
    %v1197 = vadd.f32 %v1109, %v1196
    %v1198 = vpop.f32.mrb[0].mxu0
    %v1199 = vpop.f32.mrb[0].mxu0
    %v1200 = vadd.f32 %v1112, %v1199
    %v1201 = vpop.f32.mrb[0].mxu0
    %1202 = vmatprep.mubr.bf16.mxu0 %v417
    %1203 = vmatmul.mubr.bf16.gmra.mrb[0].mxu0 %v416
    %v1204 = vpop.f32.mrb[0].mxu0
    %v1205 = vadd.f32 %v1117, %v1204
    %v1206 = vpop.f32.mrb[0].mxu0
    %v1207 = vpop.f32.mrb[0].mxu0
    %v1208 = vadd.f32 %v1120, %v1207
    %v1209 = vpop.f32.mrb[0].mxu0
    %1210 = vmatprep.mubr.bf16.mxu0 %v425
    %1211 = vmatmul.mubr.bf16.gmra.mrb[0].mxu0 %v424
    %v1212 = vpop.f32.mrb[0].mxu0
    %v1213 = vadd.f32 %v1125, %v1212
    %v1214 = vpop.f32.mrb[0].mxu0
    %v1215 = vpop.f32.mrb[0].mxu0
    %v1216 = vpop.f32.mrb[0].mxu0
    %1217 = vdwg.mxu0
    %1218 = vst [vmem:[%s3] sm:$0xff] %v1165
    %1219 = vst [vmem:[%s3 + $0x8] sm:$0xff] %v1168
    %1220 = vst [vmem:[%s3 + $0x10] sm:$0xff] %v1173
    %1221 = vst [vmem:[%s3 + $0x18] sm:$0xff] %v1176
    %1222 = vst [vmem:[%s3 + $0x20] sm:$0xff] %v1181
    %1223 = vst [vmem:[%s3 + $0x28] sm:$0xff] %v1184
    %1224 = vst [vmem:[%s3 + $0x30] sm:$0xff] %v1189
    %1225 = vst [vmem:[%s3 + $0x38] sm:$0xff] %v1192
    %1226 = vst [vmem:[%s3 + $0x40] sm:$0xff] %v1197
    %1227 = vst [vmem:[%s3 + $0x48] sm:$0xff] %v1200
    %1228 = vst [vmem:[%s3 + $0x50] sm:$0xff] %v1205
    %1229 = vst [vmem:[%s3 + $0x58] sm:$0xff] %v1208
    %1230 = vst [vmem:[%s3 + $0x60] sm:$0xff] %v1213
    // Predicated region
    $region18: #{discriminator_forward.5} parent=1 // pred_check
      _
    $region19: #{discriminator_forward.5} parent=1 // pred_check_branch
      %1232 = sbr.rel (0) target = $region21
    $region20: #{discriminator_forward.5} parent=1 // pred_region
      _
    $region21: #{discriminator_forward.5} parent=1 // pred_fallthru
      _
    // Predicated region
    $region22: #{discriminator_forward.5} parent=1 // pred_check
      _
    $region23: #{discriminator_forward.5} parent=1 // pred_check_branch
      %1234 = sbr.rel (0) target = $region25
    $region24: #{discriminator_forward.5} parent=1 // pred_region
      _
    $region25: #{discriminator_forward.5} parent=1 // pred_fallthru
      _
    %1235 = vsyncpa [#allocation3], 1

// kernel: discriminator_forward.7
$region0: #{discriminator_forward.7}
  #allocation0 [shape = 'u32[]', space=smem, size = 0x4, offset = 0x4, fixed_abs, tag = 'smem constant byte address 0x4 - core index']
  #allocation1 [shape = 'u32[144,128]{1,0:T(1,128)}', space=vmem, size = 0x12000, scoped, tag = 'internal scratch']
  #allocation2 [shape = 'f32[1,1]{1,0:T(1,128)S(1)}', space=vmem, size = 0x200, scoped, tag = 'scoped memory for discriminator_forward.7']
  %s0 = inlined_call_operand.vmem [shape: f32[2,1024], index: 0, kind: input, shape index: {}]
  %s1 = inlined_call_operand.vmem [shape: f32[1,1024], index: 1, kind: input, shape index: {}]
  %s2 = inlined_call_operand.vmem [shape: f32[1,1024], index: 2, kind: input, shape index: {}]
  %s3 = inlined_call_operand.vmem [shape: f32[1,1024], index: 3, kind: input, shape index: {}]
  %s4 = inlined_call_operand.<no memory space> [shape: f32[1,1], index: 4, kind: input, shape index: {}]
  %s5 = inlined_call_operand.vmem [shape: f32[2,1], index: 5, kind: output, shape index: {}]
  %s6 = sld [smem:[#allocation0]]
  $region30: #{discriminator_forward.7} parent=0
    _
  %s8 = ssub.s32 1, %s6
  %s9 = scalar_select 0, %s8, %s6
  %v10 = vstv %s4
  %11 = vst [vmem:[#allocation2] sm:$0x1] %v10
  // Predicated region
  $region2: #{discriminator_forward.7} parent=0 // pred_check
    _
  $region3: #{discriminator_forward.7} parent=0 // pred_check_branch
    %13 = sbr.rel (0) target = $region5
  $region4: #{discriminator_forward.7} parent=0 // pred_region
    _
  $region5: #{discriminator_forward.7} parent=0 // pred_fallthru
    _
  // Predicated region
  $region6: #{discriminator_forward.7} parent=0 // pred_check
    _
  $region7: #{discriminator_forward.7} parent=0 // pred_check_branch
    %15 = sbr.rel (0) target = $region9
  $region8: #{discriminator_forward.7} parent=0 // pred_region
    _
  $region9: #{discriminator_forward.7} parent=0 // pred_fallthru
    _
  // Predicated region
  $region10: #{discriminator_forward.7} parent=0 // pred_check
    _
  $region11: #{discriminator_forward.7} parent=0 // pred_check_branch
    %17 = sbr.rel (0) target = $region13
  $region12: #{discriminator_forward.7} parent=0 // pred_region
    _
  $region13: #{discriminator_forward.7} parent=0 // pred_fallthru
    _
  // Predicated region
  $region14: #{discriminator_forward.7} parent=0 // pred_check
    _
  $region15: #{discriminator_forward.7} parent=0 // pred_check_branch
    %19 = sbr.rel (0) target = $region17
  $region16: #{discriminator_forward.7} parent=0 // pred_region
    _
  $region17: #{discriminator_forward.7} parent=0 // pred_fallthru
    _
  // Predicated region
  $region18: #{discriminator_forward.7} parent=0 // pred_check
    _
  $region19: #{discriminator_forward.7} parent=0 // pred_check_branch
    %21 = sbr.rel (0) target = $region21
  $region20: #{discriminator_forward.7} parent=0 // pred_region
    _
  $region21: #{discriminator_forward.7} parent=0 // pred_fallthru
    _
  %v22 = vld [vmem:[%s0] sm:$0xff]
  %v23 = vld [vmem:[%s0 + $0x8] sm:$0xff]
  %v24 = vld [vmem:[%s1] sm:$0xff]
  %v26 = vlaneseq
  %v27 = vshrl.u32 %v26, 7
  %v28 = vsub.s32 0, %v27
  %v29 = vrot.slane %v24, %v28
  %v30 = vlaneseq
  %v31 = vshrl.u32 %v30, 7
  %v32 = vsub.s32 1, %v31
  %v33 = vrot.slane %v24, %v32
  %v34 = vlaneseq
  %v35 = vshrl.u32 %v34, 7
  %v36 = vsub.s32 2, %v35
  %v37 = vrot.slane %v24, %v36
  %v38 = vlaneseq
  %v39 = vshrl.u32 %v38, 7
  %v40 = vsub.s32 3, %v39
  %v41 = vrot.slane %v24, %v40
  %v42 = vlaneseq
  %v43 = vshrl.u32 %v42, 7
  %v44 = vsub.s32 4, %v43
  %v45 = vrot.slane %v24, %v44
  %v46 = vlaneseq
  %v47 = vshrl.u32 %v46, 7
  %v48 = vsub.s32 5, %v47
  %v49 = vrot.slane %v24, %v48
  %v50 = vlaneseq
  %v51 = vshrl.u32 %v50, 7
  %v52 = vsub.s32 6, %v51
  %v53 = vrot.slane %v24, %v52
  %v54 = vlaneseq
  %v55 = vshrl.u32 %v54, 7
  %v56 = vsub.s32 7, %v55
  %v57 = vrot.slane %v24, %v56
  %v58 = vcombine.low %v29, %v33
  %v59 = vcombine.low %v37, %v41
  %v61 = vunpack.c.l.s4 1983009808
  %v62 = vunpack.c.0.s8 %v61
  %v63 = vlaneseq
  %v64 = vshrl.u32 %v63, 7
  %v65 = vsub.s32 %v62, %v64
  %v66 = vrot.slane %v58, %v65
  %v68 = vunpack.c.l.s4 1983009808
  %v69 = vunpack.c.0.s8 %v68
  %v70 = vlaneseq
  %v71 = vshrl.u32 %v70, 7
  %v72 = vsub.s32 %v69, %v71
  %v73 = vrot.slane %v59, %v72
  %v74 = vcombine.low %v66, %v73
  %v75 = vcombine.low %v45, %v49
  %v76 = vcombine.low %v53, %v57
  %v78 = vunpack.c.l.s4 1983009808
  %v79 = vunpack.c.0.s8 %v78
  %v80 = vlaneseq
  %v81 = vshrl.u32 %v80, 7
  %v82 = vsub.s32 %v79, %v81
  %v83 = vrot.slane %v75, %v82
  %v85 = vunpack.c.l.s4 1983009808
  %v86 = vunpack.c.0.s8 %v85
  %v87 = vlaneseq
  %v88 = vshrl.u32 %v87, 7
  %v89 = vsub.s32 %v86, %v88
  %v90 = vrot.slane %v76, %v89
  %v91 = vcombine.low %v83, %v90
  %v94 = vmul.f32 %v22, %v74
  %v95 = vmul.f32 %v23, %v91
  %v96 = vld [vmem:[%s2] sm:$0xff]
  %v98 = vlaneseq
  %v99 = vshrl.u32 %v98, 7
  %v100 = vsub.s32 0, %v99
  %v101 = vrot.slane %v96, %v100
  %v102 = vlaneseq
  %v103 = vshrl.u32 %v102, 7
  %v104 = vsub.s32 1, %v103
  %v105 = vrot.slane %v96, %v104
  %v106 = vlaneseq
  %v107 = vshrl.u32 %v106, 7
  %v108 = vsub.s32 2, %v107
  %v109 = vrot.slane %v96, %v108
  %v110 = vlaneseq
  %v111 = vshrl.u32 %v110, 7
  %v112 = vsub.s32 3, %v111
  %v113 = vrot.slane %v96, %v112
  %v114 = vlaneseq
  %v115 = vshrl.u32 %v114, 7
  %v116 = vsub.s32 4, %v115
  %v117 = vrot.slane %v96, %v116
  %v118 = vlaneseq
  %v119 = vshrl.u32 %v118, 7
  %v120 = vsub.s32 5, %v119
  %v121 = vrot.slane %v96, %v120
  %v122 = vlaneseq
  %v123 = vshrl.u32 %v122, 7
  %v124 = vsub.s32 6, %v123
  %v125 = vrot.slane %v96, %v124
  %v126 = vlaneseq
  %v127 = vshrl.u32 %v126, 7
  %v128 = vsub.s32 7, %v127
  %v129 = vrot.slane %v96, %v128
  %v130 = vcombine.low %v101, %v105
  %v131 = vcombine.low %v109, %v113
  %v133 = vunpack.c.l.s4 1983009808
  %v134 = vunpack.c.0.s8 %v133
  %v135 = vlaneseq
  %v136 = vshrl.u32 %v135, 7
  %v137 = vsub.s32 %v134, %v136
  %v138 = vrot.slane %v130, %v137
  %v140 = vunpack.c.l.s4 1983009808
  %v141 = vunpack.c.0.s8 %v140
  %v142 = vlaneseq
  %v143 = vshrl.u32 %v142, 7
  %v144 = vsub.s32 %v141, %v143
  %v145 = vrot.slane %v131, %v144
  %v146 = vcombine.low %v138, %v145
  %v147 = vcombine.low %v117, %v121
  %v148 = vcombine.low %v125, %v129
  %v150 = vunpack.c.l.s4 1983009808
  %v151 = vunpack.c.0.s8 %v150
  %v152 = vlaneseq
  %v153 = vshrl.u32 %v152, 7
  %v154 = vsub.s32 %v151, %v153
  %v155 = vrot.slane %v147, %v154
  %v157 = vunpack.c.l.s4 1983009808
  %v158 = vunpack.c.0.s8 %v157
  %v159 = vlaneseq
  %v160 = vshrl.u32 %v159, 7
  %v161 = vsub.s32 %v158, %v160
  %v162 = vrot.slane %v148, %v161
  %v163 = vcombine.low %v155, %v162
  %v166 = vadd.f32 %v94, %v146
  %v167 = vadd.f32 %v95, %v163
  %vm168 = vcmp.gt.f32.partialorder %v166, 0.0
  %vm169 = vcmp.gt.f32.partialorder %v167, 0.0
  %v170 = vmul.f32 %v166, 0.2
  %v171 = vmul.f32 %v167, 0.2
  %v172 = vsel %vm168, %v166, %v170
  %v173 = vsel %vm169, %v167, %v171
  %v174 = vld [vmem:[%s3] sm:$0xff]
  %v176 = vlaneseq
  %v177 = vshrl.u32 %v176, 7
  %v178 = vsub.s32 0, %v177
  %v179 = vrot.slane %v174, %v178
  %v180 = vlaneseq
  %v181 = vshrl.u32 %v180, 7
  %v182 = vsub.s32 1, %v181
  %v183 = vrot.slane %v174, %v182
  %v184 = vlaneseq
  %v185 = vshrl.u32 %v184, 7
  %v186 = vsub.s32 2, %v185
  %v187 = vrot.slane %v174, %v186
  %v188 = vlaneseq
  %v189 = vshrl.u32 %v188, 7
  %v190 = vsub.s32 3, %v189
  %v191 = vrot.slane %v174, %v190
  %v192 = vlaneseq
  %v193 = vshrl.u32 %v192, 7
  %v194 = vsub.s32 4, %v193
  %v195 = vrot.slane %v174, %v194
  %v196 = vlaneseq
  %v197 = vshrl.u32 %v196, 7
  %v198 = vsub.s32 5, %v197
  %v199 = vrot.slane %v174, %v198
  %v200 = vlaneseq
  %v201 = vshrl.u32 %v200, 7
  %v202 = vsub.s32 6, %v201
  %v203 = vrot.slane %v174, %v202
  %v204 = vlaneseq
  %v205 = vshrl.u32 %v204, 7
  %v206 = vsub.s32 7, %v205
  %v207 = vrot.slane %v174, %v206
  %v208 = vcombine.low %v179, %v183
  %v209 = vcombine.low %v187, %v191
  %v211 = vunpack.c.l.s4 1983009808
  %v212 = vunpack.c.0.s8 %v211
  %v213 = vlaneseq
  %v214 = vshrl.u32 %v213, 7
  %v215 = vsub.s32 %v212, %v214
  %v216 = vrot.slane %v208, %v215
  %v218 = vunpack.c.l.s4 1983009808
  %v219 = vunpack.c.0.s8 %v218
  %v220 = vlaneseq
  %v221 = vshrl.u32 %v220, 7
  %v222 = vsub.s32 %v219, %v221
  %v223 = vrot.slane %v209, %v222
  %v224 = vcombine.low %v216, %v223
  %v225 = vcombine.low %v195, %v199
  %v226 = vcombine.low %v203, %v207
  %v228 = vunpack.c.l.s4 1983009808
  %v229 = vunpack.c.0.s8 %v228
  %v230 = vlaneseq
  %v231 = vshrl.u32 %v230, 7
  %v232 = vsub.s32 %v229, %v231
  %v233 = vrot.slane %v225, %v232
  %v235 = vunpack.c.l.s4 1983009808
  %v236 = vunpack.c.0.s8 %v235
  %v237 = vlaneseq
  %v238 = vshrl.u32 %v237, 7
  %v239 = vsub.s32 %v236, %v238
  %v240 = vrot.slane %v226, %v239
  %v241 = vcombine.low %v233, %v240
  %v244 = vmul.f32 %v172, %v224
  %v245 = vmul.f32 %v173, %v241
  %v248 = vcombine.high %v244, %v244
  %v250 = vunpack.c.l.s4 1983009808
  %v251 = vunpack.c.0.s8 %v250
  %v252 = vlaneseq
  %v253 = vshrl.u32 %v252, 7
  %v254 = vsub.s32 %v251, %v253
  %v255 = vrot.slane %v244, %v254
  %v257 = vunpack.c.l.s4 1983009808
  %v258 = vunpack.c.0.s8 %v257
  %v259 = vlaneseq
  %v260 = vshrl.u32 %v259, 7
  %v261 = vsub.s32 %v258, %v260
  %v262 = vrot.slane %v248, %v261
  %v263 = vcombine.high %v255, %v255
  %v264 = vcombine.high %v262, %v262
  %v265 = vcombine.high %v245, %v245
  %v267 = vunpack.c.l.s4 1983009808
  %v268 = vunpack.c.0.s8 %v267
  %v269 = vlaneseq
  %v270 = vshrl.u32 %v269, 7
  %v271 = vsub.s32 %v268, %v270
  %v272 = vrot.slane %v245, %v271
  %v274 = vunpack.c.l.s4 1983009808
  %v275 = vunpack.c.0.s8 %v274
  %v276 = vlaneseq
  %v277 = vshrl.u32 %v276, 7
  %v278 = vsub.s32 %v275, %v277
  %v279 = vrot.slane %v265, %v278
  %v280 = vcombine.high %v272, %v272
  %v281 = vcombine.high %v279, %v279
  %vm290 = vcmask 1041408
  %v291 = vsel %vm290, %v255, 0.0
  %v292 = vsel %vm290, %v263, 0.0
  %v293 = vadd.f32 %v291, %v292
  %v294 = vsel %vm290, %v262, 0.0
  %v295 = vadd.f32 %v293, %v294
  %v296 = vsel %vm290, %v264, 0.0
  %v297 = vadd.f32 %v295, %v296
  %v298 = vsel %vm290, %v272, 0.0
  %v299 = vadd.f32 %v297, %v298
  %v300 = vsel %vm290, %v280, 0.0
  %v301 = vadd.f32 %v299, %v300
  %v302 = vsel %vm290, %v279, 0.0
  %v303 = vadd.f32 %v301, %v302
  %v304 = vsel %vm290, %v281, 0.0
  %v305 = vadd.f32 %v303, %v304
  %306 = vadd.xlane.f32.xlu0 %v305
  %v307 = vpop.xlane.xlu0 %306
  %v308 = vld [vmem:[#allocation2] sm:$0x1]
  %v310 = vlaneseq
  %v311 = vshrl.u32 %v310, 7
  %v312 = vsub.s32 0, %v311
  %v313 = vrot.slane %v308, %v312
  %v315 = vadd.f32 %v307, %v313
  %v316 = vxor.u32 %v315, 2147483648
  %v317 = vmul.f32 %v316, 1.442695
  %v318 = vpow.pop %v317
  %v319 = vadd.f32 %v318, 1.0
  %v320 = vrcp.pop %v319
  %v321 = vmul.f32 1.0, %v320
  %vm322 = vcmask 1024
  %323 = vst.msk [vmem:[%s5] sm:$0x3] %vm322, %v321
  // Predicated region
  $region22: #{discriminator_forward.7} parent=0 // pred_check
    _
  $region23: #{discriminator_forward.7} parent=0 // pred_check_branch
    %325 = sbr.rel (0) target = $region25
  $region24: #{discriminator_forward.7} parent=0 // pred_region
    _
  $region25: #{discriminator_forward.7} parent=0 // pred_fallthru
    _
  // Predicated region
  $region26: #{discriminator_forward.7} parent=0 // pred_check
    _
  $region27: #{discriminator_forward.7} parent=0 // pred_check_branch
    %327 = sbr.rel (0) target = $region29
  $region28: #{discriminator_forward.7} parent=0 // pred_region
    _
  $region29: #{discriminator_forward.7} parent=0 // pred_fallthru
    _

// kernel: discriminator_forward.6
$region0: #{discriminator_forward.6}
  #allocation0 [shape = 'u32[]', space=smem, size = 0x4, offset = 0x4, fixed_abs, tag = 'smem constant byte address 0x4 - core index']
  #allocation1 [shape = 'u32[144,128]{1,0:T(1,128)}', space=vmem, size = 0x12000, scoped, tag = 'internal scratch']
  #allocation2 [shape = 'f32[8,512]{1,0:T(8,128)}', space=vmem, size = 0x4000, scoped, tag = 'scratch operand']
  %s0 = inlined_call_operand.vmem [shape: f32[8,6272], index: 0, kind: input, shape index: {}]
  %s1 = inlined_call_operand.vmem [shape: f32[1,6272], index: 1, kind: input, shape index: {}]
  %s2 = inlined_call_operand.vmem [shape: f32[1,6272], index: 2, kind: input, shape index: {}]
  %s3 = inlined_call_operand.vmem [shape: bf16[6272,1024], index: 3, kind: input, shape index: {}]
  %s4 = inlined_call_operand.vmem [shape: f32[1,1024], index: 4, kind: input, shape index: {}]
  %s5 = inlined_call_operand.vmem [shape: f32[8,1024], index: 5, kind: output, shape index: {}]
  %s6 = sld [smem:[#allocation0]]
  $region84: #{discriminator_forward.6} parent=0
    _
  %s8 = ssub.s32 1, %s6
  %s9 = scalar_select 0, %s8, %s6
  $region1: #{discriminator_forward.6} parent=0
    #allocation3 [shape = 'u8[1835008]{0}', space=vmem, size = 0x1c0000, scoped, tag = 'input window, operand 3']
    loop: start=0, step=1, limit=16
    $region2: #{discriminator_forward.6} parent=1 // loop_pre_header
      _
    $region3: #{discriminator_forward.6} parent=1 // loop_header
      %s11 = sphi 0, %s15
      %p12 = scmp.ge.s32.totalorder %s11, 16
      %s18 = sphi 0, %s37
      %s19 = sphi 0, %s33
      %s20 = sphi 0, %s29
      %s21 = sphi 0, %s18
      %s22 = sphi 0, %s19
      %s23 = sphi 0, %s20
      %s24 = sphi 0, %s21
      %s25 = sphi 0, %s22
      %s26 = sphi 0, %s23
      %s42 = sphi 0, %s44
      %s45 = sphi 0, %s42
      %s46 = sphi 0, %s45
      %s62 = sphi 0, %s46
      %s68 = sphi 0, %s70
      %s71 = sphi 0, %s68
      %s72 = sphi 0, %s71
      %s88 = sphi 0, %s72
      %s94 = sphi 0, %s96
      %s97 = sphi 0, %s94
      %s98 = sphi 0, %s97
      %s114 = sphi 0, %s98
      %s122 = sphi 0, %s124
      %s125 = sphi 0, %s122
      %s126 = sphi 0, %s125
      %s142 = sphi 0, %s126
      %s148 = sphi 0, %s150
      %s151 = sphi 0, %s148
      %s152 = sphi 0, %s151
      %s168 = sphi 0, %s152
      %s176 = sphi 0, %s178
      %s179 = sphi 0, %s176
      %s180 = sphi 0, %s179
      %s196 = sphi 0, %s180
    $region4: #{discriminator_forward.6} parent=1 // loop_header_branch
      %14 = sbr.rel (%p12) target = $region8
    $region5: #{discriminator_forward.6} parent=1 // loop_body
      %s16 = ssub.s32 %s11, 1
      %s17 = ssub.s32 %s11, 2
      %s27 = sadd.s32 1, %s20
      %p28 = scmp.ge.s32.totalorder %s27, 7
      %s29 = scalar_select %p28, 0, %s27
      %s30 = sadd.s32 1, %s19
      %s31 = scalar_select %p28, %s30, %s19
      %p32 = scmp.ge.s32.totalorder %s31, 2
      %s33 = scalar_select %p32, 0, %s31
      %s34 = sadd.s32 1, %s18
      %s35 = scalar_select %p32, %s34, %s18
      %p36 = scmp.ge.s32.totalorder %s35, 1
      %s37 = scalar_select %p36, 0, %s35
      %s38 = ssub.s32 %s18, %s37
      %s39 = ssub.s32 %s20, %s29
      %s40 = sor.u32 %s38, %s39
      %p41 = scmp.eq.s32.totalorder %s40, 0
      %s43 = sadd.s32 %s42, 1
      %s44 = scalar_select %p41, %s42, %s43
      %p47 = pneg %p41
      %p48 = scmp.eq.s32.totalorder %s11, 13
      %p49 = por %p47, %p48
      %p50 = scmp.ne.s32.totalorder %s42, %s45
      %p51 = scmp.eq.s32.totalorder %s11, 0
      %p52 = por %p50, %p51
      %p53 = scmp.ne.s32.totalorder %s42, %s45
      %p54 = scmp.eq.s32.totalorder %s16, 13
      %p55 = por %p53, %p54
      %p56 = scmp.ne.s32.totalorder %s45, %s46
      %p57 = scmp.eq.s32.totalorder %s16, 0
      %p58 = por %p56, %p57
      %p59 = scmp.ne.s32.totalorder %s45, %s46
      %p60 = scmp.eq.s32.totalorder %s17, 13
      %p61 = por %p59, %p60
      %p63 = scmp.ne.s32.totalorder %s46, %s62
      %p64 = scmp.eq.s32.totalorder %s17, 0
      %p65 = por %p63, %p64
      %s66 = ssub.s32 %s20, %s29
      %p67 = scmp.eq.s32.totalorder %s66, 0
      %s69 = sadd.s32 %s68, 1
      %s70 = scalar_select %p67, %s68, %s69
      %p73 = pneg %p67
      %p74 = scmp.eq.s32.totalorder %s11, 13
      %p75 = por %p73, %p74
      %p76 = scmp.ne.s32.totalorder %s68, %s71
      %p77 = scmp.eq.s32.totalorder %s11, 0
      %p78 = por %p76, %p77
      %p79 = scmp.ne.s32.totalorder %s68, %s71
      %p80 = scmp.eq.s32.totalorder %s16, 13
      %p81 = por %p79, %p80
      %p82 = scmp.ne.s32.totalorder %s71, %s72
      %p83 = scmp.eq.s32.totalorder %s16, 0
      %p84 = por %p82, %p83
      %p85 = scmp.ne.s32.totalorder %s71, %s72
      %p86 = scmp.eq.s32.totalorder %s17, 13
      %p87 = por %p85, %p86
      %p89 = scmp.ne.s32.totalorder %s72, %s88
      %p90 = scmp.eq.s32.totalorder %s17, 0
      %p91 = por %p89, %p90
      %s92 = ssub.s32 %s20, %s29
      %p93 = scmp.eq.s32.totalorder %s92, 0
      %s95 = sadd.s32 %s94, 1
      %s96 = scalar_select %p93, %s94, %s95
      %p99 = pneg %p93
      %p100 = scmp.eq.s32.totalorder %s11, 13
      %p101 = por %p99, %p100
      %p102 = scmp.ne.s32.totalorder %s94, %s97
      %p103 = scmp.eq.s32.totalorder %s11, 0
      %p104 = por %p102, %p103
      %p105 = scmp.ne.s32.totalorder %s94, %s97
      %p106 = scmp.eq.s32.totalorder %s16, 13
      %p107 = por %p105, %p106
      %p108 = scmp.ne.s32.totalorder %s97, %s98
      %p109 = scmp.eq.s32.totalorder %s16, 0
      %p110 = por %p108, %p109
      %p111 = scmp.ne.s32.totalorder %s97, %s98
      %p112 = scmp.eq.s32.totalorder %s17, 13
      %p113 = por %p111, %p112
      %p115 = scmp.ne.s32.totalorder %s98, %s114
      %p116 = scmp.eq.s32.totalorder %s17, 0
      %p117 = por %p115, %p116
      %s118 = ssub.s32 %s20, %s29
      %s119 = ssub.s32 %s19, %s33
      %s120 = sor.u32 %s118, %s119
      %p121 = scmp.eq.s32.totalorder %s120, 0
      %s123 = sadd.s32 %s122, 1
      %s124 = scalar_select %p121, %s122, %s123
      %p127 = pneg %p121
      %p128 = scmp.eq.s32.totalorder %s11, 13
      %p129 = por %p127, %p128
      %p130 = scmp.ne.s32.totalorder %s122, %s125
      %p131 = scmp.eq.s32.totalorder %s11, 0
      %p132 = por %p130, %p131
      %p133 = scmp.ne.s32.totalorder %s122, %s125
      %p134 = scmp.eq.s32.totalorder %s16, 13
      %p135 = por %p133, %p134
      %p136 = scmp.ne.s32.totalorder %s125, %s126
      %p137 = scmp.eq.s32.totalorder %s16, 0
      %p138 = por %p136, %p137
      %p139 = scmp.ne.s32.totalorder %s125, %s126
      %p140 = scmp.eq.s32.totalorder %s17, 13
      %p141 = por %p139, %p140
      %p143 = scmp.ne.s32.totalorder %s126, %s142
      %p144 = scmp.eq.s32.totalorder %s17, 0
      %p145 = por %p143, %p144
      %s146 = ssub.s32 %s19, %s33
      %p147 = scmp.eq.s32.totalorder %s146, 0
      %s149 = sadd.s32 %s148, 1
      %s150 = scalar_select %p147, %s148, %s149
      %p153 = pneg %p147
      %p154 = scmp.eq.s32.totalorder %s11, 13
      %p155 = por %p153, %p154
      %p156 = scmp.ne.s32.totalorder %s148, %s151
      %p157 = scmp.eq.s32.totalorder %s11, 0
      %p158 = por %p156, %p157
      %p159 = scmp.ne.s32.totalorder %s148, %s151
      %p160 = scmp.eq.s32.totalorder %s16, 13
      %p161 = por %p159, %p160
      %p162 = scmp.ne.s32.totalorder %s151, %s152
      %p163 = scmp.eq.s32.totalorder %s16, 0
      %p164 = por %p162, %p163
      %p165 = scmp.ne.s32.totalorder %s151, %s152
      %p166 = scmp.eq.s32.totalorder %s17, 13
      %p167 = por %p165, %p166
      %p169 = scmp.ne.s32.totalorder %s152, %s168
      %p170 = scmp.eq.s32.totalorder %s17, 0
      %p171 = por %p169, %p170
      %s172 = ssub.s32 %s18, %s37
      %s173 = ssub.s32 %s19, %s33
      %s174 = sor.u32 %s172, %s173
      %p175 = scmp.eq.s32.totalorder %s174, 0
      %s177 = sadd.s32 %s176, 1
      %s178 = scalar_select %p175, %s176, %s177
      %p181 = pneg %p175
      %p182 = scmp.eq.s32.totalorder %s11, 13
      %p183 = por %p181, %p182
      %p184 = scmp.ne.s32.totalorder %s176, %s179
      %p185 = scmp.eq.s32.totalorder %s11, 0
      %p186 = por %p184, %p185
      %p187 = scmp.ne.s32.totalorder %s176, %s179
      %p188 = scmp.eq.s32.totalorder %s16, 13
      %p189 = por %p187, %p188
      %p190 = scmp.ne.s32.totalorder %s179, %s180
      %p191 = scmp.eq.s32.totalorder %s16, 0
      %p192 = por %p190, %p191
      %p193 = scmp.ne.s32.totalorder %s179, %s180
      %p194 = scmp.eq.s32.totalorder %s17, 13
      %p195 = por %p193, %p194
      %p197 = scmp.ne.s32.totalorder %s180, %s196
      %p198 = scmp.eq.s32.totalorder %s17, 0
      %p199 = por %p197, %p198
      %p200 = scmp.le.s32.totalorder 1, %s11
      %p201 = scmp.lt.s32.totalorder %s11, 15
      %p202 = pnand %p200, %p201
      %p203 = pneg %p202
      // Predicated region
      $region9: #{discriminator_forward.6} parent=5 // pred_check
        _
      $region10: #{discriminator_forward.6} parent=5 // pred_check_branch
        %205 = sbr.rel (%p202) target = $region12
      $region11: #{discriminator_forward.6} parent=5 // pred_region
        %s206 = ssub.s32 %s11, 1
      $region12: #{discriminator_forward.6} parent=5 // pred_fallthru
        _
      %p207 = scmp.lt.s32.totalorder %s11, 14
      // Predicated region
      $region13: #{discriminator_forward.6} parent=5 // pred_check
        %p208 = pneg %p207
      $region14: #{discriminator_forward.6} parent=5 // pred_check_branch
        %210 = sbr.rel (%p208) target = $region16
      $region15: #{discriminator_forward.6} parent=5 // pred_region
        // Predicated region
        $region17: #{discriminator_forward.6} parent=15 // pred_check
          %p211 = pneg %p52
        $region18: #{discriminator_forward.6} parent=15 // pred_check_branch
          %213 = sbr.rel (%p211) target = $region20
        $region19: #{discriminator_forward.6} parent=15 // pred_region
          %s214 = smul.u32 7, %s20
          %p215 = scmp.lt.s32.totalorder %s18, 0
          %s216 = scalar_select %p215, %s18, 0
          %p217 = scmp.lt.s32.totalorder %s214, 48
          %s218 = scalar_select %p217, %s214, 48
          %s219 = smul.addr %s216, 49
          %s220 = sadd.s32 %s218, %s219
          %s221 = smul.addr %s220, 8
          %s222 = scalar_lea.vmem %s0, %s221
          %s223 = smul.u32 7, %s20
        $region20: #{discriminator_forward.6} parent=15 // pred_fallthru
          _
        // Predicated region
        $region21: #{discriminator_forward.6} parent=15 // pred_check
          %p224 = pneg %p78
        $region22: #{discriminator_forward.6} parent=15 // pred_check_branch
          %226 = sbr.rel (%p224) target = $region24
        $region23: #{discriminator_forward.6} parent=15 // pred_region
          %s227 = smul.u32 7, %s20
          %p228 = scmp.lt.s32.totalorder %s227, 48
          %s229 = scalar_select %p228, %s227, 48
          %s230 = scalar_lea.vmem %s1, %s229
          %s231 = smul.u32 7, %s20
        $region24: #{discriminator_forward.6} parent=15 // pred_fallthru
          _
        // Predicated region
        $region25: #{discriminator_forward.6} parent=15 // pred_check
          %p232 = pneg %p104
        $region26: #{discriminator_forward.6} parent=15 // pred_check_branch
          %234 = sbr.rel (%p232) target = $region28
        $region27: #{discriminator_forward.6} parent=15 // pred_region
          %s235 = smul.u32 7, %s20
          %p236 = scmp.lt.s32.totalorder %s235, 48
          %s237 = scalar_select %p236, %s235, 48
          %s238 = scalar_lea.vmem %s2, %s237
          %s239 = smul.u32 7, %s20
        $region28: #{discriminator_forward.6} parent=15 // pred_fallthru
          _
        // Predicated region
        $region29: #{discriminator_forward.6} parent=15 // pred_check
          %p240 = pneg %p132
        $region30: #{discriminator_forward.6} parent=15 // pred_check_branch
          %242 = sbr.rel (%p240) target = $region32
        $region31: #{discriminator_forward.6} parent=15 // pred_region
          %s243 = sand.u32 %s122, 1
          %s244 = sand.u32 %s122, 1
          %s245 = smul.addr %s244, 1792
          %s246 = scalar_lea.vmem [#allocation3], %s245
          %s247 = smul.u32 112, %s20
          %s248 = smul.u32 4, %s19
          %s249 = smul.addr %s247, 8
          %s250 = sadd.s32 %s248, %s249
          %s251 = smul.addr %s250, 4
          %s252 = scalar_lea.vmem %s3, %s251
          // Predicated region
          $region33: #{discriminator_forward.6} parent=31 // pred_check
            _
          $region34: #{discriminator_forward.6} parent=31 // pred_check_branch
            %254 = sbr.rel (0) target = $region36
          $region35: #{discriminator_forward.6} parent=31 // pred_region
            // Predicated region
            $region37: #{discriminator_forward.6} parent=35 // pred_check
              _
            $region38: #{discriminator_forward.6} parent=35 // pred_check_branch
              %256 = sbr.rel (0) target = $region40
            $region39: #{discriminator_forward.6} parent=35 // pred_region
              loop: start=0, step=1, limit=1
              $region41: #{discriminator_forward.6} parent=39 // loop_pre_header
                _
              $region42: #{discriminator_forward.6} parent=39 // loop_header
                %s258 = sphi 0, %s262
                %p259 = scmp.ge.s32.totalorder %s258, 1
                %s263 = sphi %s252, %s252
                %s264 = sphi %s246, %s246
              $region43: #{discriminator_forward.6} parent=39 // loop_header_branch
                %261 = sbr.rel (%p259) target = $region47
              $region44: #{discriminator_forward.6} parent=39 // loop_body
                %v265 = vld [vmem:[%s263] sm:$0xff]
                %266 = vst [vmem:[%s264] sm:$0xff] %v265
                %v267 = vld [vmem:[%s263 + $0x8] sm:$0xff]
                %268 = vst [vmem:[%s264 + $0x8] sm:$0xff] %v267
                %v269 = vld [vmem:[%s263 + $0x20] sm:$0xff]
                %270 = vst [vmem:[%s264 + $0x10] sm:$0xff] %v269
                %v271 = vld [vmem:[%s263 + $0x28] sm:$0xff]
                %272 = vst [vmem:[%s264 + $0x18] sm:$0xff] %v271
                %v273 = vld [vmem:[%s263 + $0x40] sm:$0xff]
                %274 = vst [vmem:[%s264 + $0x20] sm:$0xff] %v273
                %v275 = vld [vmem:[%s263 + $0x48] sm:$0xff]
                %276 = vst [vmem:[%s264 + $0x28] sm:$0xff] %v275
                %v277 = vld [vmem:[%s263 + $0x60] sm:$0xff]
                %278 = vst [vmem:[%s264 + $0x30] sm:$0xff] %v277
                %v279 = vld [vmem:[%s263 + $0x68] sm:$0xff]
                %280 = vst [vmem:[%s264 + $0x38] sm:$0xff] %v279
                %v281 = vld [vmem:[%s263 + $0x80] sm:$0xff]
                %282 = vst [vmem:[%s264 + $0x40] sm:$0xff] %v281
                %v283 = vld [vmem:[%s263 + $0x88] sm:$0xff]
                %284 = vst [vmem:[%s264 + $0x48] sm:$0xff] %v283
                %v285 = vld [vmem:[%s263 + $0xa0] sm:$0xff]
                %286 = vst [vmem:[%s264 + $0x50] sm:$0xff] %v285
                %v287 = vld [vmem:[%s263 + $0xa8] sm:$0xff]
                %288 = vst [vmem:[%s264 + $0x58] sm:$0xff] %v287
                %v289 = vld [vmem:[%s263 + $0xc0] sm:$0xff]
                %290 = vst [vmem:[%s264 + $0x60] sm:$0xff] %v289
                %v291 = vld [vmem:[%s263 + $0xc8] sm:$0xff]
                %292 = vst [vmem:[%s264 + $0x68] sm:$0xff] %v291
                %v293 = vld [vmem:[%s263 + $0xe0] sm:$0xff]
                %294 = vst [vmem:[%s264 + $0x70] sm:$0xff] %v293
                %v295 = vld [vmem:[%s263 + $0xe8] sm:$0xff]
                %296 = vst [vmem:[%s264 + $0x78] sm:$0xff] %v295
                %v297 = vld [vmem:[%s263 + $0x100] sm:$0xff]
                %298 = vst [vmem:[%s264 + $0x80] sm:$0xff] %v297
                %v299 = vld [vmem:[%s263 + $0x108] sm:$0xff]
                %300 = vst [vmem:[%s264 + $0x88] sm:$0xff] %v299
                %v301 = vld [vmem:[%s263 + $0x120] sm:$0xff]
                %302 = vst [vmem:[%s264 + $0x90] sm:$0xff] %v301
                %v303 = vld [vmem:[%s263 + $0x128] sm:$0xff]
                %304 = vst [vmem:[%s264 + $0x98] sm:$0xff] %v303
                %v305 = vld [vmem:[%s263 + $0x140] sm:$0xff]
                %306 = vst [vmem:[%s264 + $0xa0] sm:$0xff] %v305
                %v307 = vld [vmem:[%s263 + $0x148] sm:$0xff]
                %308 = vst [vmem:[%s264 + $0xa8] sm:$0xff] %v307
                %v309 = vld [vmem:[%s263 + $0x160] sm:$0xff]
                %310 = vst [vmem:[%s264 + $0xb0] sm:$0xff] %v309
                %v311 = vld [vmem:[%s263 + $0x168] sm:$0xff]
                %312 = vst [vmem:[%s264 + $0xb8] sm:$0xff] %v311
                %v313 = vld [vmem:[%s263 + $0x180] sm:$0xff]
                %314 = vst [vmem:[%s264 + $0xc0] sm:$0xff] %v313
                %v315 = vld [vmem:[%s263 + $0x188] sm:$0xff]
                %316 = vst [vmem:[%s264 + $0xc8] sm:$0xff] %v315
                %v317 = vld [vmem:[%s263 + $0x1a0] sm:$0xff]
                %318 = vst [vmem:[%s264 + $0xd0] sm:$0xff] %v317
                %v319 = vld [vmem:[%s263 + $0x1a8] sm:$0xff]
                %320 = vst [vmem:[%s264 + $0xd8] sm:$0xff] %v319
                %v321 = vld [vmem:[%s263 + $0x1c0] sm:$0xff]
                %322 = vst [vmem:[%s264 + $0xe0] sm:$0xff] %v321
                %v323 = vld [vmem:[%s263 + $0x1c8] sm:$0xff]
                %324 = vst [vmem:[%s264 + $0xe8] sm:$0xff] %v323
                %v325 = vld [vmem:[%s263 + $0x1e0] sm:$0xff]
                %326 = vst [vmem:[%s264 + $0xf0] sm:$0xff] %v325
                %v327 = vld [vmem:[%s263 + $0x1e8] sm:$0xff]
                %328 = vst [vmem:[%s264 + $0xf8] sm:$0xff] %v327
                %v329 = vld [vmem:[%s263 + $0x200] sm:$0xff]
                %330 = vst [vmem:[%s264 + $0x100] sm:$0xff] %v329
                %v331 = vld [vmem:[%s263 + $0x208] sm:$0xff]
                %332 = vst [vmem:[%s264 + $0x108] sm:$0xff] %v331
                %v333 = vld [vmem:[%s263 + $0x220] sm:$0xff]
                %334 = vst [vmem:[%s264 + $0x110] sm:$0xff] %v333
                %v335 = vld [vmem:[%s263 + $0x228] sm:$0xff]
                %336 = vst [vmem:[%s264 + $0x118] sm:$0xff] %v335
                %v337 = vld [vmem:[%s263 + $0x240] sm:$0xff]
                %338 = vst [vmem:[%s264 + $0x120] sm:$0xff] %v337
                %v339 = vld [vmem:[%s263 + $0x248] sm:$0xff]
                %340 = vst [vmem:[%s264 + $0x128] sm:$0xff] %v339
                %v341 = vld [vmem:[%s263 + $0x260] sm:$0xff]
                %342 = vst [vmem:[%s264 + $0x130] sm:$0xff] %v341
                %v343 = vld [vmem:[%s263 + $0x268] sm:$0xff]
                %344 = vst [vmem:[%s264 + $0x138] sm:$0xff] %v343
                %v345 = vld [vmem:[%s263 + $0x280] sm:$0xff]
                %346 = vst [vmem:[%s264 + $0x140] sm:$0xff] %v345
                %v347 = vld [vmem:[%s263 + $0x288] sm:$0xff]
                %348 = vst [vmem:[%s264 + $0x148] sm:$0xff] %v347
                %v349 = vld [vmem:[%s263 + $0x2a0] sm:$0xff]
                %350 = vst [vmem:[%s264 + $0x150] sm:$0xff] %v349
                %v351 = vld [vmem:[%s263 + $0x2a8] sm:$0xff]
                %352 = vst [vmem:[%s264 + $0x158] sm:$0xff] %v351
                %v353 = vld [vmem:[%s263 + $0x2c0] sm:$0xff]
                %354 = vst [vmem:[%s264 + $0x160] sm:$0xff] %v353
                %v355 = vld [vmem:[%s263 + $0x2c8] sm:$0xff]
                %356 = vst [vmem:[%s264 + $0x168] sm:$0xff] %v355
                %v357 = vld [vmem:[%s263 + $0x2e0] sm:$0xff]
                %358 = vst [vmem:[%s264 + $0x170] sm:$0xff] %v357
                %v359 = vld [vmem:[%s263 + $0x2e8] sm:$0xff]
                %360 = vst [vmem:[%s264 + $0x178] sm:$0xff] %v359
                %v361 = vld [vmem:[%s263 + $0x300] sm:$0xff]
                %362 = vst [vmem:[%s264 + $0x180] sm:$0xff] %v361
                %v363 = vld [vmem:[%s263 + $0x308] sm:$0xff]
                %364 = vst [vmem:[%s264 + $0x188] sm:$0xff] %v363
                %v365 = vld [vmem:[%s263 + $0x320] sm:$0xff]
                %366 = vst [vmem:[%s264 + $0x190] sm:$0xff] %v365
                %v367 = vld [vmem:[%s263 + $0x328] sm:$0xff]
                %368 = vst [vmem:[%s264 + $0x198] sm:$0xff] %v367
                %v369 = vld [vmem:[%s263 + $0x340] sm:$0xff]
                %370 = vst [vmem:[%s264 + $0x1a0] sm:$0xff] %v369
                %v371 = vld [vmem:[%s263 + $0x348] sm:$0xff]
                %372 = vst [vmem:[%s264 + $0x1a8] sm:$0xff] %v371
                %v373 = vld [vmem:[%s263 + $0x360] sm:$0xff]
                %374 = vst [vmem:[%s264 + $0x1b0] sm:$0xff] %v373
                %v375 = vld [vmem:[%s263 + $0x368] sm:$0xff]
                %376 = vst [vmem:[%s264 + $0x1b8] sm:$0xff] %v375
                %v377 = vld [vmem:[%s263 + $0x380] sm:$0xff]
                %378 = vst [vmem:[%s264 + $0x1c0] sm:$0xff] %v377
                %v379 = vld [vmem:[%s263 + $0x388] sm:$0xff]
                %380 = vst [vmem:[%s264 + $0x1c8] sm:$0xff] %v379
                %v381 = vld [vmem:[%s263 + $0x3a0] sm:$0xff]
                %382 = vst [vmem:[%s264 + $0x1d0] sm:$0xff] %v381
                %v383 = vld [vmem:[%s263 + $0x3a8] sm:$0xff]
                %384 = vst [vmem:[%s264 + $0x1d8] sm:$0xff] %v383
                %v385 = vld [vmem:[%s263 + $0x3c0] sm:$0xff]
                %386 = vst [vmem:[%s264 + $0x1e0] sm:$0xff] %v385
                %v387 = vld [vmem:[%s263 + $0x3c8] sm:$0xff]
                %388 = vst [vmem:[%s264 + $0x1e8] sm:$0xff] %v387
                %v389 = vld [vmem:[%s263 + $0x3e0] sm:$0xff]
                %390 = vst [vmem:[%s264 + $0x1f0] sm:$0xff] %v389
                %v391 = vld [vmem:[%s263 + $0x3e8] sm:$0xff]
                %392 = vst [vmem:[%s264 + $0x1f8] sm:$0xff] %v391
                %v393 = vld [vmem:[%s263 + $0x400] sm:$0xff]
                %394 = vst [vmem:[%s264 + $0x200] sm:$0xff] %v393
                %v395 = vld [vmem:[%s263 + $0x408] sm:$0xff]
                %396 = vst [vmem:[%s264 + $0x208] sm:$0xff] %v395
                %v397 = vld [vmem:[%s263 + $0x420] sm:$0xff]
                %398 = vst [vmem:[%s264 + $0x210] sm:$0xff] %v397
                %v399 = vld [vmem:[%s263 + $0x428] sm:$0xff]
                %400 = vst [vmem:[%s264 + $0x218] sm:$0xff] %v399
                %v401 = vld [vmem:[%s263 + $0x440] sm:$0xff]
                %402 = vst [vmem:[%s264 + $0x220] sm:$0xff] %v401
                %v403 = vld [vmem:[%s263 + $0x448] sm:$0xff]
                %404 = vst [vmem:[%s264 + $0x228] sm:$0xff] %v403
                %v405 = vld [vmem:[%s263 + $0x460] sm:$0xff]
                %406 = vst [vmem:[%s264 + $0x230] sm:$0xff] %v405
                %v407 = vld [vmem:[%s263 + $0x468] sm:$0xff]
                %408 = vst [vmem:[%s264 + $0x238] sm:$0xff] %v407
                %v409 = vld [vmem:[%s263 + $0x480] sm:$0xff]
                %410 = vst [vmem:[%s264 + $0x240] sm:$0xff] %v409
                %v411 = vld [vmem:[%s263 + $0x488] sm:$0xff]
                %412 = vst [vmem:[%s264 + $0x248] sm:$0xff] %v411
                %v413 = vld [vmem:[%s263 + $0x4a0] sm:$0xff]
                %414 = vst [vmem:[%s264 + $0x250] sm:$0xff] %v413
                %v415 = vld [vmem:[%s263 + $0x4a8] sm:$0xff]
                %416 = vst [vmem:[%s264 + $0x258] sm:$0xff] %v415
                %v417 = vld [vmem:[%s263 + $0x4c0] sm:$0xff]
                %418 = vst [vmem:[%s264 + $0x260] sm:$0xff] %v417
                %v419 = vld [vmem:[%s263 + $0x4c8] sm:$0xff]
                %420 = vst [vmem:[%s264 + $0x268] sm:$0xff] %v419
                %v421 = vld [vmem:[%s263 + $0x4e0] sm:$0xff]
                %422 = vst [vmem:[%s264 + $0x270] sm:$0xff] %v421
                %v423 = vld [vmem:[%s263 + $0x4e8] sm:$0xff]
                %424 = vst [vmem:[%s264 + $0x278] sm:$0xff] %v423
                %v425 = vld [vmem:[%s263 + $0x500] sm:$0xff]
                %426 = vst [vmem:[%s264 + $0x280] sm:$0xff] %v425
                %v427 = vld [vmem:[%s263 + $0x508] sm:$0xff]
                %428 = vst [vmem:[%s264 + $0x288] sm:$0xff] %v427
                %v429 = vld [vmem:[%s263 + $0x520] sm:$0xff]
                %430 = vst [vmem:[%s264 + $0x290] sm:$0xff] %v429
                %v431 = vld [vmem:[%s263 + $0x528] sm:$0xff]
                %432 = vst [vmem:[%s264 + $0x298] sm:$0xff] %v431
                %v433 = vld [vmem:[%s263 + $0x540] sm:$0xff]
                %434 = vst [vmem:[%s264 + $0x2a0] sm:$0xff] %v433
                %v435 = vld [vmem:[%s263 + $0x548] sm:$0xff]
                %436 = vst [vmem:[%s264 + $0x2a8] sm:$0xff] %v435
                %v437 = vld [vmem:[%s263 + $0x560] sm:$0xff]
                %438 = vst [vmem:[%s264 + $0x2b0] sm:$0xff] %v437
                %v439 = vld [vmem:[%s263 + $0x568] sm:$0xff]
                %440 = vst [vmem:[%s264 + $0x2b8] sm:$0xff] %v439
                %v441 = vld [vmem:[%s263 + $0x580] sm:$0xff]
                %442 = vst [vmem:[%s264 + $0x2c0] sm:$0xff] %v441
                %v443 = vld [vmem:[%s263 + $0x588] sm:$0xff]
                %444 = vst [vmem:[%s264 + $0x2c8] sm:$0xff] %v443
                %v445 = vld [vmem:[%s263 + $0x5a0] sm:$0xff]
                %446 = vst [vmem:[%s264 + $0x2d0] sm:$0xff] %v445
                %v447 = vld [vmem:[%s263 + $0x5a8] sm:$0xff]
                %448 = vst [vmem:[%s264 + $0x2d8] sm:$0xff] %v447
                %v449 = vld [vmem:[%s263 + $0x5c0] sm:$0xff]
                %450 = vst [vmem:[%s264 + $0x2e0] sm:$0xff] %v449
                %v451 = vld [vmem:[%s263 + $0x5c8] sm:$0xff]
                %452 = vst [vmem:[%s264 + $0x2e8] sm:$0xff] %v451
                %v453 = vld [vmem:[%s263 + $0x5e0] sm:$0xff]
                %454 = vst [vmem:[%s264 + $0x2f0] sm:$0xff] %v453
                %v455 = vld [vmem:[%s263 + $0x5e8] sm:$0xff]
                %456 = vst [vmem:[%s264 + $0x2f8] sm:$0xff] %v455
                %v457 = vld [vmem:[%s263 + $0x600] sm:$0xff]
                %458 = vst [vmem:[%s264 + $0x300] sm:$0xff] %v457
                %v459 = vld [vmem:[%s263 + $0x608] sm:$0xff]
                %460 = vst [vmem:[%s264 + $0x308] sm:$0xff] %v459
                %v461 = vld [vmem:[%s263 + $0x620] sm:$0xff]
                %462 = vst [vmem:[%s264 + $0x310] sm:$0xff] %v461
                %v463 = vld [vmem:[%s263 + $0x628] sm:$0xff]
                %464 = vst [vmem:[%s264 + $0x318] sm:$0xff] %v463
                %v465 = vld [vmem:[%s263 + $0x640] sm:$0xff]
                %466 = vst [vmem:[%s264 + $0x320] sm:$0xff] %v465
                %v467 = vld [vmem:[%s263 + $0x648] sm:$0xff]
                %468 = vst [vmem:[%s264 + $0x328] sm:$0xff] %v467
                %v469 = vld [vmem:[%s263 + $0x660] sm:$0xff]
                %470 = vst [vmem:[%s264 + $0x330] sm:$0xff] %v469
                %v471 = vld [vmem:[%s263 + $0x668] sm:$0xff]
                %472 = vst [vmem:[%s264 + $0x338] sm:$0xff] %v471
                %v473 = vld [vmem:[%s263 + $0x680] sm:$0xff]
                %474 = vst [vmem:[%s264 + $0x340] sm:$0xff] %v473
                %v475 = vld [vmem:[%s263 + $0x688] sm:$0xff]
                %476 = vst [vmem:[%s264 + $0x348] sm:$0xff] %v475
                %v477 = vld [vmem:[%s263 + $0x6a0] sm:$0xff]
                %478 = vst [vmem:[%s264 + $0x350] sm:$0xff] %v477
                %v479 = vld [vmem:[%s263 + $0x6a8] sm:$0xff]
                %480 = vst [vmem:[%s264 + $0x358] sm:$0xff] %v479
                %v481 = vld [vmem:[%s263 + $0x6c0] sm:$0xff]
                %482 = vst [vmem:[%s264 + $0x360] sm:$0xff] %v481
                %v483 = vld [vmem:[%s263 + $0x6c8] sm:$0xff]
                %484 = vst [vmem:[%s264 + $0x368] sm:$0xff] %v483
                %v485 = vld [vmem:[%s263 + $0x6e0] sm:$0xff]
                %486 = vst [vmem:[%s264 + $0x370] sm:$0xff] %v485
                %v487 = vld [vmem:[%s263 + $0x6e8] sm:$0xff]
                %488 = vst [vmem:[%s264 + $0x378] sm:$0xff] %v487
                %v489 = vld [vmem:[%s263 + $0x700] sm:$0xff]
                %490 = vst [vmem:[%s264 + $0x380] sm:$0xff] %v489
                %v491 = vld [vmem:[%s263 + $0x708] sm:$0xff]
                %492 = vst [vmem:[%s264 + $0x388] sm:$0xff] %v491
                %v493 = vld [vmem:[%s263 + $0x720] sm:$0xff]
                %494 = vst [vmem:[%s264 + $0x390] sm:$0xff] %v493
                %v495 = vld [vmem:[%s263 + $0x728] sm:$0xff]
                %496 = vst [vmem:[%s264 + $0x398] sm:$0xff] %v495
                %v497 = vld [vmem:[%s263 + $0x740] sm:$0xff]
                %498 = vst [vmem:[%s264 + $0x3a0] sm:$0xff] %v497
                %v499 = vld [vmem:[%s263 + $0x748] sm:$0xff]
                %500 = vst [vmem:[%s264 + $0x3a8] sm:$0xff] %v499
                %v501 = vld [vmem:[%s263 + $0x760] sm:$0xff]
                %502 = vst [vmem:[%s264 + $0x3b0] sm:$0xff] %v501
                %v503 = vld [vmem:[%s263 + $0x768] sm:$0xff]
                %504 = vst [vmem:[%s264 + $0x3b8] sm:$0xff] %v503
                %v505 = vld [vmem:[%s263 + $0x780] sm:$0xff]
                %506 = vst [vmem:[%s264 + $0x3c0] sm:$0xff] %v505
                %v507 = vld [vmem:[%s263 + $0x788] sm:$0xff]
                %508 = vst [vmem:[%s264 + $0x3c8] sm:$0xff] %v507
                %v509 = vld [vmem:[%s263 + $0x7a0] sm:$0xff]
                %510 = vst [vmem:[%s264 + $0x3d0] sm:$0xff] %v509
                %v511 = vld [vmem:[%s263 + $0x7a8] sm:$0xff]
                %512 = vst [vmem:[%s264 + $0x3d8] sm:$0xff] %v511
                %v513 = vld [vmem:[%s263 + $0x7c0] sm:$0xff]
                %514 = vst [vmem:[%s264 + $0x3e0] sm:$0xff] %v513
                %v515 = vld [vmem:[%s263 + $0x7c8] sm:$0xff]
                %516 = vst [vmem:[%s264 + $0x3e8] sm:$0xff] %v515
                %v517 = vld [vmem:[%s263 + $0x7e0] sm:$0xff]
                %518 = vst [vmem:[%s264 + $0x3f0] sm:$0xff] %v517
                %v519 = vld [vmem:[%s263 + $0x7e8] sm:$0xff]
                %520 = vst [vmem:[%s264 + $0x3f8] sm:$0xff] %v519
                %v521 = vld [vmem:[%s263 + $0x800] sm:$0xff]
                %522 = vst [vmem:[%s264 + $0x400] sm:$0xff] %v521
                %v523 = vld [vmem:[%s263 + $0x808] sm:$0xff]
                %524 = vst [vmem:[%s264 + $0x408] sm:$0xff] %v523
                %v525 = vld [vmem:[%s263 + $0x820] sm:$0xff]
                %526 = vst [vmem:[%s264 + $0x410] sm:$0xff] %v525
                %v527 = vld [vmem:[%s263 + $0x828] sm:$0xff]
                %528 = vst [vmem:[%s264 + $0x418] sm:$0xff] %v527
                %v529 = vld [vmem:[%s263 + $0x840] sm:$0xff]
                %530 = vst [vmem:[%s264 + $0x420] sm:$0xff] %v529
                %v531 = vld [vmem:[%s263 + $0x848] sm:$0xff]
                %532 = vst [vmem:[%s264 + $0x428] sm:$0xff] %v531
                %v533 = vld [vmem:[%s263 + $0x860] sm:$0xff]
                %534 = vst [vmem:[%s264 + $0x430] sm:$0xff] %v533
                %v535 = vld [vmem:[%s263 + $0x868] sm:$0xff]
                %536 = vst [vmem:[%s264 + $0x438] sm:$0xff] %v535
                %v537 = vld [vmem:[%s263 + $0x880] sm:$0xff]
                %538 = vst [vmem:[%s264 + $0x440] sm:$0xff] %v537
                %v539 = vld [vmem:[%s263 + $0x888] sm:$0xff]
                %540 = vst [vmem:[%s264 + $0x448] sm:$0xff] %v539
                %v541 = vld [vmem:[%s263 + $0x8a0] sm:$0xff]
                %542 = vst [vmem:[%s264 + $0x450] sm:$0xff] %v541
                %v543 = vld [vmem:[%s263 + $0x8a8] sm:$0xff]
                %544 = vst [vmem:[%s264 + $0x458] sm:$0xff] %v543
                %v545 = vld [vmem:[%s263 + $0x8c0] sm:$0xff]
                %546 = vst [vmem:[%s264 + $0x460] sm:$0xff] %v545
                %v547 = vld [vmem:[%s263 + $0x8c8] sm:$0xff]
                %548 = vst [vmem:[%s264 + $0x468] sm:$0xff] %v547
                %v549 = vld [vmem:[%s263 + $0x8e0] sm:$0xff]
                %550 = vst [vmem:[%s264 + $0x470] sm:$0xff] %v549
                %v551 = vld [vmem:[%s263 + $0x8e8] sm:$0xff]
                %552 = vst [vmem:[%s264 + $0x478] sm:$0xff] %v551
                %v553 = vld [vmem:[%s263 + $0x900] sm:$0xff]
                %554 = vst [vmem:[%s264 + $0x480] sm:$0xff] %v553
                %v555 = vld [vmem:[%s263 + $0x908] sm:$0xff]
                %556 = vst [vmem:[%s264 + $0x488] sm:$0xff] %v555
                %v557 = vld [vmem:[%s263 + $0x920] sm:$0xff]
                %558 = vst [vmem:[%s264 + $0x490] sm:$0xff] %v557
                %v559 = vld [vmem:[%s263 + $0x928] sm:$0xff]
                %560 = vst [vmem:[%s264 + $0x498] sm:$0xff] %v559
                %v561 = vld [vmem:[%s263 + $0x940] sm:$0xff]
                %562 = vst [vmem:[%s264 + $0x4a0] sm:$0xff] %v561
                %v563 = vld [vmem:[%s263 + $0x948] sm:$0xff]
                %564 = vst [vmem:[%s264 + $0x4a8] sm:$0xff] %v563
                %v565 = vld [vmem:[%s263 + $0x960] sm:$0xff]
                %566 = vst [vmem:[%s264 + $0x4b0] sm:$0xff] %v565
                %v567 = vld [vmem:[%s263 + $0x968] sm:$0xff]
                %568 = vst [vmem:[%s264 + $0x4b8] sm:$0xff] %v567
                %v569 = vld [vmem:[%s263 + $0x980] sm:$0xff]
                %570 = vst [vmem:[%s264 + $0x4c0] sm:$0xff] %v569
                %v571 = vld [vmem:[%s263 + $0x988] sm:$0xff]
                %572 = vst [vmem:[%s264 + $0x4c8] sm:$0xff] %v571
                %v573 = vld [vmem:[%s263 + $0x9a0] sm:$0xff]
                %574 = vst [vmem:[%s264 + $0x4d0] sm:$0xff] %v573
                %v575 = vld [vmem:[%s263 + $0x9a8] sm:$0xff]
                %576 = vst [vmem:[%s264 + $0x4d8] sm:$0xff] %v575
                %v577 = vld [vmem:[%s263 + $0x9c0] sm:$0xff]
                %578 = vst [vmem:[%s264 + $0x4e0] sm:$0xff] %v577
                %v579 = vld [vmem:[%s263 + $0x9c8] sm:$0xff]
                %580 = vst [vmem:[%s264 + $0x4e8] sm:$0xff] %v579
                %v581 = vld [vmem:[%s263 + $0x9e0] sm:$0xff]
                %582 = vst [vmem:[%s264 + $0x4f0] sm:$0xff] %v581
                %v583 = vld [vmem:[%s263 + $0x9e8] sm:$0xff]
                %584 = vst [vmem:[%s264 + $0x4f8] sm:$0xff] %v583
                %v585 = vld [vmem:[%s263 + $0xa00] sm:$0xff]
                %586 = vst [vmem:[%s264 + $0x500] sm:$0xff] %v585
                %v587 = vld [vmem:[%s263 + $0xa08] sm:$0xff]
                %588 = vst [vmem:[%s264 + $0x508] sm:$0xff] %v587
                %v589 = vld [vmem:[%s263 + $0xa20] sm:$0xff]
                %590 = vst [vmem:[%s264 + $0x510] sm:$0xff] %v589
                %v591 = vld [vmem:[%s263 + $0xa28] sm:$0xff]
                %592 = vst [vmem:[%s264 + $0x518] sm:$0xff] %v591
                %v593 = vld [vmem:[%s263 + $0xa40] sm:$0xff]
                %594 = vst [vmem:[%s264 + $0x520] sm:$0xff] %v593
                %v595 = vld [vmem:[%s263 + $0xa48] sm:$0xff]
                %596 = vst [vmem:[%s264 + $0x528] sm:$0xff] %v595
                %v597 = vld [vmem:[%s263 + $0xa60] sm:$0xff]
                %598 = vst [vmem:[%s264 + $0x530] sm:$0xff] %v597
                %v599 = vld [vmem:[%s263 + $0xa68] sm:$0xff]
                %600 = vst [vmem:[%s264 + $0x538] sm:$0xff] %v599
                %v601 = vld [vmem:[%s263 + $0xa80] sm:$0xff]
                %602 = vst [vmem:[%s264 + $0x540] sm:$0xff] %v601
                %v603 = vld [vmem:[%s263 + $0xa88] sm:$0xff]
                %604 = vst [vmem:[%s264 + $0x548] sm:$0xff] %v603
                %v605 = vld [vmem:[%s263 + $0xaa0] sm:$0xff]
                %606 = vst [vmem:[%s264 + $0x550] sm:$0xff] %v605
                %v607 = vld [vmem:[%s263 + $0xaa8] sm:$0xff]
                %608 = vst [vmem:[%s264 + $0x558] sm:$0xff] %v607
                %v609 = vld [vmem:[%s263 + $0xac0] sm:$0xff]
                %610 = vst [vmem:[%s264 + $0x560] sm:$0xff] %v609
                %v611 = vld [vmem:[%s263 + $0xac8] sm:$0xff]
                %612 = vst [vmem:[%s264 + $0x568] sm:$0xff] %v611
                %v613 = vld [vmem:[%s263 + $0xae0] sm:$0xff]
                %614 = vst [vmem:[%s264 + $0x570] sm:$0xff] %v613
                %v615 = vld [vmem:[%s263 + $0xae8] sm:$0xff]
                %616 = vst [vmem:[%s264 + $0x578] sm:$0xff] %v615
                %v617 = vld [vmem:[%s263 + $0xb00] sm:$0xff]
                %618 = vst [vmem:[%s264 + $0x580] sm:$0xff] %v617
                %v619 = vld [vmem:[%s263 + $0xb08] sm:$0xff]
                %620 = vst [vmem:[%s264 + $0x588] sm:$0xff] %v619
                %v621 = vld [vmem:[%s263 + $0xb20] sm:$0xff]
                %622 = vst [vmem:[%s264 + $0x590] sm:$0xff] %v621
                %v623 = vld [vmem:[%s263 + $0xb28] sm:$0xff]
                %624 = vst [vmem:[%s264 + $0x598] sm:$0xff] %v623
                %v625 = vld [vmem:[%s263 + $0xb40] sm:$0xff]
                %626 = vst [vmem:[%s264 + $0x5a0] sm:$0xff] %v625
                %v627 = vld [vmem:[%s263 + $0xb48] sm:$0xff]
                %628 = vst [vmem:[%s264 + $0x5a8] sm:$0xff] %v627
                %v629 = vld [vmem:[%s263 + $0xb60] sm:$0xff]
                %630 = vst [vmem:[%s264 + $0x5b0] sm:$0xff] %v629
                %v631 = vld [vmem:[%s263 + $0xb68] sm:$0xff]
                %632 = vst [vmem:[%s264 + $0x5b8] sm:$0xff] %v631
                %v633 = vld [vmem:[%s263 + $0xb80] sm:$0xff]
                %634 = vst [vmem:[%s264 + $0x5c0] sm:$0xff] %v633
                %v635 = vld [vmem:[%s263 + $0xb88] sm:$0xff]
                %636 = vst [vmem:[%s264 + $0x5c8] sm:$0xff] %v635
                %v637 = vld [vmem:[%s263 + $0xba0] sm:$0xff]
                %638 = vst [vmem:[%s264 + $0x5d0] sm:$0xff] %v637
                %v639 = vld [vmem:[%s263 + $0xba8] sm:$0xff]
                %640 = vst [vmem:[%s264 + $0x5d8] sm:$0xff] %v639
                %v641 = vld [vmem:[%s263 + $0xbc0] sm:$0xff]
                %642 = vst [vmem:[%s264 + $0x5e0] sm:$0xff] %v641
                %v643 = vld [vmem:[%s263 + $0xbc8] sm:$0xff]
                %644 = vst [vmem:[%s264 + $0x5e8] sm:$0xff] %v643
                %v645 = vld [vmem:[%s263 + $0xbe0] sm:$0xff]
                %646 = vst [vmem:[%s264 + $0x5f0] sm:$0xff] %v645
                %v647 = vld [vmem:[%s263 + $0xbe8] sm:$0xff]
                %648 = vst [vmem:[%s264 + $0x5f8] sm:$0xff] %v647
                %v649 = vld [vmem:[%s263 + $0xc00] sm:$0xff]
                %650 = vst [vmem:[%s264 + $0x600] sm:$0xff] %v649
                %v651 = vld [vmem:[%s263 + $0xc08] sm:$0xff]
                %652 = vst [vmem:[%s264 + $0x608] sm:$0xff] %v651
                %v653 = vld [vmem:[%s263 + $0xc20] sm:$0xff]
                %654 = vst [vmem:[%s264 + $0x610] sm:$0xff] %v653
                %v655 = vld [vmem:[%s263 + $0xc28] sm:$0xff]
                %656 = vst [vmem:[%s264 + $0x618] sm:$0xff] %v655
                %v657 = vld [vmem:[%s263 + $0xc40] sm:$0xff]
                %658 = vst [vmem:[%s264 + $0x620] sm:$0xff] %v657
                %v659 = vld [vmem:[%s263 + $0xc48] sm:$0xff]
                %660 = vst [vmem:[%s264 + $0x628] sm:$0xff] %v659
                %v661 = vld [vmem:[%s263 + $0xc60] sm:$0xff]
                %662 = vst [vmem:[%s264 + $0x630] sm:$0xff] %v661
                %v663 = vld [vmem:[%s263 + $0xc68] sm:$0xff]
                %664 = vst [vmem:[%s264 + $0x638] sm:$0xff] %v663
                %v665 = vld [vmem:[%s263 + $0xc80] sm:$0xff]
                %666 = vst [vmem:[%s264 + $0x640] sm:$0xff] %v665
                %v667 = vld [vmem:[%s263 + $0xc88] sm:$0xff]
                %668 = vst [vmem:[%s264 + $0x648] sm:$0xff] %v667
                %v669 = vld [vmem:[%s263 + $0xca0] sm:$0xff]
                %670 = vst [vmem:[%s264 + $0x650] sm:$0xff] %v669
                %v671 = vld [vmem:[%s263 + $0xca8] sm:$0xff]
                %672 = vst [vmem:[%s264 + $0x658] sm:$0xff] %v671
                %v673 = vld [vmem:[%s263 + $0xcc0] sm:$0xff]
                %674 = vst [vmem:[%s264 + $0x660] sm:$0xff] %v673
                %v675 = vld [vmem:[%s263 + $0xcc8] sm:$0xff]
                %676 = vst [vmem:[%s264 + $0x668] sm:$0xff] %v675
                %v677 = vld [vmem:[%s263 + $0xce0] sm:$0xff]
                %678 = vst [vmem:[%s264 + $0x670] sm:$0xff] %v677
                %v679 = vld [vmem:[%s263 + $0xce8] sm:$0xff]
                %680 = vst [vmem:[%s264 + $0x678] sm:$0xff] %v679
                %v681 = vld [vmem:[%s263 + $0xd00] sm:$0xff]
                %682 = vst [vmem:[%s264 + $0x680] sm:$0xff] %v681
                %v683 = vld [vmem:[%s263 + $0xd08] sm:$0xff]
                %684 = vst [vmem:[%s264 + $0x688] sm:$0xff] %v683
                %v685 = vld [vmem:[%s263 + $0xd20] sm:$0xff]
                %686 = vst [vmem:[%s264 + $0x690] sm:$0xff] %v685
                %v687 = vld [vmem:[%s263 + $0xd28] sm:$0xff]
                %688 = vst [vmem:[%s264 + $0x698] sm:$0xff] %v687
                %v689 = vld [vmem:[%s263 + $0xd40] sm:$0xff]
                %690 = vst [vmem:[%s264 + $0x6a0] sm:$0xff] %v689
                %v691 = vld [vmem:[%s263 + $0xd48] sm:$0xff]
                %692 = vst [vmem:[%s264 + $0x6a8] sm:$0xff] %v691
                %v693 = vld [vmem:[%s263 + $0xd60] sm:$0xff]
                %694 = vst [vmem:[%s264 + $0x6b0] sm:$0xff] %v693
                %v695 = vld [vmem:[%s263 + $0xd68] sm:$0xff]
                %696 = vst [vmem:[%s264 + $0x6b8] sm:$0xff] %v695
                %v697 = vld [vmem:[%s263 + $0xd80] sm:$0xff]
                %698 = vst [vmem:[%s264 + $0x6c0] sm:$0xff] %v697
                %v699 = vld [vmem:[%s263 + $0xd88] sm:$0xff]
                %700 = vst [vmem:[%s264 + $0x6c8] sm:$0xff] %v699
                %v701 = vld [vmem:[%s263 + $0xda0] sm:$0xff]
                %702 = vst [vmem:[%s264 + $0x6d0] sm:$0xff] %v701
                %v703 = vld [vmem:[%s263 + $0xda8] sm:$0xff]
                %704 = vst [vmem:[%s264 + $0x6d8] sm:$0xff] %v703
                %v705 = vld [vmem:[%s263 + $0xdc0] sm:$0xff]
                %706 = vst [vmem:[%s264 + $0x6e0] sm:$0xff] %v705
                %v707 = vld [vmem:[%s263 + $0xdc8] sm:$0xff]
                %708 = vst [vmem:[%s264 + $0x6e8] sm:$0xff] %v707
                %v709 = vld [vmem:[%s263 + $0xde0] sm:$0xff]
                %710 = vst [vmem:[%s264 + $0x6f0] sm:$0xff] %v709
                %v711 = vld [vmem:[%s263 + $0xde8] sm:$0xff]
                %712 = vst [vmem:[%s264 + $0x6f8] sm:$0xff] %v711
              $region45: #{discriminator_forward.6} parent=39 // loop_footer
                %s262 = sadd.s32 1, %s258
              $region46: #{discriminator_forward.6} parent=39 // loop_footer_branch
                %257 = sbr.rel target = $region42
              $region47: #{discriminator_forward.6} parent=39 // loop_exit
                _
            $region40: #{discriminator_forward.6} parent=35 // pred_fallthru
              _
            // Predicated region
            $region48: #{discriminator_forward.6} parent=35 // pred_check
              _
            $region49: #{discriminator_forward.6} parent=35 // pred_check_branch
              %714 = sbr.rel target = $region51
            $region50: #{discriminator_forward.6} parent=35 // pred_region
              _
            $region51: #{discriminator_forward.6} parent=35 // pred_fallthru
              _
          $region36: #{discriminator_forward.6} parent=31 // pred_fallthru
            _
          %715 = vnop
        $region32: #{discriminator_forward.6} parent=15 // pred_fallthru
          _
        // Predicated region
        $region52: #{discriminator_forward.6} parent=15 // pred_check
          %p716 = pneg %p158
        $region53: #{discriminator_forward.6} parent=15 // pred_check_branch
          %718 = sbr.rel (%p716) target = $region55
        $region54: #{discriminator_forward.6} parent=15 // pred_region
          %s719 = smul.u32 4, %s19
          %p720 = scmp.lt.s32.totalorder %s719, 7
          %s721 = scalar_select %p720, %s719, 7
          %s722 = scalar_lea.vmem %s4, %s721
          %s723 = smul.u32 4, %s19
        $region55: #{discriminator_forward.6} parent=15 // pred_fallthru
          _
      $region16: #{discriminator_forward.6} parent=5 // pred_fallthru
        _
      %p724 = scmp.le.s32.totalorder 1, %s11
      %p725 = scmp.lt.s32.totalorder %s11, 15
      %p726 = pnand %p724, %p725
      %p727 = pneg %p726
      // Predicated region
      $region56: #{discriminator_forward.6} parent=5 // pred_check
        _
      $region57: #{discriminator_forward.6} parent=5 // pred_check_branch
        %729 = sbr.rel (%p726) target = $region59
      $region58: #{discriminator_forward.6} parent=5 // pred_region
        %s730 = ssub.s32 %s11, 1
        %s731 = sand.u32 %s125, 1
        %s732 = sand.u32 %s125, 1
        %s733 = smul.addr %s732, 1792
        %s734 = scalar_lea.vmem [#allocation3], %s733
        // Predicated region
        $region60: #{discriminator_forward.6} parent=58 // pred_check
          %p735 = pneg %p138
        $region61: #{discriminator_forward.6} parent=58 // pred_check_branch
          %737 = sbr.rel (%p735) target = $region63
        $region62: #{discriminator_forward.6} parent=58 // pred_region
          _
        $region63: #{discriminator_forward.6} parent=58 // pred_fallthru
          _
        %s738 = smul.u32 7, %s23
        %p739 = scmp.lt.s32.totalorder %s21, 0
        %s740 = scalar_select %p739, %s21, 0
        %p741 = scmp.lt.s32.totalorder %s738, 48
        %s742 = scalar_select %p741, %s738, 48
        %s743 = smul.addr %s740, 49
        %s744 = sadd.s32 %s742, %s743
        %s745 = smul.addr %s744, 8
        %s746 = scalar_lea.vmem %s0, %s745
        %p747 = pneg %p58
        %p748 = pneg %p55
        %s749 = smul.u32 7, %s23
        %p750 = scmp.lt.s32.totalorder %s749, 48
        %s751 = scalar_select %p750, %s749, 48
        %s752 = scalar_lea.vmem %s1, %s751
        %p753 = pneg %p84
        %p754 = pneg %p81
        %s755 = smul.u32 7, %s23
        %p756 = scmp.lt.s32.totalorder %s755, 48
        %s757 = scalar_select %p756, %s755, 48
        %s758 = scalar_lea.vmem %s2, %s757
        %p759 = pneg %p110
        %p760 = pneg %p107
        %s761 = sand.u32 %s125, 1
        %s762 = sand.u32 %s125, 1
        %s763 = smul.addr %s762, 1792
        %s764 = scalar_lea.vmem [#allocation3], %s763
        %p765 = pneg %p138
        %p766 = pneg %p135
        %s767 = smul.u32 4, %s22
        %p768 = scmp.lt.s32.totalorder %s767, 7
        %s769 = scalar_select %p768, %s767, 7
        %s770 = scalar_lea.vmem %s4, %s769
        %p771 = pneg %p164
        %p772 = pneg %p161
        %p773 = pneg %p192
        %p774 = pneg %p189
        %s775 = smul.u32 4, %s22
        %p776 = scmp.lt.s32.totalorder %s21, 0
        %s777 = scalar_select %p776, %s21, 0
        %p778 = scmp.lt.s32.totalorder %s775, 7
        %s779 = scalar_select %p778, %s775, 7
        %s780 = smul.addr %s777, 8
        %s781 = sadd.s32 %s779, %s780
        %s782 = smul.addr %s781, 8
        %s783 = scalar_lea.vmem %s5, %s782
        %s784 = smul.u32 7, %s23
        %p785 = scmp.lt.s32.totalorder %s21, 0
        %s786 = scalar_select %p785, %s21, 0
        %p787 = scmp.lt.s32.totalorder %s784, 48
        %s788 = scalar_select %p787, %s784, 48
        %s789 = smul.addr %s786, 49
        %s790 = sadd.s32 %s788, %s789
        %s791 = smul.addr %s790, 8
        %s792 = scalar_lea.vmem %s0, %s791
        %s793 = smul.u32 7, %s23
        %s794 = smul.u32 7, %s23
        %p795 = scmp.lt.s32.totalorder %s794, 48
        %s796 = scalar_select %p795, %s794, 48
        %s797 = scalar_lea.vmem %s1, %s796
        %s798 = smul.u32 7, %s23
        %s799 = smul.u32 7, %s23
        %p800 = scmp.lt.s32.totalorder %s799, 48
        %s801 = scalar_select %p800, %s799, 48
        %s802 = scalar_lea.vmem %s2, %s801
        %s803 = smul.u32 7, %s23
        %s804 = smul.u32 112, %s23
        %s805 = smul.u32 4, %s22
        %s806 = smul.u32 4, %s22
        %p807 = scmp.lt.s32.totalorder %s806, 7
        %s808 = scalar_select %p807, %s806, 7
        %s809 = scalar_lea.vmem %s4, %s808
        %s810 = smul.u32 4, %s22
        %s811 = smul.u32 4, %s22
        %p812 = scmp.lt.s32.totalorder %s21, 0
        %s813 = scalar_select %p812, %s21, 0
        %p814 = scmp.lt.s32.totalorder %s811, 7
        %s815 = scalar_select %p814, %s811, 7
        %s816 = smul.addr %s813, 8
        %s817 = sadd.s32 %s815, %s816
        %s818 = smul.addr %s817, 8
        %s819 = scalar_lea.vmem %s5, %s818
        %s820 = smul.u32 4, %s22
        %p822 = scmp.eq.s32.totalorder %s23, 0
        // Predicated region
        $region64: #{discriminator_forward.6} parent=58 // pred_check
          %p823 = pneg %p822
        $region65: #{discriminator_forward.6} parent=58 // pred_check_branch
          %825 = sbr.rel (%p823) target = $region67
        $region66: #{discriminator_forward.6} parent=58 // pred_region
          %826 = vst [vmem:[#allocation2] sm:$0xff] 0.0
          %827 = vst [vmem:[#allocation2 + $0x8] sm:$0xff] 0.0
          %828 = vst [vmem:[#allocation2 + $0x10] sm:$0xff] 0.0
          %829 = vst [vmem:[#allocation2 + $0x18] sm:$0xff] 0.0
        $region67: #{discriminator_forward.6} parent=58 // pred_fallthru
          _
        %v830 = vld [vmem:[%s792] sm:$0xff]
        %v831 = vld [vmem:[%s792 + $0x8] sm:$0xff]
        %v832 = vld [vmem:[%s792 + $0x10] sm:$0xff]
        %v833 = vld [vmem:[%s792 + $0x18] sm:$0xff]
        %v834 = vld [vmem:[%s792 + $0x20] sm:$0xff]
        %v835 = vld [vmem:[%s792 + $0x28] sm:$0xff]
        %v836 = vld [vmem:[%s792 + $0x30] sm:$0xff]
        %v837 = vld [vmem:[%s797] sm:$0xff]
        %v839 = vlaneseq
        %v840 = vshrl.u32 %v839, 7
        %v841 = vsub.s32 0, %v840
        %v842 = vrot.slane %v837, %v841
        %v843 = vlaneseq
        %v844 = vshrl.u32 %v843, 7
        %v845 = vsub.s32 1, %v844
        %v846 = vrot.slane %v837, %v845
        %v847 = vlaneseq
        %v848 = vshrl.u32 %v847, 7
        %v849 = vsub.s32 2, %v848
        %v850 = vrot.slane %v837, %v849
        %v851 = vlaneseq
        %v852 = vshrl.u32 %v851, 7
        %v853 = vsub.s32 3, %v852
        %v854 = vrot.slane %v837, %v853
        %v855 = vlaneseq
        %v856 = vshrl.u32 %v855, 7
        %v857 = vsub.s32 4, %v856
        %v858 = vrot.slane %v837, %v857
        %v859 = vlaneseq
        %v860 = vshrl.u32 %v859, 7
        %v861 = vsub.s32 5, %v860
        %v862 = vrot.slane %v837, %v861
        %v863 = vlaneseq
        %v864 = vshrl.u32 %v863, 7
        %v865 = vsub.s32 6, %v864
        %v866 = vrot.slane %v837, %v865
        %v874 = vmul.f32 %v830, %v842
        %v875 = vmul.f32 %v831, %v846
        %v876 = vmul.f32 %v832, %v850
        %v877 = vmul.f32 %v833, %v854
        %v878 = vmul.f32 %v834, %v858
        %v879 = vmul.f32 %v835, %v862
        %v880 = vmul.f32 %v836, %v866
        %v881 = vld [vmem:[%s802] sm:$0xff]
        %v883 = vlaneseq
        %v884 = vshrl.u32 %v883, 7
        %v885 = vsub.s32 0, %v884
        %v886 = vrot.slane %v881, %v885
        %v887 = vlaneseq
        %v888 = vshrl.u32 %v887, 7
        %v889 = vsub.s32 1, %v888
        %v890 = vrot.slane %v881, %v889
        %v891 = vlaneseq
        %v892 = vshrl.u32 %v891, 7
        %v893 = vsub.s32 2, %v892
        %v894 = vrot.slane %v881, %v893
        %v895 = vlaneseq
        %v896 = vshrl.u32 %v895, 7
        %v897 = vsub.s32 3, %v896
        %v898 = vrot.slane %v881, %v897
        %v899 = vlaneseq
        %v900 = vshrl.u32 %v899, 7
        %v901 = vsub.s32 4, %v900
        %v902 = vrot.slane %v881, %v901
        %v903 = vlaneseq
        %v904 = vshrl.u32 %v903, 7
        %v905 = vsub.s32 5, %v904
        %v906 = vrot.slane %v881, %v905
        %v907 = vlaneseq
        %v908 = vshrl.u32 %v907, 7
        %v909 = vsub.s32 6, %v908
        %v910 = vrot.slane %v881, %v909
        %v918 = vadd.f32 %v874, %v886
        %v919 = vadd.f32 %v875, %v890
        %v920 = vadd.f32 %v876, %v894
        %v921 = vadd.f32 %v877, %v898
        %v922 = vadd.f32 %v878, %v902
        %v923 = vadd.f32 %v879, %v906
        %v924 = vadd.f32 %v880, %v910
        %vm925 = vcmp.gt.f32.partialorder %v918, 0.0
        %vm926 = vcmp.gt.f32.partialorder %v919, 0.0
        %vm927 = vcmp.gt.f32.partialorder %v920, 0.0
        %vm928 = vcmp.gt.f32.partialorder %v921, 0.0
        %vm929 = vcmp.gt.f32.partialorder %v922, 0.0
        %vm930 = vcmp.gt.f32.partialorder %v923, 0.0
        %vm931 = vcmp.gt.f32.partialorder %v924, 0.0
        %v932 = vmul.f32 %v918, 0.2
        %v933 = vmul.f32 %v919, 0.2
        %v934 = vmul.f32 %v920, 0.2
        %v935 = vmul.f32 %v921, 0.2
        %v936 = vmul.f32 %v922, 0.2
        %v937 = vmul.f32 %v923, 0.2
        %v938 = vmul.f32 %v924, 0.2
        %v939 = vsel %vm925, %v918, %v932
        %v940 = vsel %vm926, %v919, %v933
        %v941 = vsel %vm927, %v920, %v934
        %v942 = vsel %vm928, %v921, %v935
        %v943 = vsel %vm929, %v922, %v936
        %v944 = vsel %vm930, %v923, %v937
        %v945 = vsel %vm931, %v924, %v938
        %v946 = vpack.c.bf16 %v939, %v939
        %v947 = vpack.c.bf16 %v940, %v940
        %v948 = vpack.c.bf16 %v941, %v941
        %v949 = vpack.c.bf16 %v942, %v942
        %v950 = vpack.c.bf16 %v943, %v943
        %v951 = vpack.c.bf16 %v944, %v944
        %v952 = vpack.c.bf16 %v945, %v945
        %v953 = vld [vmem:[#allocation2] sm:$0xff]
        %v954 = vld [vmem:[#allocation2 + $0x8] sm:$0xff]
        %v955 = vld [vmem:[#allocation2 + $0x10] sm:$0xff]
        %v956 = vld [vmem:[#allocation2 + $0x18] sm:$0xff]
        %v957 = vld [vmem:[%s734] sm:$0xff]
        %v958 = vld [vmem:[%s734 + $0x8] sm:$0xff]
        %v959 = vld [vmem:[%s734 + $0x10] sm:$0xff]
        %v960 = vld [vmem:[%s734 + $0x18] sm:$0xff]
        %v961 = vld [vmem:[%s734 + $0x20] sm:$0xff]
        %v962 = vld [vmem:[%s734 + $0x28] sm:$0xff]
        %v963 = vld [vmem:[%s734 + $0x30] sm:$0xff]
        %v964 = vld [vmem:[%s734 + $0x38] sm:$0xff]
        %v965 = vld [vmem:[%s734 + $0x40] sm:$0xff]
        %v966 = vld [vmem:[%s734 + $0x48] sm:$0xff]
        %v967 = vld [vmem:[%s734 + $0x50] sm:$0xff]
        %v968 = vld [vmem:[%s734 + $0x58] sm:$0xff]
        %v969 = vld [vmem:[%s734 + $0x60] sm:$0xff]
        %v970 = vld [vmem:[%s734 + $0x68] sm:$0xff]
        %v971 = vld [vmem:[%s734 + $0x70] sm:$0xff]
        %v972 = vld [vmem:[%s734 + $0x78] sm:$0xff]
        %v973 = vld [vmem:[%s734 + $0x80] sm:$0xff]
        %v974 = vld [vmem:[%s734 + $0x88] sm:$0xff]
        %v975 = vld [vmem:[%s734 + $0x90] sm:$0xff]
        %v976 = vld [vmem:[%s734 + $0x98] sm:$0xff]
        %v977 = vld [vmem:[%s734 + $0xa0] sm:$0xff]
        %v978 = vld [vmem:[%s734 + $0xa8] sm:$0xff]
        %v979 = vld [vmem:[%s734 + $0xb0] sm:$0xff]
        %v980 = vld [vmem:[%s734 + $0xb8] sm:$0xff]
        %v981 = vld [vmem:[%s734 + $0xc0] sm:$0xff]
        %v982 = vld [vmem:[%s734 + $0xc8] sm:$0xff]
        %v983 = vld [vmem:[%s734 + $0xd0] sm:$0xff]
        %v984 = vld [vmem:[%s734 + $0xd8] sm:$0xff]
        %v985 = vld [vmem:[%s734 + $0xe0] sm:$0xff]
        %v986 = vld [vmem:[%s734 + $0xe8] sm:$0xff]
        %v987 = vld [vmem:[%s734 + $0xf0] sm:$0xff]
        %v988 = vld [vmem:[%s734 + $0xf8] sm:$0xff]
        %v989 = vld [vmem:[%s734 + $0x100] sm:$0xff]
        %v990 = vld [vmem:[%s734 + $0x108] sm:$0xff]
        %v991 = vld [vmem:[%s734 + $0x110] sm:$0xff]
        %v992 = vld [vmem:[%s734 + $0x118] sm:$0xff]
        %v993 = vld [vmem:[%s734 + $0x120] sm:$0xff]
        %v994 = vld [vmem:[%s734 + $0x128] sm:$0xff]
        %v995 = vld [vmem:[%s734 + $0x130] sm:$0xff]
        %v996 = vld [vmem:[%s734 + $0x138] sm:$0xff]
        %v997 = vld [vmem:[%s734 + $0x140] sm:$0xff]
        %v998 = vld [vmem:[%s734 + $0x148] sm:$0xff]
        %v999 = vld [vmem:[%s734 + $0x150] sm:$0xff]
        %v1000 = vld [vmem:[%s734 + $0x158] sm:$0xff]
        %v1001 = vld [vmem:[%s734 + $0x160] sm:$0xff]
        %v1002 = vld [vmem:[%s734 + $0x168] sm:$0xff]
        %v1003 = vld [vmem:[%s734 + $0x170] sm:$0xff]
        %v1004 = vld [vmem:[%s734 + $0x178] sm:$0xff]
        %v1005 = vld [vmem:[%s734 + $0x180] sm:$0xff]
        %v1006 = vld [vmem:[%s734 + $0x188] sm:$0xff]
        %v1007 = vld [vmem:[%s734 + $0x190] sm:$0xff]
        %v1008 = vld [vmem:[%s734 + $0x198] sm:$0xff]
        %v1009 = vld [vmem:[%s734 + $0x1a0] sm:$0xff]
        %v1010 = vld [vmem:[%s734 + $0x1a8] sm:$0xff]
        %v1011 = vld [vmem:[%s734 + $0x1b0] sm:$0xff]
        %v1012 = vld [vmem:[%s734 + $0x1b8] sm:$0xff]
        %v1013 = vld [vmem:[%s734 + $0x1c0] sm:$0xff]
        %v1014 = vld [vmem:[%s734 + $0x1c8] sm:$0xff]
        %v1015 = vld [vmem:[%s734 + $0x1d0] sm:$0xff]
        %v1016 = vld [vmem:[%s734 + $0x1d8] sm:$0xff]
        %v1017 = vld [vmem:[%s734 + $0x1e0] sm:$0xff]
        %v1018 = vld [vmem:[%s734 + $0x1e8] sm:$0xff]
        %v1019 = vld [vmem:[%s734 + $0x1f0] sm:$0xff]
        %v1020 = vld [vmem:[%s734 + $0x1f8] sm:$0xff]
        %v1021 = vld [vmem:[%s734 + $0x200] sm:$0xff]
        %v1022 = vld [vmem:[%s734 + $0x208] sm:$0xff]
        %v1023 = vld [vmem:[%s734 + $0x210] sm:$0xff]
        %v1024 = vld [vmem:[%s734 + $0x218] sm:$0xff]
        %v1025 = vld [vmem:[%s734 + $0x220] sm:$0xff]
        %v1026 = vld [vmem:[%s734 + $0x228] sm:$0xff]
        %v1027 = vld [vmem:[%s734 + $0x230] sm:$0xff]
        %v1028 = vld [vmem:[%s734 + $0x238] sm:$0xff]
        %v1029 = vld [vmem:[%s734 + $0x240] sm:$0xff]
        %v1030 = vld [vmem:[%s734 + $0x248] sm:$0xff]
        %v1031 = vld [vmem:[%s734 + $0x250] sm:$0xff]
        %v1032 = vld [vmem:[%s734 + $0x258] sm:$0xff]
        %v1033 = vld [vmem:[%s734 + $0x260] sm:$0xff]
        %v1034 = vld [vmem:[%s734 + $0x268] sm:$0xff]
        %v1035 = vld [vmem:[%s734 + $0x270] sm:$0xff]
        %v1036 = vld [vmem:[%s734 + $0x278] sm:$0xff]
        %v1037 = vld [vmem:[%s734 + $0x280] sm:$0xff]
        %v1038 = vld [vmem:[%s734 + $0x288] sm:$0xff]
        %v1039 = vld [vmem:[%s734 + $0x290] sm:$0xff]
        %v1040 = vld [vmem:[%s734 + $0x298] sm:$0xff]
        %v1041 = vld [vmem:[%s734 + $0x2a0] sm:$0xff]
        %v1042 = vld [vmem:[%s734 + $0x2a8] sm:$0xff]
        %v1043 = vld [vmem:[%s734 + $0x2b0] sm:$0xff]
        %v1044 = vld [vmem:[%s734 + $0x2b8] sm:$0xff]
        %v1045 = vld [vmem:[%s734 + $0x2c0] sm:$0xff]
        %v1046 = vld [vmem:[%s734 + $0x2c8] sm:$0xff]
        %v1047 = vld [vmem:[%s734 + $0x2d0] sm:$0xff]
        %v1048 = vld [vmem:[%s734 + $0x2d8] sm:$0xff]
        %v1049 = vld [vmem:[%s734 + $0x2e0] sm:$0xff]
        %v1050 = vld [vmem:[%s734 + $0x2e8] sm:$0xff]
        %v1051 = vld [vmem:[%s734 + $0x2f0] sm:$0xff]
        %v1052 = vld [vmem:[%s734 + $0x2f8] sm:$0xff]
        %v1053 = vld [vmem:[%s734 + $0x300] sm:$0xff]
        %v1054 = vld [vmem:[%s734 + $0x308] sm:$0xff]
        %v1055 = vld [vmem:[%s734 + $0x310] sm:$0xff]
        %v1056 = vld [vmem:[%s734 + $0x318] sm:$0xff]
        %v1057 = vld [vmem:[%s734 + $0x320] sm:$0xff]
        %v1058 = vld [vmem:[%s734 + $0x328] sm:$0xff]
        %v1059 = vld [vmem:[%s734 + $0x330] sm:$0xff]
        %v1060 = vld [vmem:[%s734 + $0x338] sm:$0xff]
        %v1061 = vld [vmem:[%s734 + $0x340] sm:$0xff]
        %v1062 = vld [vmem:[%s734 + $0x348] sm:$0xff]
        %v1063 = vld [vmem:[%s734 + $0x350] sm:$0xff]
        %v1064 = vld [vmem:[%s734 + $0x358] sm:$0xff]
        %v1065 = vld [vmem:[%s734 + $0x360] sm:$0xff]
        %v1066 = vld [vmem:[%s734 + $0x368] sm:$0xff]
        %v1067 = vld [vmem:[%s734 + $0x370] sm:$0xff]
        %v1068 = vld [vmem:[%s734 + $0x378] sm:$0xff]
        %v1069 = vld [vmem:[%s734 + $0x380] sm:$0xff]
        %v1070 = vld [vmem:[%s734 + $0x388] sm:$0xff]
        %v1071 = vld [vmem:[%s734 + $0x390] sm:$0xff]
        %v1072 = vld [vmem:[%s734 + $0x398] sm:$0xff]
        %v1073 = vld [vmem:[%s734 + $0x3a0] sm:$0xff]
        %v1074 = vld [vmem:[%s734 + $0x3a8] sm:$0xff]
        %v1075 = vld [vmem:[%s734 + $0x3b0] sm:$0xff]
        %v1076 = vld [vmem:[%s734 + $0x3b8] sm:$0xff]
        %v1077 = vld [vmem:[%s734 + $0x3c0] sm:$0xff]
        %v1078 = vld [vmem:[%s734 + $0x3c8] sm:$0xff]
        %v1079 = vld [vmem:[%s734 + $0x3d0] sm:$0xff]
        %v1080 = vld [vmem:[%s734 + $0x3d8] sm:$0xff]
        %v1081 = vld [vmem:[%s734 + $0x3e0] sm:$0xff]
        %v1082 = vld [vmem:[%s734 + $0x3e8] sm:$0xff]
        %v1083 = vld [vmem:[%s734 + $0x3f0] sm:$0xff]
        %v1084 = vld [vmem:[%s734 + $0x3f8] sm:$0xff]
        %v1085 = vld [vmem:[%s734 + $0x400] sm:$0xff]
        %v1086 = vld [vmem:[%s734 + $0x408] sm:$0xff]
        %v1087 = vld [vmem:[%s734 + $0x410] sm:$0xff]
        %v1088 = vld [vmem:[%s734 + $0x418] sm:$0xff]
        %v1089 = vld [vmem:[%s734 + $0x420] sm:$0xff]
        %v1090 = vld [vmem:[%s734 + $0x428] sm:$0xff]
        %v1091 = vld [vmem:[%s734 + $0x430] sm:$0xff]
        %v1092 = vld [vmem:[%s734 + $0x438] sm:$0xff]
        %v1093 = vld [vmem:[%s734 + $0x440] sm:$0xff]
        %v1094 = vld [vmem:[%s734 + $0x448] sm:$0xff]
        %v1095 = vld [vmem:[%s734 + $0x450] sm:$0xff]
        %v1096 = vld [vmem:[%s734 + $0x458] sm:$0xff]
        %v1097 = vld [vmem:[%s734 + $0x460] sm:$0xff]
        %v1098 = vld [vmem:[%s734 + $0x468] sm:$0xff]
        %v1099 = vld [vmem:[%s734 + $0x470] sm:$0xff]
        %v1100 = vld [vmem:[%s734 + $0x478] sm:$0xff]
        %v1101 = vld [vmem:[%s734 + $0x480] sm:$0xff]
        %v1102 = vld [vmem:[%s734 + $0x488] sm:$0xff]
        %v1103 = vld [vmem:[%s734 + $0x490] sm:$0xff]
        %v1104 = vld [vmem:[%s734 + $0x498] sm:$0xff]
        %v1105 = vld [vmem:[%s734 + $0x4a0] sm:$0xff]
        %v1106 = vld [vmem:[%s734 + $0x4a8] sm:$0xff]
        %v1107 = vld [vmem:[%s734 + $0x4b0] sm:$0xff]
        %v1108 = vld [vmem:[%s734 + $0x4b8] sm:$0xff]
        %v1109 = vld [vmem:[%s734 + $0x4c0] sm:$0xff]
        %v1110 = vld [vmem:[%s734 + $0x4c8] sm:$0xff]
        %v1111 = vld [vmem:[%s734 + $0x4d0] sm:$0xff]
        %v1112 = vld [vmem:[%s734 + $0x4d8] sm:$0xff]
        %v1113 = vld [vmem:[%s734 + $0x4e0] sm:$0xff]
        %v1114 = vld [vmem:[%s734 + $0x4e8] sm:$0xff]
        %v1115 = vld [vmem:[%s734 + $0x4f0] sm:$0xff]
        %v1116 = vld [vmem:[%s734 + $0x4f8] sm:$0xff]
        %v1117 = vld [vmem:[%s734 + $0x500] sm:$0xff]
        %v1118 = vld [vmem:[%s734 + $0x508] sm:$0xff]
        %v1119 = vld [vmem:[%s734 + $0x510] sm:$0xff]
        %v1120 = vld [vmem:[%s734 + $0x518] sm:$0xff]
        %v1121 = vld [vmem:[%s734 + $0x520] sm:$0xff]
        %v1122 = vld [vmem:[%s734 + $0x528] sm:$0xff]
        %v1123 = vld [vmem:[%s734 + $0x530] sm:$0xff]
        %v1124 = vld [vmem:[%s734 + $0x538] sm:$0xff]
        %v1125 = vld [vmem:[%s734 + $0x540] sm:$0xff]
        %v1126 = vld [vmem:[%s734 + $0x548] sm:$0xff]
        %v1127 = vld [vmem:[%s734 + $0x550] sm:$0xff]
        %v1128 = vld [vmem:[%s734 + $0x558] sm:$0xff]
        %v1129 = vld [vmem:[%s734 + $0x560] sm:$0xff]
        %v1130 = vld [vmem:[%s734 + $0x568] sm:$0xff]
        %v1131 = vld [vmem:[%s734 + $0x570] sm:$0xff]
        %v1132 = vld [vmem:[%s734 + $0x578] sm:$0xff]
        %v1133 = vld [vmem:[%s734 + $0x580] sm:$0xff]
        %v1134 = vld [vmem:[%s734 + $0x588] sm:$0xff]
        %v1135 = vld [vmem:[%s734 + $0x590] sm:$0xff]
        %v1136 = vld [vmem:[%s734 + $0x598] sm:$0xff]
        %v1137 = vld [vmem:[%s734 + $0x5a0] sm:$0xff]
        %v1138 = vld [vmem:[%s734 + $0x5a8] sm:$0xff]
        %v1139 = vld [vmem:[%s734 + $0x5b0] sm:$0xff]
        %v1140 = vld [vmem:[%s734 + $0x5b8] sm:$0xff]
        %v1141 = vld [vmem:[%s734 + $0x5c0] sm:$0xff]
        %v1142 = vld [vmem:[%s734 + $0x5c8] sm:$0xff]
        %v1143 = vld [vmem:[%s734 + $0x5d0] sm:$0xff]
        %v1144 = vld [vmem:[%s734 + $0x5d8] sm:$0xff]
        %v1145 = vld [vmem:[%s734 + $0x5e0] sm:$0xff]
        %v1146 = vld [vmem:[%s734 + $0x5e8] sm:$0xff]
        %v1147 = vld [vmem:[%s734 + $0x5f0] sm:$0xff]
        %v1148 = vld [vmem:[%s734 + $0x5f8] sm:$0xff]
        %v1149 = vld [vmem:[%s734 + $0x600] sm:$0xff]
        %v1150 = vld [vmem:[%s734 + $0x608] sm:$0xff]
        %v1151 = vld [vmem:[%s734 + $0x610] sm:$0xff]
        %v1152 = vld [vmem:[%s734 + $0x618] sm:$0xff]
        %v1153 = vld [vmem:[%s734 + $0x620] sm:$0xff]
        %v1154 = vld [vmem:[%s734 + $0x628] sm:$0xff]
        %v1155 = vld [vmem:[%s734 + $0x630] sm:$0xff]
        %v1156 = vld [vmem:[%s734 + $0x638] sm:$0xff]
        %v1157 = vld [vmem:[%s734 + $0x640] sm:$0xff]
        %v1158 = vld [vmem:[%s734 + $0x648] sm:$0xff]
        %v1159 = vld [vmem:[%s734 + $0x650] sm:$0xff]
        %v1160 = vld [vmem:[%s734 + $0x658] sm:$0xff]
        %v1161 = vld [vmem:[%s734 + $0x660] sm:$0xff]
        %v1162 = vld [vmem:[%s734 + $0x668] sm:$0xff]
        %v1163 = vld [vmem:[%s734 + $0x670] sm:$0xff]
        %v1164 = vld [vmem:[%s734 + $0x678] sm:$0xff]
        %v1165 = vld [vmem:[%s734 + $0x680] sm:$0xff]
        %v1166 = vld [vmem:[%s734 + $0x688] sm:$0xff]
        %v1167 = vld [vmem:[%s734 + $0x690] sm:$0xff]
        %v1168 = vld [vmem:[%s734 + $0x698] sm:$0xff]
        %v1169 = vld [vmem:[%s734 + $0x6a0] sm:$0xff]
        %v1170 = vld [vmem:[%s734 + $0x6a8] sm:$0xff]
        %v1171 = vld [vmem:[%s734 + $0x6b0] sm:$0xff]
        %v1172 = vld [vmem:[%s734 + $0x6b8] sm:$0xff]
        %v1173 = vld [vmem:[%s734 + $0x6c0] sm:$0xff]
        %v1174 = vld [vmem:[%s734 + $0x6c8] sm:$0xff]
        %v1175 = vld [vmem:[%s734 + $0x6d0] sm:$0xff]
        %v1176 = vld [vmem:[%s734 + $0x6d8] sm:$0xff]
        %v1177 = vld [vmem:[%s734 + $0x6e0] sm:$0xff]
        %v1178 = vld [vmem:[%s734 + $0x6e8] sm:$0xff]
        %v1179 = vld [vmem:[%s734 + $0x6f0] sm:$0xff]
        %v1180 = vld [vmem:[%s734 + $0x6f8] sm:$0xff]
        %v1405 = vunpack.c.l.b16 %v957
        %v1406 = vunpack.c.h.b16 %v957
        %v1407 = vunpack.c.l.b16 %v958
        %v1408 = vunpack.c.h.b16 %v958
        %v1409 = vunpack.c.l.b16 %v959
        %v1410 = vunpack.c.h.b16 %v959
        %v1411 = vunpack.c.l.b16 %v960
        %v1412 = vunpack.c.h.b16 %v960
        %v1413 = vunpack.c.l.b16 %v961
        %v1414 = vunpack.c.h.b16 %v961
        %v1415 = vunpack.c.l.b16 %v962
        %v1416 = vunpack.c.h.b16 %v962
        %v1417 = vunpack.c.l.b16 %v963
        %v1418 = vunpack.c.h.b16 %v963
        %v1419 = vunpack.c.l.b16 %v964
        %v1420 = vunpack.c.h.b16 %v964
        %v1421 = vunpack.c.l.b16 %v965
        %v1422 = vunpack.c.h.b16 %v965
        %v1423 = vunpack.c.l.b16 %v966
        %v1424 = vunpack.c.h.b16 %v966
        %v1425 = vunpack.c.l.b16 %v967
        %v1426 = vunpack.c.h.b16 %v967
        %v1427 = vunpack.c.l.b16 %v968
        %v1428 = vunpack.c.h.b16 %v968
        %v1429 = vunpack.c.l.b16 %v969
        %v1430 = vunpack.c.h.b16 %v969
        %v1431 = vunpack.c.l.b16 %v970
        %v1432 = vunpack.c.h.b16 %v970
        %v1433 = vunpack.c.l.b16 %v971
        %v1434 = vunpack.c.h.b16 %v971
        %v1435 = vunpack.c.l.b16 %v972
        %v1436 = vunpack.c.h.b16 %v972
        %v1437 = vunpack.c.l.b16 %v973
        %v1438 = vunpack.c.h.b16 %v973
        %v1439 = vunpack.c.l.b16 %v974
        %v1440 = vunpack.c.h.b16 %v974
        %v1441 = vunpack.c.l.b16 %v975
        %v1442 = vunpack.c.h.b16 %v975
        %v1443 = vunpack.c.l.b16 %v976
        %v1444 = vunpack.c.h.b16 %v976
        %v1445 = vunpack.c.l.b16 %v977
        %v1446 = vunpack.c.h.b16 %v977
        %v1447 = vunpack.c.l.b16 %v978
        %v1448 = vunpack.c.h.b16 %v978
        %v1449 = vunpack.c.l.b16 %v979
        %v1450 = vunpack.c.h.b16 %v979
        %v1451 = vunpack.c.l.b16 %v980
        %v1452 = vunpack.c.h.b16 %v980
        %v1453 = vunpack.c.l.b16 %v981
        %v1454 = vunpack.c.h.b16 %v981
        %v1455 = vunpack.c.l.b16 %v982
        %v1456 = vunpack.c.h.b16 %v982
        %v1457 = vunpack.c.l.b16 %v983
        %v1458 = vunpack.c.h.b16 %v983
        %v1459 = vunpack.c.l.b16 %v984
        %v1460 = vunpack.c.h.b16 %v984
        %v1461 = vunpack.c.l.b16 %v985
        %v1462 = vunpack.c.h.b16 %v985
        %v1463 = vunpack.c.l.b16 %v986
        %v1464 = vunpack.c.h.b16 %v986
        %v1465 = vunpack.c.l.b16 %v987
        %v1466 = vunpack.c.h.b16 %v987
        %v1467 = vunpack.c.l.b16 %v988
        %v1468 = vunpack.c.h.b16 %v988
        %v1469 = vunpack.c.l.b16 %v989
        %v1470 = vunpack.c.h.b16 %v989
        %v1471 = vunpack.c.l.b16 %v990
        %v1472 = vunpack.c.h.b16 %v990
        %v1473 = vunpack.c.l.b16 %v991
        %v1474 = vunpack.c.h.b16 %v991
        %v1475 = vunpack.c.l.b16 %v992
        %v1476 = vunpack.c.h.b16 %v992
        %v1477 = vunpack.c.l.b16 %v993
        %v1478 = vunpack.c.h.b16 %v993
        %v1479 = vunpack.c.l.b16 %v994
        %v1480 = vunpack.c.h.b16 %v994
        %v1481 = vunpack.c.l.b16 %v995
        %v1482 = vunpack.c.h.b16 %v995
        %v1483 = vunpack.c.l.b16 %v996
        %v1484 = vunpack.c.h.b16 %v996
        %v1485 = vunpack.c.l.b16 %v997
        %v1486 = vunpack.c.h.b16 %v997
        %v1487 = vunpack.c.l.b16 %v998
        %v1488 = vunpack.c.h.b16 %v998
        %v1489 = vunpack.c.l.b16 %v999
        %v1490 = vunpack.c.h.b16 %v999
        %v1491 = vunpack.c.l.b16 %v1000
        %v1492 = vunpack.c.h.b16 %v1000
        %v1493 = vunpack.c.l.b16 %v1001
        %v1494 = vunpack.c.h.b16 %v1001
        %v1495 = vunpack.c.l.b16 %v1002
        %v1496 = vunpack.c.h.b16 %v1002
        %v1497 = vunpack.c.l.b16 %v1003
        %v1498 = vunpack.c.h.b16 %v1003
        %v1499 = vunpack.c.l.b16 %v1004
        %v1500 = vunpack.c.h.b16 %v1004
        %v1501 = vunpack.c.l.b16 %v1005
        %v1502 = vunpack.c.h.b16 %v1005
        %v1503 = vunpack.c.l.b16 %v1006
        %v1504 = vunpack.c.h.b16 %v1006
        %v1505 = vunpack.c.l.b16 %v1007
        %v1506 = vunpack.c.h.b16 %v1007
        %v1507 = vunpack.c.l.b16 %v1008
        %v1508 = vunpack.c.h.b16 %v1008
        %v1509 = vunpack.c.l.b16 %v1009
        %v1510 = vunpack.c.h.b16 %v1009
        %v1511 = vunpack.c.l.b16 %v1010
        %v1512 = vunpack.c.h.b16 %v1010
        %v1513 = vunpack.c.l.b16 %v1011
        %v1514 = vunpack.c.h.b16 %v1011
        %v1515 = vunpack.c.l.b16 %v1012
        %v1516 = vunpack.c.h.b16 %v1012
        %v1517 = vunpack.c.l.b16 %v1013
        %v1518 = vunpack.c.h.b16 %v1013
        %v1519 = vunpack.c.l.b16 %v1014
        %v1520 = vunpack.c.h.b16 %v1014
        %v1521 = vunpack.c.l.b16 %v1015
        %v1522 = vunpack.c.h.b16 %v1015
        %v1523 = vunpack.c.l.b16 %v1016
        %v1524 = vunpack.c.h.b16 %v1016
        %v1525 = vunpack.c.l.b16 %v1017
        %v1526 = vunpack.c.h.b16 %v1017
        %v1527 = vunpack.c.l.b16 %v1018
        %v1528 = vunpack.c.h.b16 %v1018
        %v1529 = vunpack.c.l.b16 %v1019
        %v1530 = vunpack.c.h.b16 %v1019
        %v1531 = vunpack.c.l.b16 %v1020
        %v1532 = vunpack.c.h.b16 %v1020
        %v1533 = vunpack.c.l.b16 %v1021
        %v1534 = vunpack.c.h.b16 %v1021
        %v1535 = vunpack.c.l.b16 %v1022
        %v1536 = vunpack.c.h.b16 %v1022
        %v1537 = vunpack.c.l.b16 %v1023
        %v1538 = vunpack.c.h.b16 %v1023
        %v1539 = vunpack.c.l.b16 %v1024
        %v1540 = vunpack.c.h.b16 %v1024
        %v1541 = vunpack.c.l.b16 %v1025
        %v1542 = vunpack.c.h.b16 %v1025
        %v1543 = vunpack.c.l.b16 %v1026
        %v1544 = vunpack.c.h.b16 %v1026
        %v1545 = vunpack.c.l.b16 %v1027
        %v1546 = vunpack.c.h.b16 %v1027
        %v1547 = vunpack.c.l.b16 %v1028
        %v1548 = vunpack.c.h.b16 %v1028
        %v1549 = vunpack.c.l.b16 %v1029
        %v1550 = vunpack.c.h.b16 %v1029
        %v1551 = vunpack.c.l.b16 %v1030
        %v1552 = vunpack.c.h.b16 %v1030
        %v1553 = vunpack.c.l.b16 %v1031
        %v1554 = vunpack.c.h.b16 %v1031
        %v1555 = vunpack.c.l.b16 %v1032
        %v1556 = vunpack.c.h.b16 %v1032
        %v1557 = vunpack.c.l.b16 %v1033
        %v1558 = vunpack.c.h.b16 %v1033
        %v1559 = vunpack.c.l.b16 %v1034
        %v1560 = vunpack.c.h.b16 %v1034
        %v1561 = vunpack.c.l.b16 %v1035
        %v1562 = vunpack.c.h.b16 %v1035
        %v1563 = vunpack.c.l.b16 %v1036
        %v1564 = vunpack.c.h.b16 %v1036
        %v1565 = vunpack.c.l.b16 %v1037
        %v1566 = vunpack.c.h.b16 %v1037
        %v1567 = vunpack.c.l.b16 %v1038
        %v1568 = vunpack.c.h.b16 %v1038
        %v1569 = vunpack.c.l.b16 %v1039
        %v1570 = vunpack.c.h.b16 %v1039
        %v1571 = vunpack.c.l.b16 %v1040
        %v1572 = vunpack.c.h.b16 %v1040
        %v1573 = vunpack.c.l.b16 %v1041
        %v1574 = vunpack.c.h.b16 %v1041
        %v1575 = vunpack.c.l.b16 %v1042
        %v1576 = vunpack.c.h.b16 %v1042
        %v1577 = vunpack.c.l.b16 %v1043
        %v1578 = vunpack.c.h.b16 %v1043
        %v1579 = vunpack.c.l.b16 %v1044
        %v1580 = vunpack.c.h.b16 %v1044
        %v1581 = vunpack.c.l.b16 %v1045
        %v1582 = vunpack.c.h.b16 %v1045
        %v1583 = vunpack.c.l.b16 %v1046
        %v1584 = vunpack.c.h.b16 %v1046
        %v1585 = vunpack.c.l.b16 %v1047
        %v1586 = vunpack.c.h.b16 %v1047
        %v1587 = vunpack.c.l.b16 %v1048
        %v1588 = vunpack.c.h.b16 %v1048
        %v1589 = vunpack.c.l.b16 %v1049
        %v1590 = vunpack.c.h.b16 %v1049
        %v1591 = vunpack.c.l.b16 %v1050
        %v1592 = vunpack.c.h.b16 %v1050
        %v1593 = vunpack.c.l.b16 %v1051
        %v1594 = vunpack.c.h.b16 %v1051
        %v1595 = vunpack.c.l.b16 %v1052
        %v1596 = vunpack.c.h.b16 %v1052
        %v1597 = vunpack.c.l.b16 %v1053
        %v1598 = vunpack.c.h.b16 %v1053
        %v1599 = vunpack.c.l.b16 %v1054
        %v1600 = vunpack.c.h.b16 %v1054
        %v1601 = vunpack.c.l.b16 %v1055
        %v1602 = vunpack.c.h.b16 %v1055
        %v1603 = vunpack.c.l.b16 %v1056
        %v1604 = vunpack.c.h.b16 %v1056
        %v1605 = vunpack.c.l.b16 %v1057
        %v1606 = vunpack.c.h.b16 %v1057
        %v1607 = vunpack.c.l.b16 %v1058
        %v1608 = vunpack.c.h.b16 %v1058
        %v1609 = vunpack.c.l.b16 %v1059
        %v1610 = vunpack.c.h.b16 %v1059
        %v1611 = vunpack.c.l.b16 %v1060
        %v1612 = vunpack.c.h.b16 %v1060
        %v1613 = vunpack.c.l.b16 %v1061
        %v1614 = vunpack.c.h.b16 %v1061
        %v1615 = vunpack.c.l.b16 %v1062
        %v1616 = vunpack.c.h.b16 %v1062
        %v1617 = vunpack.c.l.b16 %v1063
        %v1618 = vunpack.c.h.b16 %v1063
        %v1619 = vunpack.c.l.b16 %v1064
        %v1620 = vunpack.c.h.b16 %v1064
        %v1621 = vunpack.c.l.b16 %v1065
        %v1622 = vunpack.c.h.b16 %v1065
        %v1623 = vunpack.c.l.b16 %v1066
        %v1624 = vunpack.c.h.b16 %v1066
        %v1625 = vunpack.c.l.b16 %v1067
        %v1626 = vunpack.c.h.b16 %v1067
        %v1627 = vunpack.c.l.b16 %v1068
        %v1628 = vunpack.c.h.b16 %v1068
        %v1629 = vunpack.c.l.b16 %v1069
        %v1630 = vunpack.c.h.b16 %v1069
        %v1631 = vunpack.c.l.b16 %v1070
        %v1632 = vunpack.c.h.b16 %v1070
        %v1633 = vunpack.c.l.b16 %v1071
        %v1634 = vunpack.c.h.b16 %v1071
        %v1635 = vunpack.c.l.b16 %v1072
        %v1636 = vunpack.c.h.b16 %v1072
        %v1637 = vunpack.c.l.b16 %v1073
        %v1638 = vunpack.c.h.b16 %v1073
        %v1639 = vunpack.c.l.b16 %v1074
        %v1640 = vunpack.c.h.b16 %v1074
        %v1641 = vunpack.c.l.b16 %v1075
        %v1642 = vunpack.c.h.b16 %v1075
        %v1643 = vunpack.c.l.b16 %v1076
        %v1644 = vunpack.c.h.b16 %v1076
        %v1645 = vunpack.c.l.b16 %v1077
        %v1646 = vunpack.c.h.b16 %v1077
        %v1647 = vunpack.c.l.b16 %v1078
        %v1648 = vunpack.c.h.b16 %v1078
        %v1649 = vunpack.c.l.b16 %v1079
        %v1650 = vunpack.c.h.b16 %v1079
        %v1651 = vunpack.c.l.b16 %v1080
        %v1652 = vunpack.c.h.b16 %v1080
        %v1653 = vunpack.c.l.b16 %v1081
        %v1654 = vunpack.c.h.b16 %v1081
        %v1655 = vunpack.c.l.b16 %v1082
        %v1656 = vunpack.c.h.b16 %v1082
        %v1657 = vunpack.c.l.b16 %v1083
        %v1658 = vunpack.c.h.b16 %v1083
        %v1659 = vunpack.c.l.b16 %v1084
        %v1660 = vunpack.c.h.b16 %v1084
        %v1661 = vunpack.c.l.b16 %v1085
        %v1662 = vunpack.c.h.b16 %v1085
        %v1663 = vunpack.c.l.b16 %v1086
        %v1664 = vunpack.c.h.b16 %v1086
        %v1665 = vunpack.c.l.b16 %v1087
        %v1666 = vunpack.c.h.b16 %v1087
        %v1667 = vunpack.c.l.b16 %v1088
        %v1668 = vunpack.c.h.b16 %v1088
        %v1669 = vunpack.c.l.b16 %v1089
        %v1670 = vunpack.c.h.b16 %v1089
        %v1671 = vunpack.c.l.b16 %v1090
        %v1672 = vunpack.c.h.b16 %v1090
        %v1673 = vunpack.c.l.b16 %v1091
        %v1674 = vunpack.c.h.b16 %v1091
        %v1675 = vunpack.c.l.b16 %v1092
        %v1676 = vunpack.c.h.b16 %v1092
        %v1677 = vunpack.c.l.b16 %v1093
        %v1678 = vunpack.c.h.b16 %v1093
        %v1679 = vunpack.c.l.b16 %v1094
        %v1680 = vunpack.c.h.b16 %v1094
        %v1681 = vunpack.c.l.b16 %v1095
        %v1682 = vunpack.c.h.b16 %v1095
        %v1683 = vunpack.c.l.b16 %v1096
        %v1684 = vunpack.c.h.b16 %v1096
        %v1685 = vunpack.c.l.b16 %v1097
        %v1686 = vunpack.c.h.b16 %v1097
        %v1687 = vunpack.c.l.b16 %v1098
        %v1688 = vunpack.c.h.b16 %v1098
        %v1689 = vunpack.c.l.b16 %v1099
        %v1690 = vunpack.c.h.b16 %v1099
        %v1691 = vunpack.c.l.b16 %v1100
        %v1692 = vunpack.c.h.b16 %v1100
        %v1693 = vunpack.c.l.b16 %v1101
        %v1694 = vunpack.c.h.b16 %v1101
        %v1695 = vunpack.c.l.b16 %v1102
        %v1696 = vunpack.c.h.b16 %v1102
        %v1697 = vunpack.c.l.b16 %v1103
        %v1698 = vunpack.c.h.b16 %v1103
        %v1699 = vunpack.c.l.b16 %v1104
        %v1700 = vunpack.c.h.b16 %v1104
        %v1701 = vunpack.c.l.b16 %v1105
        %v1702 = vunpack.c.h.b16 %v1105
        %v1703 = vunpack.c.l.b16 %v1106
        %v1704 = vunpack.c.h.b16 %v1106
        %v1705 = vunpack.c.l.b16 %v1107
        %v1706 = vunpack.c.h.b16 %v1107
        %v1707 = vunpack.c.l.b16 %v1108
        %v1708 = vunpack.c.h.b16 %v1108
        %v1709 = vunpack.c.l.b16 %v1109
        %v1710 = vunpack.c.h.b16 %v1109
        %v1711 = vunpack.c.l.b16 %v1110
        %v1712 = vunpack.c.h.b16 %v1110
        %v1713 = vunpack.c.l.b16 %v1111
        %v1714 = vunpack.c.h.b16 %v1111
        %v1715 = vunpack.c.l.b16 %v1112
        %v1716 = vunpack.c.h.b16 %v1112
        %v1717 = vunpack.c.l.b16 %v1113
        %v1718 = vunpack.c.h.b16 %v1113
        %v1719 = vunpack.c.l.b16 %v1114
        %v1720 = vunpack.c.h.b16 %v1114
        %v1721 = vunpack.c.l.b16 %v1115
        %v1722 = vunpack.c.h.b16 %v1115
        %v1723 = vunpack.c.l.b16 %v1116
        %v1724 = vunpack.c.h.b16 %v1116
        %v1725 = vunpack.c.l.b16 %v1117
        %v1726 = vunpack.c.h.b16 %v1117
        %v1727 = vunpack.c.l.b16 %v1118
        %v1728 = vunpack.c.h.b16 %v1118
        %v1729 = vunpack.c.l.b16 %v1119
        %v1730 = vunpack.c.h.b16 %v1119
        %v1731 = vunpack.c.l.b16 %v1120
        %v1732 = vunpack.c.h.b16 %v1120
        %v1733 = vunpack.c.l.b16 %v1121
        %v1734 = vunpack.c.h.b16 %v1121
        %v1735 = vunpack.c.l.b16 %v1122
        %v1736 = vunpack.c.h.b16 %v1122
        %v1737 = vunpack.c.l.b16 %v1123
        %v1738 = vunpack.c.h.b16 %v1123
        %v1739 = vunpack.c.l.b16 %v1124
        %v1740 = vunpack.c.h.b16 %v1124
        %v1741 = vunpack.c.l.b16 %v1125
        %v1742 = vunpack.c.h.b16 %v1125
        %v1743 = vunpack.c.l.b16 %v1126
        %v1744 = vunpack.c.h.b16 %v1126
        %v1745 = vunpack.c.l.b16 %v1127
        %v1746 = vunpack.c.h.b16 %v1127
        %v1747 = vunpack.c.l.b16 %v1128
        %v1748 = vunpack.c.h.b16 %v1128
        %v1749 = vunpack.c.l.b16 %v1129
        %v1750 = vunpack.c.h.b16 %v1129
        %v1751 = vunpack.c.l.b16 %v1130
        %v1752 = vunpack.c.h.b16 %v1130
        %v1753 = vunpack.c.l.b16 %v1131
        %v1754 = vunpack.c.h.b16 %v1131
        %v1755 = vunpack.c.l.b16 %v1132
        %v1756 = vunpack.c.h.b16 %v1132
        %v1757 = vunpack.c.l.b16 %v1133
        %v1758 = vunpack.c.h.b16 %v1133
        %v1759 = vunpack.c.l.b16 %v1134
        %v1760 = vunpack.c.h.b16 %v1134
        %v1761 = vunpack.c.l.b16 %v1135
        %v1762 = vunpack.c.h.b16 %v1135
        %v1763 = vunpack.c.l.b16 %v1136
        %v1764 = vunpack.c.h.b16 %v1136
        %v1765 = vunpack.c.l.b16 %v1137
        %v1766 = vunpack.c.h.b16 %v1137
        %v1767 = vunpack.c.l.b16 %v1138
        %v1768 = vunpack.c.h.b16 %v1138
        %v1769 = vunpack.c.l.b16 %v1139
        %v1770 = vunpack.c.h.b16 %v1139
        %v1771 = vunpack.c.l.b16 %v1140
        %v1772 = vunpack.c.h.b16 %v1140
        %v1773 = vunpack.c.l.b16 %v1141
        %v1774 = vunpack.c.h.b16 %v1141
        %v1775 = vunpack.c.l.b16 %v1142
        %v1776 = vunpack.c.h.b16 %v1142
        %v1777 = vunpack.c.l.b16 %v1143
        %v1778 = vunpack.c.h.b16 %v1143
        %v1779 = vunpack.c.l.b16 %v1144
        %v1780 = vunpack.c.h.b16 %v1144
        %v1781 = vunpack.c.l.b16 %v1145
        %v1782 = vunpack.c.h.b16 %v1145
        %v1783 = vunpack.c.l.b16 %v1146
        %v1784 = vunpack.c.h.b16 %v1146
        %v1785 = vunpack.c.l.b16 %v1147
        %v1786 = vunpack.c.h.b16 %v1147
        %v1787 = vunpack.c.l.b16 %v1148
        %v1788 = vunpack.c.h.b16 %v1148
        %v1789 = vunpack.c.l.b16 %v1149
        %v1790 = vunpack.c.h.b16 %v1149
        %v1791 = vunpack.c.l.b16 %v1150
        %v1792 = vunpack.c.h.b16 %v1150
        %v1793 = vunpack.c.l.b16 %v1151
        %v1794 = vunpack.c.h.b16 %v1151
        %v1795 = vunpack.c.l.b16 %v1152
        %v1796 = vunpack.c.h.b16 %v1152
        %v1797 = vunpack.c.l.b16 %v1153
        %v1798 = vunpack.c.h.b16 %v1153
        %v1799 = vunpack.c.l.b16 %v1154
        %v1800 = vunpack.c.h.b16 %v1154
        %v1801 = vunpack.c.l.b16 %v1155
        %v1802 = vunpack.c.h.b16 %v1155
        %v1803 = vunpack.c.l.b16 %v1156
        %v1804 = vunpack.c.h.b16 %v1156
        %v1805 = vunpack.c.l.b16 %v1157
        %v1806 = vunpack.c.h.b16 %v1157
        %v1807 = vunpack.c.l.b16 %v1158
        %v1808 = vunpack.c.h.b16 %v1158
        %v1809 = vunpack.c.l.b16 %v1159
        %v1810 = vunpack.c.h.b16 %v1159
        %v1811 = vunpack.c.l.b16 %v1160
        %v1812 = vunpack.c.h.b16 %v1160
        %v1813 = vunpack.c.l.b16 %v1161
        %v1814 = vunpack.c.h.b16 %v1161
        %v1815 = vunpack.c.l.b16 %v1162
        %v1816 = vunpack.c.h.b16 %v1162
        %v1817 = vunpack.c.l.b16 %v1163
        %v1818 = vunpack.c.h.b16 %v1163
        %v1819 = vunpack.c.l.b16 %v1164
        %v1820 = vunpack.c.h.b16 %v1164
        %v1821 = vunpack.c.l.b16 %v1165
        %v1822 = vunpack.c.h.b16 %v1165
        %v1823 = vunpack.c.l.b16 %v1166
        %v1824 = vunpack.c.h.b16 %v1166
        %v1825 = vunpack.c.l.b16 %v1167
        %v1826 = vunpack.c.h.b16 %v1167
        %v1827 = vunpack.c.l.b16 %v1168
        %v1828 = vunpack.c.h.b16 %v1168
        %v1829 = vunpack.c.l.b16 %v1169
        %v1830 = vunpack.c.h.b16 %v1169
        %v1831 = vunpack.c.l.b16 %v1170
        %v1832 = vunpack.c.h.b16 %v1170
        %v1833 = vunpack.c.l.b16 %v1171
        %v1834 = vunpack.c.h.b16 %v1171
        %v1835 = vunpack.c.l.b16 %v1172
        %v1836 = vunpack.c.h.b16 %v1172
        %v1837 = vunpack.c.l.b16 %v1173
        %v1838 = vunpack.c.h.b16 %v1173
        %v1839 = vunpack.c.l.b16 %v1174
        %v1840 = vunpack.c.h.b16 %v1174
        %v1841 = vunpack.c.l.b16 %v1175
        %v1842 = vunpack.c.h.b16 %v1175
        %v1843 = vunpack.c.l.b16 %v1176
        %v1844 = vunpack.c.h.b16 %v1176
        %v1845 = vunpack.c.l.b16 %v1177
        %v1846 = vunpack.c.h.b16 %v1177
        %v1847 = vunpack.c.l.b16 %v1178
        %v1848 = vunpack.c.h.b16 %v1178
        %v1849 = vunpack.c.l.b16 %v1179
        %v1850 = vunpack.c.h.b16 %v1179
        %v1851 = vunpack.c.l.b16 %v1180
        %v1852 = vunpack.c.h.b16 %v1180
        %v1853 = vpack.c.b16 %v1409, %v1405
        %v1854 = vpack.c.b16 %v1410, %v1406
        %v1855 = vpack.c.b16 %v1411, %v1407
        %v1856 = vpack.c.b16 %v1412, %v1408
        %v1857 = vpack.c.b16 %v1417, %v1413
        %v1858 = vpack.c.b16 %v1418, %v1414
        %v1859 = vpack.c.b16 %v1419, %v1415
        %v1860 = vpack.c.b16 %v1420, %v1416
        %v1861 = vpack.c.b16 %v1425, %v1421
        %v1862 = vpack.c.b16 %v1426, %v1422
        %v1863 = vpack.c.b16 %v1427, %v1423
        %v1864 = vpack.c.b16 %v1428, %v1424
        %v1865 = vpack.c.b16 %v1433, %v1429
        %v1866 = vpack.c.b16 %v1434, %v1430
        %v1867 = vpack.c.b16 %v1435, %v1431
        %v1868 = vpack.c.b16 %v1436, %v1432
        %v1869 = vpack.c.b16 %v1441, %v1437
        %v1870 = vpack.c.b16 %v1442, %v1438
        %v1871 = vpack.c.b16 %v1443, %v1439
        %v1872 = vpack.c.b16 %v1444, %v1440
        %v1873 = vpack.c.b16 %v1449, %v1445
        %v1874 = vpack.c.b16 %v1450, %v1446
        %v1875 = vpack.c.b16 %v1451, %v1447
        %v1876 = vpack.c.b16 %v1452, %v1448
        %v1877 = vpack.c.b16 %v1457, %v1453
        %v1878 = vpack.c.b16 %v1458, %v1454
        %v1879 = vpack.c.b16 %v1459, %v1455
        %v1880 = vpack.c.b16 %v1460, %v1456
        %v1881 = vpack.c.b16 %v1465, %v1461
        %v1882 = vpack.c.b16 %v1466, %v1462
        %v1883 = vpack.c.b16 %v1467, %v1463
        %v1884 = vpack.c.b16 %v1468, %v1464
        %v1885 = vpack.c.b16 %v1473, %v1469
        %v1886 = vpack.c.b16 %v1474, %v1470
        %v1887 = vpack.c.b16 %v1475, %v1471
        %v1888 = vpack.c.b16 %v1476, %v1472
        %v1889 = vpack.c.b16 %v1481, %v1477
        %v1890 = vpack.c.b16 %v1482, %v1478
        %v1891 = vpack.c.b16 %v1483, %v1479
        %v1892 = vpack.c.b16 %v1484, %v1480
        %v1893 = vpack.c.b16 %v1489, %v1485
        %v1894 = vpack.c.b16 %v1490, %v1486
        %v1895 = vpack.c.b16 %v1491, %v1487
        %v1896 = vpack.c.b16 %v1492, %v1488
        %v1897 = vpack.c.b16 %v1497, %v1493
        %v1898 = vpack.c.b16 %v1498, %v1494
        %v1899 = vpack.c.b16 %v1499, %v1495
        %v1900 = vpack.c.b16 %v1500, %v1496
        %v1901 = vpack.c.b16 %v1505, %v1501
        %v1902 = vpack.c.b16 %v1506, %v1502
        %v1903 = vpack.c.b16 %v1507, %v1503
        %v1904 = vpack.c.b16 %v1508, %v1504
        %v1905 = vpack.c.b16 %v1513, %v1509
        %v1906 = vpack.c.b16 %v1514, %v1510
        %v1907 = vpack.c.b16 %v1515, %v1511
        %v1908 = vpack.c.b16 %v1516, %v1512
        %v1909 = vpack.c.b16 %v1521, %v1517
        %v1910 = vpack.c.b16 %v1522, %v1518
        %v1911 = vpack.c.b16 %v1523, %v1519
        %v1912 = vpack.c.b16 %v1524, %v1520
        %v1913 = vpack.c.b16 %v1529, %v1525
        %v1914 = vpack.c.b16 %v1530, %v1526
        %v1915 = vpack.c.b16 %v1531, %v1527
        %v1916 = vpack.c.b16 %v1532, %v1528
        %v1917 = vpack.c.b16 %v1537, %v1533
        %v1918 = vpack.c.b16 %v1538, %v1534
        %v1919 = vpack.c.b16 %v1539, %v1535
        %v1920 = vpack.c.b16 %v1540, %v1536
        %v1921 = vpack.c.b16 %v1545, %v1541
        %v1922 = vpack.c.b16 %v1546, %v1542
        %v1923 = vpack.c.b16 %v1547, %v1543
        %v1924 = vpack.c.b16 %v1548, %v1544
        %v1925 = vpack.c.b16 %v1553, %v1549
        %v1926 = vpack.c.b16 %v1554, %v1550
        %v1927 = vpack.c.b16 %v1555, %v1551
        %v1928 = vpack.c.b16 %v1556, %v1552
        %v1929 = vpack.c.b16 %v1561, %v1557
        %v1930 = vpack.c.b16 %v1562, %v1558
        %v1931 = vpack.c.b16 %v1563, %v1559
        %v1932 = vpack.c.b16 %v1564, %v1560
        %v1933 = vpack.c.b16 %v1569, %v1565
        %v1934 = vpack.c.b16 %v1570, %v1566
        %v1935 = vpack.c.b16 %v1571, %v1567
        %v1936 = vpack.c.b16 %v1572, %v1568
        %v1937 = vpack.c.b16 %v1577, %v1573
        %v1938 = vpack.c.b16 %v1578, %v1574
        %v1939 = vpack.c.b16 %v1579, %v1575
        %v1940 = vpack.c.b16 %v1580, %v1576
        %v1941 = vpack.c.b16 %v1585, %v1581
        %v1942 = vpack.c.b16 %v1586, %v1582
        %v1943 = vpack.c.b16 %v1587, %v1583
        %v1944 = vpack.c.b16 %v1588, %v1584
        %v1945 = vpack.c.b16 %v1593, %v1589
        %v1946 = vpack.c.b16 %v1594, %v1590
        %v1947 = vpack.c.b16 %v1595, %v1591
        %v1948 = vpack.c.b16 %v1596, %v1592
        %v1949 = vpack.c.b16 %v1601, %v1597
        %v1950 = vpack.c.b16 %v1602, %v1598
        %v1951 = vpack.c.b16 %v1603, %v1599
        %v1952 = vpack.c.b16 %v1604, %v1600
        %v1953 = vpack.c.b16 %v1609, %v1605
        %v1954 = vpack.c.b16 %v1610, %v1606
        %v1955 = vpack.c.b16 %v1611, %v1607
        %v1956 = vpack.c.b16 %v1612, %v1608
        %v1957 = vpack.c.b16 %v1617, %v1613
        %v1958 = vpack.c.b16 %v1618, %v1614
        %v1959 = vpack.c.b16 %v1619, %v1615
        %v1960 = vpack.c.b16 %v1620, %v1616
        %v1961 = vpack.c.b16 %v1625, %v1621
        %v1962 = vpack.c.b16 %v1626, %v1622
        %v1963 = vpack.c.b16 %v1627, %v1623
        %v1964 = vpack.c.b16 %v1628, %v1624
        %v1965 = vpack.c.b16 %v1633, %v1629
        %v1966 = vpack.c.b16 %v1634, %v1630
        %v1967 = vpack.c.b16 %v1635, %v1631
        %v1968 = vpack.c.b16 %v1636, %v1632
        %v1969 = vpack.c.b16 %v1641, %v1637
        %v1970 = vpack.c.b16 %v1642, %v1638
        %v1971 = vpack.c.b16 %v1643, %v1639
        %v1972 = vpack.c.b16 %v1644, %v1640
        %v1973 = vpack.c.b16 %v1649, %v1645
        %v1974 = vpack.c.b16 %v1650, %v1646
        %v1975 = vpack.c.b16 %v1651, %v1647
        %v1976 = vpack.c.b16 %v1652, %v1648
        %v1977 = vpack.c.b16 %v1657, %v1653
        %v1978 = vpack.c.b16 %v1658, %v1654
        %v1979 = vpack.c.b16 %v1659, %v1655
        %v1980 = vpack.c.b16 %v1660, %v1656
        %v1981 = vpack.c.b16 %v1665, %v1661
        %v1982 = vpack.c.b16 %v1666, %v1662
        %v1983 = vpack.c.b16 %v1667, %v1663
        %v1984 = vpack.c.b16 %v1668, %v1664
        %v1985 = vpack.c.b16 %v1673, %v1669
        %v1986 = vpack.c.b16 %v1674, %v1670
        %v1987 = vpack.c.b16 %v1675, %v1671
        %v1988 = vpack.c.b16 %v1676, %v1672
        %v1989 = vpack.c.b16 %v1681, %v1677
        %v1990 = vpack.c.b16 %v1682, %v1678
        %v1991 = vpack.c.b16 %v1683, %v1679
        %v1992 = vpack.c.b16 %v1684, %v1680
        %v1993 = vpack.c.b16 %v1689, %v1685
        %v1994 = vpack.c.b16 %v1690, %v1686
        %v1995 = vpack.c.b16 %v1691, %v1687
        %v1996 = vpack.c.b16 %v1692, %v1688
        %v1997 = vpack.c.b16 %v1697, %v1693
        %v1998 = vpack.c.b16 %v1698, %v1694
        %v1999 = vpack.c.b16 %v1699, %v1695
        %v2000 = vpack.c.b16 %v1700, %v1696
        %v2001 = vpack.c.b16 %v1705, %v1701
        %v2002 = vpack.c.b16 %v1706, %v1702
        %v2003 = vpack.c.b16 %v1707, %v1703
        %v2004 = vpack.c.b16 %v1708, %v1704
        %v2005 = vpack.c.b16 %v1713, %v1709
        %v2006 = vpack.c.b16 %v1714, %v1710
        %v2007 = vpack.c.b16 %v1715, %v1711
        %v2008 = vpack.c.b16 %v1716, %v1712
        %v2009 = vpack.c.b16 %v1721, %v1717
        %v2010 = vpack.c.b16 %v1722, %v1718
        %v2011 = vpack.c.b16 %v1723, %v1719
        %v2012 = vpack.c.b16 %v1724, %v1720
        %v2013 = vpack.c.b16 %v1729, %v1725
        %v2014 = vpack.c.b16 %v1730, %v1726
        %v2015 = vpack.c.b16 %v1731, %v1727
        %v2016 = vpack.c.b16 %v1732, %v1728
        %v2017 = vpack.c.b16 %v1737, %v1733
        %v2018 = vpack.c.b16 %v1738, %v1734
        %v2019 = vpack.c.b16 %v1739, %v1735
        %v2020 = vpack.c.b16 %v1740, %v1736
        %v2021 = vpack.c.b16 %v1745, %v1741
        %v2022 = vpack.c.b16 %v1746, %v1742
        %v2023 = vpack.c.b16 %v1747, %v1743
        %v2024 = vpack.c.b16 %v1748, %v1744
        %v2025 = vpack.c.b16 %v1753, %v1749
        %v2026 = vpack.c.b16 %v1754, %v1750
        %v2027 = vpack.c.b16 %v1755, %v1751
        %v2028 = vpack.c.b16 %v1756, %v1752
        %v2029 = vpack.c.b16 %v1761, %v1757
        %v2030 = vpack.c.b16 %v1762, %v1758
        %v2031 = vpack.c.b16 %v1763, %v1759
        %v2032 = vpack.c.b16 %v1764, %v1760
        %v2033 = vpack.c.b16 %v1769, %v1765
        %v2034 = vpack.c.b16 %v1770, %v1766
        %v2035 = vpack.c.b16 %v1771, %v1767
        %v2036 = vpack.c.b16 %v1772, %v1768
        %v2037 = vpack.c.b16 %v1777, %v1773
        %v2038 = vpack.c.b16 %v1778, %v1774
        %v2039 = vpack.c.b16 %v1779, %v1775
        %v2040 = vpack.c.b16 %v1780, %v1776
        %v2041 = vpack.c.b16 %v1785, %v1781
        %v2042 = vpack.c.b16 %v1786, %v1782
        %v2043 = vpack.c.b16 %v1787, %v1783
        %v2044 = vpack.c.b16 %v1788, %v1784
        %v2045 = vpack.c.b16 %v1793, %v1789
        %v2046 = vpack.c.b16 %v1794, %v1790
        %v2047 = vpack.c.b16 %v1795, %v1791
        %v2048 = vpack.c.b16 %v1796, %v1792
        %v2049 = vpack.c.b16 %v1801, %v1797
        %v2050 = vpack.c.b16 %v1802, %v1798
        %v2051 = vpack.c.b16 %v1803, %v1799
        %v2052 = vpack.c.b16 %v1804, %v1800
        %v2053 = vpack.c.b16 %v1809, %v1805
        %v2054 = vpack.c.b16 %v1810, %v1806
        %v2055 = vpack.c.b16 %v1811, %v1807
        %v2056 = vpack.c.b16 %v1812, %v1808
        %v2057 = vpack.c.b16 %v1817, %v1813
        %v2058 = vpack.c.b16 %v1818, %v1814
        %v2059 = vpack.c.b16 %v1819, %v1815
        %v2060 = vpack.c.b16 %v1820, %v1816
        %v2061 = vpack.c.b16 %v1825, %v1821
        %v2062 = vpack.c.b16 %v1826, %v1822
        %v2063 = vpack.c.b16 %v1827, %v1823
        %v2064 = vpack.c.b16 %v1828, %v1824
        %v2065 = vpack.c.b16 %v1833, %v1829
        %v2066 = vpack.c.b16 %v1834, %v1830
        %v2067 = vpack.c.b16 %v1835, %v1831
        %v2068 = vpack.c.b16 %v1836, %v1832
        %v2069 = vpack.c.b16 %v1841, %v1837
        %v2070 = vpack.c.b16 %v1842, %v1838
        %v2071 = vpack.c.b16 %v1843, %v1839
        %v2072 = vpack.c.b16 %v1844, %v1840
        %v2073 = vpack.c.b16 %v1849, %v1845
        %v2074 = vpack.c.b16 %v1850, %v1846
        %v2075 = vpack.c.b16 %v1851, %v1847
        %v2076 = vpack.c.b16 %v1852, %v1848
        %2301 = vmatprep.subr.bf16.mxu0 %v1854
        %2302 = vmatpush1.bf16.msra.mxu0 %v1853
        %2303 = vmatprep.subr.bf16.mxu0 %v1858
        %2304 = vmatpush1.bf16.msra.mxu0 %v1857
        %2305 = vmatprep.subr.bf16.mxu0 %v1862
        %2306 = vmatpush1.bf16.msra.mxu0 %v1861
        %2307 = vmatprep.subr.bf16.mxu0 %v1866
        %2308 = vmatpush1.bf16.msra.mxu0 %v1865
        %2309 = vmatprep.subr.bf16.mxu0 %v1870
        %2310 = vmatpush1.bf16.msra.mxu0 %v1869
        %2311 = vmatprep.subr.bf16.mxu0 %v1874
        %2312 = vmatpush1.bf16.msra.mxu0 %v1873
        %2313 = vmatprep.subr.bf16.mxu0 %v1878
        %2314 = vmatpush1.bf16.msra.mxu0 %v1877
        %2315 = vmatprep.subr.bf16.mxu0 %v1882
        %2316 = vmatpush1.bf16.msra.mxu0 %v1881
        %2317 = vmatprep.subr.bf16.mxu0 %v1886
        %2318 = vmatpush1.bf16.msra.mxu0 %v1885
        %2319 = vmatprep.subr.bf16.mxu0 %v1890
        %2320 = vmatpush1.bf16.msra.mxu0 %v1889
        %2321 = vmatprep.subr.bf16.mxu0 %v1894
        %2322 = vmatpush1.bf16.msra.mxu0 %v1893
        %2323 = vmatprep.subr.bf16.mxu0 %v1898
        %2324 = vmatpush1.bf16.msra.mxu0 %v1897
        %2325 = vmatprep.subr.bf16.mxu0 %v1902
        %2326 = vmatpush1.bf16.msra.mxu0 %v1901
        %2327 = vmatprep.subr.bf16.mxu0 %v1906
        %2328 = vmatpush1.bf16.msra.mxu0 %v1905
        %2329 = vmatprep.subr.bf16.mxu0 %v1910
        %2330 = vmatpush1.bf16.msra.mxu0 %v1909
        %2331 = vmatprep.subr.bf16.mxu0 %v1914
        %2332 = vmatpush1.bf16.msra.mxu0 %v1913
        %2333 = vmatprep.mubr.bf16.mxu0 %v947
        %2334 = vmatmul.mubr.bf16.gmra.mrb[0].mxu0 %v946
        %v2335 = vpop.f32.mrb[0].mxu0
        %v2336 = vadd.f32 0.0, %v2335
        %v2337 = vpop.f32.mrb[0].mxu0
        %v2338 = vadd.f32 0.0, %v2337
        %v2339 = vpop.f32.mrb[0].mxu0
        %v2340 = vpop.f32.mrb[0].mxu0
        %2341 = vdwg.mxu0
        %2342 = vmatprep.subr.bf16.mxu0 %v1918
        %2343 = vmatpush1.bf16.msra.mxu0 %v1917
        %2344 = vmatprep.subr.bf16.mxu0 %v1922
        %2345 = vmatpush1.bf16.msra.mxu0 %v1921
        %2346 = vmatprep.subr.bf16.mxu0 %v1926
        %2347 = vmatpush1.bf16.msra.mxu0 %v1925
        %2348 = vmatprep.subr.bf16.mxu0 %v1930
        %2349 = vmatpush1.bf16.msra.mxu0 %v1929
        %2350 = vmatprep.subr.bf16.mxu0 %v1934
        %2351 = vmatpush1.bf16.msra.mxu0 %v1933
        %2352 = vmatprep.subr.bf16.mxu0 %v1938
        %2353 = vmatpush1.bf16.msra.mxu0 %v1937
        %2354 = vmatprep.subr.bf16.mxu0 %v1942
        %2355 = vmatpush1.bf16.msra.mxu0 %v1941
        %2356 = vmatprep.subr.bf16.mxu0 %v1946
        %2357 = vmatpush1.bf16.msra.mxu0 %v1945
        %2358 = vmatprep.subr.bf16.mxu0 %v1950
        %2359 = vmatpush1.bf16.msra.mxu0 %v1949
        %2360 = vmatprep.subr.bf16.mxu0 %v1954
        %2361 = vmatpush1.bf16.msra.mxu0 %v1953
        %2362 = vmatprep.subr.bf16.mxu0 %v1958
        %2363 = vmatpush1.bf16.msra.mxu0 %v1957
        %2364 = vmatprep.subr.bf16.mxu0 %v1962
        %2365 = vmatpush1.bf16.msra.mxu0 %v1961
        %2366 = vmatprep.subr.bf16.mxu0 %v1966
        %2367 = vmatpush1.bf16.msra.mxu0 %v1965
        %2368 = vmatprep.subr.bf16.mxu0 %v1970
        %2369 = vmatpush1.bf16.msra.mxu0 %v1969
        %2370 = vmatprep.subr.bf16.mxu0 %v1974
        %2371 = vmatpush1.bf16.msra.mxu0 %v1973
        %2372 = vmatprep.subr.bf16.mxu0 %v1978
        %2373 = vmatpush1.bf16.msra.mxu0 %v1977
        %2374 = vmatprep.mubr.bf16.mxu0 %v949
        %2375 = vmatmul.mubr.bf16.gmra.mrb[0].mxu0 %v948
        %v2376 = vpop.f32.mrb[0].mxu0
        %v2377 = vadd.f32 %v2336, %v2376
        %v2378 = vpop.f32.mrb[0].mxu0
        %v2379 = vadd.f32 %v2338, %v2378
        %v2380 = vpop.f32.mrb[0].mxu0
        %v2381 = vpop.f32.mrb[0].mxu0
        %2382 = vdwg.mxu0
        %2383 = vmatprep.subr.bf16.mxu0 %v1982
        %2384 = vmatpush1.bf16.msra.mxu0 %v1981
        %2385 = vmatprep.subr.bf16.mxu0 %v1986
        %2386 = vmatpush1.bf16.msra.mxu0 %v1985
        %2387 = vmatprep.subr.bf16.mxu0 %v1990
        %2388 = vmatpush1.bf16.msra.mxu0 %v1989
        %2389 = vmatprep.subr.bf16.mxu0 %v1994
        %2390 = vmatpush1.bf16.msra.mxu0 %v1993
        %2391 = vmatprep.subr.bf16.mxu0 %v1998
        %2392 = vmatpush1.bf16.msra.mxu0 %v1997
        %2393 = vmatprep.subr.bf16.mxu0 %v2002
        %2394 = vmatpush1.bf16.msra.mxu0 %v2001
        %2395 = vmatprep.subr.bf16.mxu0 %v2006
        %2396 = vmatpush1.bf16.msra.mxu0 %v2005
        %2397 = vmatprep.subr.bf16.mxu0 %v2010
        %2398 = vmatpush1.bf16.msra.mxu0 %v2009
        %2399 = vmatprep.subr.bf16.mxu0 %v2014
        %2400 = vmatpush1.bf16.msra.mxu0 %v2013
        %2401 = vmatprep.subr.bf16.mxu0 %v2018
        %2402 = vmatpush1.bf16.msra.mxu0 %v2017
        %2403 = vmatprep.subr.bf16.mxu0 %v2022
        %2404 = vmatpush1.bf16.msra.mxu0 %v2021
        %2405 = vmatprep.subr.bf16.mxu0 %v2026
        %2406 = vmatpush1.bf16.msra.mxu0 %v2025
        %2407 = vmatprep.subr.bf16.mxu0 %v2030
        %2408 = vmatpush1.bf16.msra.mxu0 %v2029
        %2409 = vmatprep.subr.bf16.mxu0 %v2034
        %2410 = vmatpush1.bf16.msra.mxu0 %v2033
        %2411 = vmatprep.subr.bf16.mxu0 %v2038
        %2412 = vmatpush1.bf16.msra.mxu0 %v2037
        %2413 = vmatprep.subr.bf16.mxu0 %v2042
        %2414 = vmatpush1.bf16.msra.mxu0 %v2041
        %2415 = vmatprep.mubr.bf16.mxu0 %v951
        %2416 = vmatmul.mubr.bf16.gmra.mrb[0].mxu0 %v950
        %v2417 = vpop.f32.mrb[0].mxu0
        %v2418 = vadd.f32 %v2377, %v2417
        %v2419 = vpop.f32.mrb[0].mxu0
        %v2420 = vadd.f32 %v2379, %v2419
        %v2421 = vpop.f32.mrb[0].mxu0
        %v2422 = vpop.f32.mrb[0].mxu0
        %2423 = vdwg.mxu0
        %2424 = vmatprep.subr.bf16.mxu0 %v2046
        %2425 = vmatpush1.bf16.msra.mxu0 %v2045
        %2426 = vmatprep.subr.bf16.mxu0 %v2050
        %2427 = vmatpush1.bf16.msra.mxu0 %v2049
        %2428 = vmatprep.subr.bf16.mxu0 %v2054
        %2429 = vmatpush1.bf16.msra.mxu0 %v2053
        %2430 = vmatprep.subr.bf16.mxu0 %v2058
        %2431 = vmatpush1.bf16.msra.mxu0 %v2057
        %2432 = vmatprep.subr.bf16.mxu0 %v2062
        %2433 = vmatpush1.bf16.msra.mxu0 %v2061
        %2434 = vmatprep.subr.bf16.mxu0 %v2066
        %2435 = vmatpush1.bf16.msra.mxu0 %v2065
        %2436 = vmatprep.subr.bf16.mxu0 %v2070
        %2437 = vmatpush1.bf16.msra.mxu0 %v2069
        %2438 = vmatprep.subr.bf16.mxu0 %v2074
        %2439 = vmatpush1.bf16.msra.mxu0 %v2073
        %2440 = vmatprep.subr.bf16.mxu0 0
        %2441 = vmatpush1.bf16.msra.mxu0 0
        %2442 = vmatprep.subr.bf16.mxu0 0
        %2443 = vmatpush1.bf16.msra.mxu0 0
        %2444 = vmatprep.subr.bf16.mxu0 0
        %2445 = vmatpush1.bf16.msra.mxu0 0
        %2446 = vmatprep.subr.bf16.mxu0 0
        %2447 = vmatpush1.bf16.msra.mxu0 0
        %2448 = vmatprep.subr.bf16.mxu0 0
        %2449 = vmatpush1.bf16.msra.mxu0 0
        %2450 = vmatprep.subr.bf16.mxu0 0
        %2451 = vmatpush1.bf16.msra.mxu0 0
        %2452 = vmatprep.subr.bf16.mxu0 0
        %2453 = vmatpush1.bf16.msra.mxu0 0
        %2454 = vmatprep.subr.bf16.mxu0 0
        %2455 = vmatpush1.bf16.msra.mxu0 0
        %2456 = vmatprep.mubr.bf16.mxu0 0
        %2457 = vmatmul.mubr.bf16.gmra.mrb[0].mxu0 %v952
        %v2458 = vpop.f32.mrb[0].mxu0
        %v2459 = vadd.f32 %v2418, %v2458
        %v2460 = vpop.f32.mrb[0].mxu0
        %v2461 = vadd.f32 %v2420, %v2460
        %v2462 = vpop.f32.mrb[0].mxu0
        %v2463 = vpop.f32.mrb[0].mxu0
        %2464 = vdwg.mxu0
        %2465 = vmatprep.subr.bf16.mxu0 %v1856
        %2466 = vmatpush1.bf16.msra.mxu0 %v1855
        %2467 = vmatprep.subr.bf16.mxu0 %v1860
        %2468 = vmatpush1.bf16.msra.mxu0 %v1859
        %2469 = vmatprep.subr.bf16.mxu0 %v1864
        %2470 = vmatpush1.bf16.msra.mxu0 %v1863
        %2471 = vmatprep.subr.bf16.mxu0 %v1868
        %2472 = vmatpush1.bf16.msra.mxu0 %v1867
        %2473 = vmatprep.subr.bf16.mxu0 %v1872
        %2474 = vmatpush1.bf16.msra.mxu0 %v1871
        %2475 = vmatprep.subr.bf16.mxu0 %v1876
        %2476 = vmatpush1.bf16.msra.mxu0 %v1875
        %2477 = vmatprep.subr.bf16.mxu0 %v1880
        %2478 = vmatpush1.bf16.msra.mxu0 %v1879
        %2479 = vmatprep.subr.bf16.mxu0 %v1884
        %2480 = vmatpush1.bf16.msra.mxu0 %v1883
        %2481 = vmatprep.subr.bf16.mxu0 %v1888
        %2482 = vmatpush1.bf16.msra.mxu0 %v1887
        %2483 = vmatprep.subr.bf16.mxu0 %v1892
        %2484 = vmatpush1.bf16.msra.mxu0 %v1891
        %2485 = vmatprep.subr.bf16.mxu0 %v1896
        %2486 = vmatpush1.bf16.msra.mxu0 %v1895
        %2487 = vmatprep.subr.bf16.mxu0 %v1900
        %2488 = vmatpush1.bf16.msra.mxu0 %v1899
        %2489 = vmatprep.subr.bf16.mxu0 %v1904
        %2490 = vmatpush1.bf16.msra.mxu0 %v1903
        %2491 = vmatprep.subr.bf16.mxu0 %v1908
        %2492 = vmatpush1.bf16.msra.mxu0 %v1907
        %2493 = vmatprep.subr.bf16.mxu0 %v1912
        %2494 = vmatpush1.bf16.msra.mxu0 %v1911
        %2495 = vmatprep.subr.bf16.mxu0 %v1916
        %2496 = vmatpush1.bf16.msra.mxu0 %v1915
        %2497 = vmatprep.mubr.bf16.mxu0 %v947
        %2498 = vmatmul.mubr.bf16.gmra.mrb[0].mxu0 %v946
        %v2499 = vpop.f32.mrb[0].mxu0
        %v2500 = vadd.f32 0.0, %v2499
        %v2501 = vpop.f32.mrb[0].mxu0
        %v2502 = vadd.f32 0.0, %v2501
        %v2503 = vpop.f32.mrb[0].mxu0
        %v2504 = vpop.f32.mrb[0].mxu0
        %2505 = vdwg.mxu0
        %2506 = vmatprep.subr.bf16.mxu0 %v1920
        %2507 = vmatpush1.bf16.msra.mxu0 %v1919
        %2508 = vmatprep.subr.bf16.mxu0 %v1924
        %2509 = vmatpush1.bf16.msra.mxu0 %v1923
        %2510 = vmatprep.subr.bf16.mxu0 %v1928
        %2511 = vmatpush1.bf16.msra.mxu0 %v1927
        %2512 = vmatprep.subr.bf16.mxu0 %v1932
        %2513 = vmatpush1.bf16.msra.mxu0 %v1931
        %2514 = vmatprep.subr.bf16.mxu0 %v1936
        %2515 = vmatpush1.bf16.msra.mxu0 %v1935
        %2516 = vmatprep.subr.bf16.mxu0 %v1940
        %2517 = vmatpush1.bf16.msra.mxu0 %v1939
        %2518 = vmatprep.subr.bf16.mxu0 %v1944
        %2519 = vmatpush1.bf16.msra.mxu0 %v1943
        %2520 = vmatprep.subr.bf16.mxu0 %v1948
        %2521 = vmatpush1.bf16.msra.mxu0 %v1947
        %2522 = vmatprep.subr.bf16.mxu0 %v1952
        %2523 = vmatpush1.bf16.msra.mxu0 %v1951
        %2524 = vmatprep.subr.bf16.mxu0 %v1956
        %2525 = vmatpush1.bf16.msra.mxu0 %v1955
        %2526 = vmatprep.subr.bf16.mxu0 %v1960
        %2527 = vmatpush1.bf16.msra.mxu0 %v1959
        %2528 = vmatprep.subr.bf16.mxu0 %v1964
        %2529 = vmatpush1.bf16.msra.mxu0 %v1963
        %2530 = vmatprep.subr.bf16.mxu0 %v1968
        %2531 = vmatpush1.bf16.msra.mxu0 %v1967
        %2532 = vmatprep.subr.bf16.mxu0 %v1972
        %2533 = vmatpush1.bf16.msra.mxu0 %v1971
        %2534 = vmatprep.subr.bf16.mxu0 %v1976
        %2535 = vmatpush1.bf16.msra.mxu0 %v1975
        %2536 = vmatprep.subr.bf16.mxu0 %v1980
        %2537 = vmatpush1.bf16.msra.mxu0 %v1979
        %2538 = vmatprep.mubr.bf16.mxu0 %v949
        %2539 = vmatmul.mubr.bf16.gmra.mrb[0].mxu0 %v948
        %v2540 = vpop.f32.mrb[0].mxu0
        %v2541 = vadd.f32 %v2500, %v2540
        %v2542 = vpop.f32.mrb[0].mxu0
        %v2543 = vadd.f32 %v2502, %v2542
        %v2544 = vpop.f32.mrb[0].mxu0
        %v2545 = vpop.f32.mrb[0].mxu0
        %2546 = vdwg.mxu0
        %2547 = vmatprep.subr.bf16.mxu0 %v1984
        %2548 = vmatpush1.bf16.msra.mxu0 %v1983
        %2549 = vmatprep.subr.bf16.mxu0 %v1988
        %2550 = vmatpush1.bf16.msra.mxu0 %v1987
        %2551 = vmatprep.subr.bf16.mxu0 %v1992
        %2552 = vmatpush1.bf16.msra.mxu0 %v1991
        %2553 = vmatprep.subr.bf16.mxu0 %v1996
        %2554 = vmatpush1.bf16.msra.mxu0 %v1995
        %2555 = vmatprep.subr.bf16.mxu0 %v2000
        %2556 = vmatpush1.bf16.msra.mxu0 %v1999
        %2557 = vmatprep.subr.bf16.mxu0 %v2004
        %2558 = vmatpush1.bf16.msra.mxu0 %v2003
        %2559 = vmatprep.subr.bf16.mxu0 %v2008
        %2560 = vmatpush1.bf16.msra.mxu0 %v2007
        %2561 = vmatprep.subr.bf16.mxu0 %v2012
        %2562 = vmatpush1.bf16.msra.mxu0 %v2011
        %2563 = vmatprep.subr.bf16.mxu0 %v2016
        %2564 = vmatpush1.bf16.msra.mxu0 %v2015
        %2565 = vmatprep.subr.bf16.mxu0 %v2020
        %2566 = vmatpush1.bf16.msra.mxu0 %v2019
        %2567 = vmatprep.subr.bf16.mxu0 %v2024
        %2568 = vmatpush1.bf16.msra.mxu0 %v2023
        %2569 = vmatprep.subr.bf16.mxu0 %v2028
        %2570 = vmatpush1.bf16.msra.mxu0 %v2027
        %2571 = vmatprep.subr.bf16.mxu0 %v2032
        %2572 = vmatpush1.bf16.msra.mxu0 %v2031
        %2573 = vmatprep.subr.bf16.mxu0 %v2036
        %2574 = vmatpush1.bf16.msra.mxu0 %v2035
        %2575 = vmatprep.subr.bf16.mxu0 %v2040
        %2576 = vmatpush1.bf16.msra.mxu0 %v2039
        %2577 = vmatprep.subr.bf16.mxu0 %v2044
        %2578 = vmatpush1.bf16.msra.mxu0 %v2043
        %2579 = vmatprep.mubr.bf16.mxu0 %v951
        %2580 = vmatmul.mubr.bf16.gmra.mrb[0].mxu0 %v950
        %v2581 = vpop.f32.mrb[0].mxu0
        %v2582 = vadd.f32 %v2541, %v2581
        %v2583 = vpop.f32.mrb[0].mxu0
        %v2584 = vadd.f32 %v2543, %v2583
        %v2585 = vpop.f32.mrb[0].mxu0
        %v2586 = vpop.f32.mrb[0].mxu0
        %2587 = vdwg.mxu0
        %2588 = vmatprep.subr.bf16.mxu0 %v2048
        %2589 = vmatpush1.bf16.msra.mxu0 %v2047
        %2590 = vmatprep.subr.bf16.mxu0 %v2052
        %2591 = vmatpush1.bf16.msra.mxu0 %v2051
        %2592 = vmatprep.subr.bf16.mxu0 %v2056
        %2593 = vmatpush1.bf16.msra.mxu0 %v2055
        %2594 = vmatprep.subr.bf16.mxu0 %v2060
        %2595 = vmatpush1.bf16.msra.mxu0 %v2059
        %2596 = vmatprep.subr.bf16.mxu0 %v2064
        %2597 = vmatpush1.bf16.msra.mxu0 %v2063
        %2598 = vmatprep.subr.bf16.mxu0 %v2068
        %2599 = vmatpush1.bf16.msra.mxu0 %v2067
        %2600 = vmatprep.subr.bf16.mxu0 %v2072
        %2601 = vmatpush1.bf16.msra.mxu0 %v2071
        %2602 = vmatprep.subr.bf16.mxu0 %v2076
        %2603 = vmatpush1.bf16.msra.mxu0 %v2075
        %2604 = vmatprep.subr.bf16.mxu0 0
        %2605 = vmatpush1.bf16.msra.mxu0 0
        %2606 = vmatprep.subr.bf16.mxu0 0
        %2607 = vmatpush1.bf16.msra.mxu0 0
        %2608 = vmatprep.subr.bf16.mxu0 0
        %2609 = vmatpush1.bf16.msra.mxu0 0
        %2610 = vmatprep.subr.bf16.mxu0 0
        %2611 = vmatpush1.bf16.msra.mxu0 0
        %2612 = vmatprep.subr.bf16.mxu0 0
        %2613 = vmatpush1.bf16.msra.mxu0 0
        %2614 = vmatprep.subr.bf16.mxu0 0
        %2615 = vmatpush1.bf16.msra.mxu0 0
        %2616 = vmatprep.subr.bf16.mxu0 0
        %2617 = vmatpush1.bf16.msra.mxu0 0
        %2618 = vmatprep.subr.bf16.mxu0 0
        %2619 = vmatpush1.bf16.msra.mxu0 0
        %2620 = vmatprep.mubr.bf16.mxu0 0
        %2621 = vmatmul.mubr.bf16.gmra.mrb[0].mxu0 %v952
        %v2622 = vpop.f32.mrb[0].mxu0
        %v2623 = vadd.f32 %v2582, %v2622
        %v2624 = vpop.f32.mrb[0].mxu0
        %v2625 = vadd.f32 %v2584, %v2624
        %v2626 = vpop.f32.mrb[0].mxu0
        %v2627 = vpop.f32.mrb[0].mxu0
        %2628 = vdwg.mxu0
        %v2629 = vadd.f32 %v953, %v2459
        %v2630 = vadd.f32 %v954, %v2461
        %v2631 = vadd.f32 %v955, %v2623
        %v2632 = vadd.f32 %v956, %v2625
        %2633 = vst [vmem:[#allocation2] sm:$0xff] %v2629
        %2634 = vst [vmem:[#allocation2 + $0x8] sm:$0xff] %v2630
        %2635 = vst [vmem:[#allocation2 + $0x10] sm:$0xff] %v2631
        %2636 = vst [vmem:[#allocation2 + $0x18] sm:$0xff] %v2632
        %p2637 = scmp.eq.s32.totalorder %s23, 6
        // Predicated region
        $region68: #{discriminator_forward.6} parent=58 // pred_check
          %p2638 = pneg %p2637
        $region69: #{discriminator_forward.6} parent=58 // pred_check_branch
          %2640 = sbr.rel (%p2638) target = $region71
        $region70: #{discriminator_forward.6} parent=58 // pred_region
          %v2641 = vld [vmem:[#allocation2] sm:$0xff]
          %v2642 = vld [vmem:[#allocation2 + $0x8] sm:$0xff]
          %v2643 = vld [vmem:[#allocation2 + $0x10] sm:$0xff]
          %v2644 = vld [vmem:[#allocation2 + $0x18] sm:$0xff]
          %v2645 = vld [vmem:[%s809] sm:$0xf]
          %v2647 = vlaneseq
          %v2648 = vshrl.u32 %v2647, 7
          %v2649 = vsub.s32 0, %v2648
          %v2650 = vrot.slane %v2645, %v2649
          %v2651 = vlaneseq
          %v2652 = vshrl.u32 %v2651, 7
          %v2653 = vsub.s32 1, %v2652
          %v2654 = vrot.slane %v2645, %v2653
          %v2655 = vlaneseq
          %v2656 = vshrl.u32 %v2655, 7
          %v2657 = vsub.s32 2, %v2656
          %v2658 = vrot.slane %v2645, %v2657
          %v2659 = vlaneseq
          %v2660 = vshrl.u32 %v2659, 7
          %v2661 = vsub.s32 3, %v2660
          %v2662 = vrot.slane %v2645, %v2661
          %v2667 = vadd.f32 %v2641, %v2650
          %v2668 = vadd.f32 %v2642, %v2654
          %v2669 = vadd.f32 %v2643, %v2658
          %v2670 = vadd.f32 %v2644, %v2662
          %2671 = vst [vmem:[%s819] sm:$0xff] %v2667
          %2672 = vst [vmem:[%s819 + $0x8] sm:$0xff] %v2668
          %2673 = vst [vmem:[%s819 + $0x10] sm:$0xff] %v2669
          %2674 = vst [vmem:[%s819 + $0x18] sm:$0xff] %v2670
        $region71: #{discriminator_forward.6} parent=58 // pred_fallthru
          _
        %s2675 = smul.u32 4, %s22
        %p2676 = scmp.lt.s32.totalorder %s21, 0
        %s2677 = scalar_select %p2676, %s21, 0
        %p2678 = scmp.lt.s32.totalorder %s2675, 7
        %s2679 = scalar_select %p2678, %s2675, 7
        %s2680 = smul.addr %s2677, 8
        %s2681 = sadd.s32 %s2679, %s2680
        %s2682 = smul.addr %s2681, 8
        %s2683 = scalar_lea.vmem %s5, %s2682
        // Predicated region
        $region72: #{discriminator_forward.6} parent=58 // pred_check
          %p2684 = pneg %p189
        $region73: #{discriminator_forward.6} parent=58 // pred_check_branch
          %2686 = sbr.rel (%p2684) target = $region75
        $region74: #{discriminator_forward.6} parent=58 // pred_region
          %s2687 = smul.u32 4, %s22
        $region75: #{discriminator_forward.6} parent=58 // pred_fallthru
          _
      $region59: #{discriminator_forward.6} parent=5 // pred_fallthru
        _
      %p2688 = scmp.le.s32.totalorder 2, %s11
      // Predicated region
      $region76: #{discriminator_forward.6} parent=5 // pred_check
        %p2689 = pneg %p2688
      $region77: #{discriminator_forward.6} parent=5 // pred_check_branch
        %2691 = sbr.rel (%p2689) target = $region79
      $region78: #{discriminator_forward.6} parent=5 // pred_region
        %s2692 = ssub.s32 %s11, 2
        // Predicated region
        $region80: #{discriminator_forward.6} parent=78 // pred_check
          %p2693 = pneg %p195
        $region81: #{discriminator_forward.6} parent=78 // pred_check_branch
          %2695 = sbr.rel (%p2693) target = $region83
        $region82: #{discriminator_forward.6} parent=78 // pred_region
          %s2696 = smul.u32 4, %s25
          %p2697 = scmp.lt.s32.totalorder %s24, 0
          %s2698 = scalar_select %p2697, %s24, 0
          %p2699 = scmp.lt.s32.totalorder %s2696, 7
          %s2700 = scalar_select %p2699, %s2696, 7
          %s2701 = smul.addr %s2698, 8
          %s2702 = sadd.s32 %s2700, %s2701
          %s2703 = smul.addr %s2702, 8
          %s2704 = scalar_lea.vmem %s5, %s2703
        $region83: #{discriminator_forward.6} parent=78 // pred_fallthru
          _
      $region79: #{discriminator_forward.6} parent=5 // pred_fallthru
        _
    $region6: #{discriminator_forward.6} parent=1 // loop_footer
      %s15 = sadd.s32 1, %s11
    $region7: #{discriminator_forward.6} parent=1 // loop_footer_branch
      %10 = sbr.rel target = $region3
    $region8: #{discriminator_forward.6} parent=1 // loop_exit
      _

</llo_original>
